<compile_context>
chip_gen: v7x
topology: tpu7x:2x2x1
jax: 0.10.0
libtpu: 0.0.40
codegen_flags: <defaults>
</compile_context>

<pallas_src>
import numpy as np
import jax
import jax.numpy as jnp
from jax import lax
from jax.experimental import pallas as pl
from jax.experimental.pallas import tpu as pltpu

DIM = 2
DEGREE = 2
KERNEL_SIZE = (6, 6)
K_TOTAL = KERNEL_SIZE[0] * KERNEL_SIZE[1]      # 36 spline kernels
S_BASIS = (DEGREE + 1) ** DIM                  # 9 non-zero basis taps per edge
COUT_PAD = 128                                 # output-channel rows (node lanes dense)
CIN_ALIGN = 16                                 # bf16 sublane tile (packed row pairs)


def _round_up(a, b):
    return ((a + b - 1) // b) * b


# ----------------------------------------------------------------------------
# Glue: torch_spline_conv open-spline basis (degree=2, dim=2, kernel=[6,6])
# ----------------------------------------------------------------------------
def _bspline2(frac, k_mod):
    if k_mod == 0:
        return 0.5 * frac * frac - frac + 0.5
    elif k_mod == 1:
        return -frac * frac + frac + 0.5
    else:
        return 0.5 * frac * frac


def spline_basis_dense(pseudo):
    """Dense open-spline basis matrix (E, 36), built with a 9-tap scatter."""
    fracs, floors = [], []
    for d in range(DIM):
        span = KERNEL_SIZE[d] - DEGREE
        v = pseudo[:, d] * span
        # Open spline: clamp so pseudo == 1.0 never wraps to kernel index 0
        # (documented divergence from torch_spline_conv exactly at pseudo==1).
        v = jnp.clip(v, 0.0, span - 1e-6)
        fl = jnp.floor(v)
        fracs.append(v - fl)
        floors.append(fl.astype(jnp.int32))
    basis_cols, wi_cols = [], []
    for s in range(S_BASIS):
        b = jnp.ones_like(fracs[0])
        wi = jnp.zeros_like(floors[0])
        wi_offset = 1
        for d in range(DIM):
            k_mod = (s // ((DEGREE + 1) ** d)) % (DEGREE + 1)
            b = b * _bspline2(fracs[d], k_mod)
            wi = wi + (floors[d] + k_mod) * wi_offset
            wi_offset *= KERNEL_SIZE[d]
        basis_cols.append(b)
        wi_cols.append(wi)
    basis = jnp.stack(basis_cols, axis=1)                       # (E, 9)
    wi = jnp.stack(wi_cols, axis=1)                             # (E, 9)
    E = pseudo.shape[0]
    out = jnp.zeros((E, K_TOTAL), jnp.float32)
    return out.at[jnp.arange(E)[:, None], wi].add(basis)        # (E, 36)


# ----------------------------------------------------------------------------
# Host-side (numpy) CSR preprocessing, shared by all three conv calls.
# Each node tile's CSR edge range is padded to a multiple of te so every edge
# block belongs to exactly one tile (no boundary straddling / double streaming).
# ----------------------------------------------------------------------------
def build_graph_meta(edges, n_nodes, tn=128, te_cap=2048):
    edges = np.asarray(edges)
    src = edges[0].astype(np.int64)
    dst = edges[1].astype(np.int64)
    E = int(src.shape[0])

    order = np.argsort(dst, kind="stable")        # sort edges by destination
    src_s, dst_s = src[order], dst[order]
    counts = (np.bincount(dst_s, minlength=n_nodes) if E
              else np.zeros((n_nodes,), np.int64))
    row_ptr = np.concatenate([[0], np.cumsum(counts)]).astype(np.int64)

    # >= 2 node tiles so the "parallel" axis shards across v7x's 2 TensorCores.
    n_pad = _round_up(max(n_nodes, 2 * tn), tn)
    num_nt = n_pad // tn

    # Edge block size: aim for ~1 block per node tile, 128-lane aligned, capped.
    te = int(np.clip(_round_up(max(1, -(-E // num_nt)), 128), 128, te_cap))

    eb_start = np.zeros((num_nt,), np.int32)
    neb = np.zeros((num_nt,), np.int32)
    sel_chunks = []
    blocks = 0
    for t in range(num_nt):
        lo = int(row_ptr[min(t * tn, n_nodes)])
        hi = int(row_ptr[min((t + 1) * tn, n_nodes)])
        cnt = hi - lo
        nblk = -(-cnt // te) if cnt > 0 else 0
        eb_start[t] = blocks
        neb[t] = nblk
        if nblk:
            idx = np.full((nblk * te,), -1, np.int64)
            idx[:cnt] = np.arange(lo, hi)
            sel_chunks.append(idx)
        blocks += nblk
    if blocks == 0:
        sel_chunks.append(np.full((te,), -1, np.int64))
        blocks = 1
    edge_sel = np.concatenate(sel_chunks)
    num_eb = blocks
    E_pad = num_eb * te
    eb_start = np.minimum(eb_start, num_eb - 1)   # clamped indices stay valid
    max_neb = max(1, int(neb.max()))

    if E:
        valid = edge_sel >= 0
        safe = np.where(valid, edge_sel, 0)
        src_pad = np.where(valid, src_s[safe], 0).astype(np.int32)
        dst_pad = np.where(valid, dst_s[safe], -1).astype(np.int32)
        pseudo_gather = np.where(valid, order[safe], 0).astype(np.int32)
    else:
        src_pad = np.zeros((E_pad,), np.int32)
        dst_pad = np.full((E_pad,), -1, np.int32)
        pseudo_gather = np.zeros((E_pad,), np.int32)

    invdeg = np.zeros((1, n_pad), np.float32)
    invdeg[0, :n_nodes] = 1.0 / np.maximum(counts.astype(np.float32), 1.0)

    return dict(E=E, E_pad=E_pad, N=n_nodes, N_pad=n_pad, num_eb=num_eb,
                num_nt=num_nt, max_neb=max_neb, tn=tn, te=te,
                src_pad=src_pad, dst_pad=dst_pad, pseudo_gather=pseudo_gather,
                eb_start=eb_start, neb=neb, invdeg=invdeg)


# ----------------------------------------------------------------------------
# Pallas kernel: fused SplineConv (mean aggr, root weight, bias) + ReLU
# ----------------------------------------------------------------------------
def _spline_conv_relu_kernel(ebs_ref, neb_ref,                  # scalar prefetch (SMEM)
                             dst_ref, xsrc_ref, basis_ref,      # per-edge-block inputs
                             x_ref, invdeg_ref,                 # per-node-tile inputs
                             w_ref, root_ref, bias_ref,         # resident weights
                             out_ref,                           # (COUT_PAD, tn) bf16
                             acc_ref, tmat_ref):                # VMEM scratch
    t = pl.program_id(0)                 # node tile ("parallel")
    e = pl.program_id(1)                 # edge block within this tile's CSR range
    tn = out_ref.shape[1]
    cin_pad = xsrc_ref.shape[0]
    n_k = basis_ref.shape[0]
    te = basis_ref.shape[1]

    @pl.when(e == 0)
    def _init():
        acc_ref[...] = jnp.zeros_like(acc_ref)

    @pl.when(e < neb_ref[t])
    def _accumulate():
        # Spline-weighted feature expansion, entirely off the MXU:
        # tmat[k*cin_pad + c, :] = basis[k, :] * x_src[c, :].  36 sublane-tile
        # aligned, full-lane-width VPU stores into VMEM scratch (cin_pad is a
        # multiple of 16 so every bf16 store is whole packed tiles).
        xsrc = xsrc_ref[...]                                     # (cin_pad, te) bf16
        for k in range(n_k):                                     # static unroll
            tmat_ref[k * cin_pad:(k + 1) * cin_pad, :] = (
                basis_ref[k:k + 1, :] * xsrc).astype(jnp.bfloat16)
        # Message matmul (MXU, bf16 operands / f32 accumulate).
        msg = jnp.dot(w_ref[...], tmat_ref[...],
                      preferred_element_type=jnp.float32)        # (COUT_PAD, te)
        # CSR segment-sum: one-hot(dst in this node tile) on the MXU.
        # dst == -1 on padded edges never matches, so padding contributes 0.
        node_ids = t * tn + lax.broadcasted_iota(jnp.int32, (te, tn), 1)
        sel = (dst_ref[...] == node_ids).astype(jnp.bfloat16)    # (te, tn)
        # Error budget: basis-product and msg each see one bf16 rounding before
        # the f32 accumulate -- well inside the 5e-2 test tolerance.
        acc_ref[...] += jnp.dot(msg.astype(jnp.bfloat16), sel,
                                preferred_element_type=jnp.float32)

    @pl.when(e == pl.num_programs(1) - 1)
    def _finalize():
        agg = acc_ref[...] * invdeg_ref[...]                     # scatter-mean
        rootp = jnp.dot(root_ref[...], x_ref[...],
                        preferred_element_type=jnp.float32)      # (COUT_PAD, tn)
        out_ref[...] = jnp.maximum(agg + rootp + bias_ref[...],
                                   0.0).astype(out_ref.dtype)


def spline_conv_relu(xT, meta, basisT, weight, root, bias):
    """One SplineConv (aggr='mean', root_weight, bias) followed by ReLU.

    xT      : (cin_pad, N_pad) bf16  node features, channels on sublanes.
    basisT  : (36, E_pad)      f32   open-spline basis, padded block-edge order.
    returns : (COUT_PAD, N_pad) bf16 (rows >= Cout are exact zeros).
    """
    cin, cout = int(weight.shape[1]), int(weight.shape[2])
    cin_pad = int(xT.shape[0])
    assert cin_pad == _round_up(cin, CIN_ALIGN)
    kc = K_TOTAL * cin_pad
    tn, te = int(meta["tn"]), int(meta["te"])
    N_pad, E_pad = int(meta["N_pad"]), int(meta["E_pad"])
    num_nt, max_neb, num_eb = int(meta["num_nt"]), int(meta["max_neb"]), int(meta["num_eb"])

    # Per-edge source features: gathered and materialized in bf16 only.
    # TODO(synk): pull this row gather into the kernel with a manual DMA from
    # xT kept in HBM (memory_space=pl.ANY) driven by src indices in SMEM.
    x_srcT = jnp.take(xT, jnp.asarray(meta["src_pad"]), axis=1)   # (cin_pad, E_pad)
    dstT = jnp.asarray(meta["dst_pad"]).reshape(E_pad, 1)
    invdeg = jnp.asarray(meta["invdeg"])                          # (1, N_pad) f32

    # Weights in the transposed layout: wT[o, k*cin_pad + c] = weight[k, c, o].
    # Zero padding on both channel axes keeps padded lanes/rows exact zeros.
    w_pad = jnp.zeros((K_TOTAL, cin_pad, COUT_PAD), jnp.float32)
    w_pad = w_pad.at[:, :cin, :cout].set(weight)
    wT = w_pad.reshape(kc, COUT_PAD).T.astype(jnp.bfloat16)       # (COUT_PAD, kc)
    rootT = jnp.zeros((COUT_PAD, cin_pad), jnp.float32)
    rootT = rootT.at[:cout, :cin].set(root.T).astype(jnp.bfloat16)
    biasT = jnp.zeros((COUT_PAD, 1), jnp.float32).at[:cout, 0].set(bias)

    eb_start = jnp.asarray(meta["eb_start"], jnp.int32)
    neb = jnp.asarray(meta["neb"], jnp.int32)

    def eblk(t, e, ebs, nb):
        # Clamp to this tile's last real block: skipped steps (e >= neb[t])
        # keep the same block index so Pallas elides the redundant DMA.
        return ebs[t] + jnp.minimum(e, jnp.maximum(nb[t] - 1, 0))

    in_specs = [
        pl.BlockSpec((te, 1), lambda t, e, ebs, nb: (eblk(t, e, ebs, nb), 0)),        # dst
        pl.BlockSpec((cin_pad, te), lambda t, e, ebs, nb: (0, eblk(t, e, ebs, nb))),  # x_src
        pl.BlockSpec((K_TOTAL, te), lambda t, e, ebs, nb: (0, eblk(t, e, ebs, nb))),  # basis
        pl.BlockSpec((cin_pad, tn), lambda t, e, ebs, nb: (0, t)),                    # x (root)
        pl.BlockSpec((1, tn), lambda t, e, ebs, nb: (0, t)),                          # 1/deg
        pl.BlockSpec((COUT_PAD, kc), lambda t, e, ebs, nb: (0, 0)),                   # W_flat^T
        pl.BlockSpec((COUT_PAD, cin_pad), lambda t, e, ebs, nb: (0, 0)),              # root^T
        pl.BlockSpec((COUT_PAD, 1), lambda t, e, ebs, nb: (0, 0)),                    # bias
    ]
    out_spec = pl.BlockSpec((COUT_PAD, tn), lambda t, e, ebs, nb: (0, t))

    # Explicit VMEM budget: double-buffered blocks + residents + scratch +
    # headroom for in-kernel temporaries; stays well under v7x's 64 MiB.
    block_bytes = 2 * (te * 4 + cin_pad * te * 2 + K_TOTAL * te * 4
                       + cin_pad * tn * 2 + tn * 4
                       + COUT_PAD * (kc + cin_pad) * 2 + COUT_PAD * 4
                       + COUT_PAD * tn * 2)
    scratch_bytes = COUT_PAD * tn * 4 + kc * te * 2
    temp_bytes = COUT_PAD * te * 4 + te * tn * 4
    vmem_limit = int(min(48 * 2 ** 20,
                         max(16 * 2 ** 20,
                             2 * (block_bytes + scratch_bytes + temp_bytes))))

    flops = int(2 * num_eb * te * COUT_PAD * (kc + tn)
                + 2 * num_nt * tn * cin_pad * COUT_PAD)
    bytes_accessed = int(E_pad * (4 + cin_pad * 2 + K_TOTAL * 4)
                         + N_pad * (cin_pad * 2 + 4 + COUT_PAD * 2)
                         + COUT_PAD * (kc + cin_pad) * 2 + COUT_PAD * 4)

    out = pl.pallas_call(
        _spline_conv_relu_kernel,
        out_shape=jax.ShapeDtypeStruct((COUT_PAD, N_pad), jnp.bfloat16),
        grid_spec=pltpu.PrefetchScalarGridSpec(
            num_scalar_prefetch=2,
            grid=(num_nt, max_neb),
            in_specs=in_specs,
            out_specs=out_spec,
            scratch_shapes=[pltpu.VMEM((COUT_PAD, tn), jnp.float32),
                            pltpu.VMEM((kc, te), jnp.bfloat16)],
        ),
        compiler_params=pltpu.CompilerParams(
            dimension_semantics=("parallel", "arbitrary"),  # node tiles shard across TCs
            vmem_limit_bytes=vmem_limit,
        ),
        cost_estimate=pl.CostEstimate(flops=flops, transcendentals=0,
                                      bytes_accessed=bytes_accessed),
    )(eb_start, neb, dstT, x_srcT, basisT, xT, invdeg, wT, rootT, biasT)
    return out


# ----------------------------------------------------------------------------
# MeshUpConv forward
# ----------------------------------------------------------------------------
def mesh_up_conv_forward(params, meshes, skips):
    # TODO(synk): MeshUnpool needs the mesh pooling-history data structure
    # (collapsed-edge records); inputs here are assumed already unpooled.
    out_ch = int(params['w1'].shape[2])
    outs = []
    for (x, edges, pseudo), skip in zip(meshes, skips):
        N, in_ch = x.shape
        skip_ch = skip.shape[1]
        meta = build_graph_meta(edges, N, tn=128)
        N_pad = meta["N_pad"]

        # B-spline basis in padded, tile-aligned edge-block order, shared by
        # all three convs (f32 rows on the small 36-entry sublane axis).
        pseudo_b = jnp.take(pseudo, jnp.asarray(meta["pseudo_gather"]), axis=0)
        basisT = spline_basis_dense(pseudo_b).T                       # (36, E_pad)

        # conv1(x) + ReLU
        cin1_pad = _round_up(in_ch, CIN_ALIGN)
        x1 = jnp.zeros((cin1_pad, N_pad), jnp.bfloat16)
        x1 = x1.at[:in_ch, :N].set(x.T.astype(jnp.bfloat16))
        v1 = spline_conv_relu(x1, meta, basisT,
                              params['w1'], params['root1'], params['b1'])

        # skip concat fused into the channel (sublane) rows of the padded bf16
        # layout -- no f32 slice / concat / re-pad HBM round trip.
        cin2 = out_ch + skip_ch
        cin2_pad = _round_up(cin2, CIN_ALIGN)
        x2 = jnp.zeros((cin2_pad, N_pad), jnp.bfloat16)
        x2 = x2.at[:out_ch].set(v1[:out_ch])
        x2 = x2.at[out_ch:cin2, :N].set(skip.T.astype(jnp.bfloat16))
        v2 = spline_conv_relu(x2, meta, basisT,
                              params['w1'], params['root1'], params['b1'])

        # conv2 + ReLU: rows >= out_ch of v2 are exact zeros, so a sublane
        # slice of the padded layout is already the next conv's input.
        x3 = v2[:_round_up(out_ch, CIN_ALIGN)]
        v3 = spline_conv_relu(x3, meta, basisT,
                              params['w2'], params['root2'], params['b2'])

        outs.append(v3[:out_ch, :N].T.astype(jnp.float32))
    return outs


# ----------------------------------------------------------------------------
# Pure-JAX f32 reference (for a loose correctness check)
# ----------------------------------------------------------------------------
def _spline_conv_relu_ref(x, src, dst, b_full, weight, root, bias):
    N, Cin = x.shape
    Cout = weight.shape[2]
    x_src = jnp.take(x, src, axis=0)
    t = jnp.repeat(b_full, Cin, axis=1) * jnp.tile(x_src, (1, K_TOTAL))
    msg = t @ weight.reshape(K_TOTAL * Cin, Cout)
    agg = jnp.zeros((N, Cout), jnp.float32).at[dst].add(msg)
    deg = jnp.zeros((N,), jnp.float32).at[dst].add(1.0)
    agg = agg / jnp.maximum(deg, 1.0)[:, None]
    return jnp.maximum(agg + x @ root + bias[None, :], 0.0)


def mesh_up_conv_ref(params, x, edges, pseudo, skip):
    src = jnp.asarray(np.asarray(edges)[0])
    dst = jnp.asarray(np.asarray(edges)[1])
    b_full = spline_basis_dense(pseudo)
    v = _spline_conv_relu_ref(x, src, dst, b_full,
                              params['w1'], params['root1'], params['b1'])
    v = jnp.concatenate([v, skip], axis=1)
    v = _spline_conv_relu_ref(v, src, dst, b_full,
                              params['w1'], params['root1'], params['b1'])
    v = _spline_conv_relu_ref(v, src, dst, b_full,
                              params['w2'], params['root2'], params['b2'])
    return v


if __name__ == "__main__":
    key = jax.random.PRNGKey(0)
    keys = jax.random.split(key, 9)

    in_ch, out_ch = 16, 8          # skip channels = in_ch - out_ch so conv1 re-applies
    N = 16                         # mesh vertices (already unpooled)

    # ring mesh: undirected edges {i, i+1} -> both directed edges
    und = np.stack([np.arange(N), (np.arange(N) + 1) % N], axis=0)
    edges_np = np.concatenate([und, und[::-1]], axis=1).astype(np.int32)   # (2, 2N)
    E = edges_np.shape[1]

    x = jax.random.normal(keys[0], (N, in_ch), jnp.float32)                # mesh.image
    skip = jax.random.normal(keys[1], (N, in_ch - out_ch), jnp.float32)
    pseudo = jax.random.uniform(keys[2], (E, DIM), jnp.float32)            # edge attrs in [0,1]^2

    params = {
        'w1':    0.1 * jax.random.normal(keys[3], (K_TOTAL, in_ch, out_ch), jnp.float32),
        'root1': 0.1 * jax.random.normal(keys[4], (in_ch, out_ch), jnp.float32),
        'b1':    0.1 * jax.random.normal(keys[5], (out_ch,), jnp.float32),
        'w2':    0.1 * jax.random.normal(keys[6], (K_TOTAL, out_ch, out_ch), jnp.float32),
        'root2': 0.1 * jax.random.normal(keys[7], (out_ch, out_ch), jnp.float32),
        'b2':    0.1 * jax.random.normal(keys[8], (out_ch,), jnp.float32),
    }

    meshes = [(x, edges_np, pseudo)]
    skips = [skip]

    outs = mesh_up_conv_forward(params, meshes, skips)
    outs = jax.block_until_ready(outs)
    out = outs[0]
    assert out.shape == (N, out_ch) and out.dtype == jnp.float32
    assert bool(jnp.all(out >= 0.0))   # last op is ReLU

    # Loose check vs. pure-JAX f32 reference (kernel uses bf16 MXU operands
    # and bf16 inter-layer activations).
    ref = jax.block_until_ready(mesh_up_conv_ref(params, x, edges_np, pseudo, skip))
    np.testing.assert_allclose(np.asarray(out), np.asarray(ref), rtol=5e-2, atol=5e-2)

    print("KERNEL_OK")
</pallas_src>

<mosaic_0001>
module attributes {stable_mosaic.version = 11 : i64} {
  func.func @_spline_conv_relu_kernel(%arg0: i32, %arg1: i32, %arg2: memref<2xi32, #tpu.memory_space<smem>>, %arg3: memref<2xi32, #tpu.memory_space<smem>>, %arg4: memref<128x1xi32, #tpu.memory_space<vmem>>, %arg5: memref<16x128xbf16, #tpu.memory_space<vmem>>, %arg6: memref<36x128xf32, #tpu.memory_space<vmem>>, %arg7: memref<16x128xbf16, #tpu.memory_space<vmem>>, %arg8: memref<1x128xf32, #tpu.memory_space<vmem>>, %arg9: memref<128x576xbf16, #tpu.memory_space<vmem>>, %arg10: memref<128x16xbf16, #tpu.memory_space<vmem>>, %arg11: memref<128x1xf32, #tpu.memory_space<vmem>>, %arg12: memref<128x128xbf16, #tpu.memory_space<vmem>>, %arg13: memref<128x128xf32, #tpu.memory_space<vmem>>, %arg14: memref<576x128xbf16, #tpu.memory_space<vmem>>) attributes {dimension_semantics = [#tpu.dimension_semantics<parallel>, #tpu.dimension_semantics<arbitrary>], iteration_bounds = array<i64: 2, 1>, scalar_prefetch = 2 : i64, scratch_operands = 2 : i64, tpu.core_type = #tpu.core_type<tc>, window_params = [{transform_indices = @transform_0, window_bounds = array<i64: 128, 1>}, {transform_indices = @transform_1, window_bounds = array<i64: 16, 128>}, {transform_indices = @transform_2, window_bounds = array<i64: 36, 128>}, {transform_indices = @transform_3, window_bounds = array<i64: 16, 128>}, {transform_indices = @transform_4, window_bounds = array<i64: 1, 128>}, {pipeline_mode = #tpu.pipeline_mode<synchronous>, transform_indices = @transform_5, window_bounds = array<i64: 128, 576>}, {pipeline_mode = #tpu.pipeline_mode<synchronous>, transform_indices = @transform_6, window_bounds = array<i64: 128, 16>}, {pipeline_mode = #tpu.pipeline_mode<synchronous>, transform_indices = @transform_7, window_bounds = array<i64: 128, 1>}, {transform_indices = @transform_8, window_bounds = array<i64: 128, 128>}]} {
    %c0_i32 = arith.constant 0 : i32
    %0 = arith.cmpi eq, %arg1, %c0_i32 : i32
    %1 = arith.extui %0 : i1 to i32
    %c0_i32_0 = arith.constant 0 : i32
    %2 = arith.cmpi ne, %1, %c0_i32_0 : i32
    scf.if %2 {
      %cst = arith.constant 0.000000e+00 : f32
      %11 = vector.broadcast %cst : f32 to vector<128x128xf32>
      %c0 = arith.constant 0 : index
      %c0_4 = arith.constant 0 : index
      %12 = vector.load %arg13[%c0, %c0_4] : memref<128x128xf32, #tpu.memory_space<vmem>>, vector<128x128xf32>
      tpu.vector_store %arg13[%c0, %c0_4], %11 {strides = array<i32>} : memref<128x128xf32, #tpu.memory_space<vmem>>, vector<128x128xf32>,
    } else {
    }
    %3 = arith.index_cast %arg0 : i32 to index
    %4 = memref.load %arg3[%3] : memref<2xi32, #tpu.memory_space<smem>>
    %5 = arith.cmpi slt, %arg1, %4 : i32
    %6 = arith.extui %5 : i1 to i32
    %c0_i32_1 = arith.constant 0 : i32
    %7 = arith.cmpi ne, %6, %c0_i32_1 : i32
    scf.if %7 {
      %c0 = arith.constant 0 : index
      %c0_4 = arith.constant 0 : index
      %11 = vector.load %arg5[%c0, %c0_4] : memref<16x128xbf16, #tpu.memory_space<vmem>>, vector<16x128xbf16>
      %c0_5 = arith.constant 0 : index
      %c0_6 = arith.constant 0 : index
      %12 = vector.load %arg6[%c0_5, %c0_6] : memref<36x128xf32, #tpu.memory_space<vmem>>, vector<1x128xf32>
      %13 = arith.extf %11 : vector<16x128xbf16> to vector<16x128xf32>
      %14 = vector.broadcast %12 : vector<1x128xf32> to vector<16x128xf32>
      %15 = arith.mulf %14, %13 : vector<16x128xf32>
      %16 = arith.truncf %15 : vector<16x128xf32> to vector<16x128xbf16>
      %c0_7 = arith.constant 0 : index
      %c0_8 = arith.constant 0 : index
      %17 = vector.load %arg14[%c0_7, %c0_8] : memref<576x128xbf16, #tpu.memory_space<vmem>>, vector<16x128xbf16>
      tpu.vector_store %arg14[%c0_7, %c0_8], %16 {strides = array<i32>} : memref<576x128xbf16, #tpu.memory_space<vmem>>, vector<16x128xbf16>,
      %c1 = arith.constant 1 : index
      %c0_9 = arith.constant 0 : index
      %18 = vector.load %arg6[%c1, %c0_9] : memref<36x128xf32, #tpu.memory_space<vmem>>, vector<1x128xf32>
      %19 = arith.extf %11 : vector<16x128xbf16> to vector<16x128xf32>
      %20 = vector.broadcast %18 : vector<1x128xf32> to vector<16x128xf32>
      %21 = arith.mulf %20, %19 : vector<16x128xf32>
      %22 = arith.truncf %21 : vector<16x128xf32> to vector<16x128xbf16>
      %c16 = arith.constant 16 : index
      %c0_10 = arith.constant 0 : index
      %23 = vector.load %arg14[%c16, %c0_10] : memref<576x128xbf16, #tpu.memory_space<vmem>>, vector<16x128xbf16>
      tpu.vector_store %arg14[%c16, %c0_10], %22 {strides = array<i32>} : memref<576x128xbf16, #tpu.memory_space<vmem>>, vector<16x128xbf16>,
      %c2 = arith.constant 2 : index
      %c0_11 = arith.constant 0 : index
      %24 = vector.load %arg6[%c2, %c0_11] : memref<36x128xf32, #tpu.memory_space<vmem>>, vector<1x128xf32>
      %25 = arith.extf %11 : vector<16x128xbf16> to vector<16x128xf32>
      %26 = vector.broadcast %24 : vector<1x128xf32> to vector<16x128xf32>
      %27 = arith.mulf %26, %25 : vector<16x128xf32>
      %28 = arith.truncf %27 : vector<16x128xf32> to vector<16x128xbf16>
      %c32 = arith.constant 32 : index
      %c0_12 = arith.constant 0 : index
      %29 = vector.load %arg14[%c32, %c0_12] : memref<576x128xbf16, #tpu.memory_space<vmem>>, vector<16x128xbf16>
      tpu.vector_store %arg14[%c32, %c0_12], %28 {strides = array<i32>} : memref<576x128xbf16, #tpu.memory_space<vmem>>, vector<16x128xbf16>,
      %c3 = arith.constant 3 : index
      %c0_13 = arith.constant 0 : index
      %30 = vector.load %arg6[%c3, %c0_13] : memref<36x128xf32, #tpu.memory_space<vmem>>, vector<1x128xf32>
      %31 = arith.extf %11 : vector<16x128xbf16> to vector<16x128xf32>
      %32 = vector.broadcast %30 : vector<1x128xf32> to vector<16x128xf32>
      %33 = arith.mulf %32, %31 : vector<16x128xf32>
      %34 = arith.truncf %33 : vector<16x128xf32> to vector<16x128xbf16>
      %c48 = arith.constant 48 : index
      %c0_14 = arith.constant 0 : index
      %35 = vector.load %arg14[%c48, %c0_14] : memref<576x128xbf16, #tpu.memory_space<vmem>>, vector<16x128xbf16>
      tpu.vector_store %arg14[%c48, %c0_14], %34 {strides = array<i32>} : memref<576x128xbf16, #tpu.memory_space<vmem>>, vector<16x128xbf16>,
      %c4 = arith.constant 4 : index
      %c0_15 = arith.constant 0 : index
      %36 = vector.load %arg6[%c4, %c0_15] : memref<36x128xf32, #tpu.memory_space<vmem>>, vector<1x128xf32>
      %37 = arith.extf %11 : vector<16x128xbf16> to vector<16x128xf32>
      %38 = vector.broadcast %36 : vector<1x128xf32> to vector<16x128xf32>
      %39 = arith.mulf %38, %37 : vector<16x128xf32>
      %40 = arith.truncf %39 : vector<16x128xf32> to vector<16x128xbf16>
      %c64 = arith.constant 64 : index
      %c0_16 = arith.constant 0 : index
      %41 = vector.load %arg14[%c64, %c0_16] : memref<576x128xbf16, #tpu.memory_space<vmem>>, vector<16x128xbf16>
      tpu.vector_store %arg14[%c64, %c0_16], %40 {strides = array<i32>} : memref<576x128xbf16, #tpu.memory_space<vmem>>, vector<16x128xbf16>,
      %c5 = arith.constant 5 : index
      %c0_17 = arith.constant 0 : index
      %42 = vector.load %arg6[%c5, %c0_17] : memref<36x128xf32, #tpu.memory_space<vmem>>, vector<1x128xf32>
      %43 = arith.extf %11 : vector<16x128xbf16> to vector<16x128xf32>
      %44 = vector.broadcast %42 : vector<1x128xf32> to vector<16x128xf32>
      %45 = arith.mulf %44, %43 : vector<16x128xf32>
      %46 = arith.truncf %45 : vector<16x128xf32> to vector<16x128xbf16>
      %c80 = arith.constant 80 : index
      %c0_18 = arith.constant 0 : index
      %47 = vector.load %arg14[%c80, %c0_18] : memref<576x128xbf16, #tpu.memory_space<vmem>>, vector<16x128xbf16>
      tpu.vector_store %arg14[%c80, %c0_18], %46 {strides = array<i32>} : memref<576x128xbf16, #tpu.memory_space<vmem>>, vector<16x128xbf16>,
      %c6 = arith.constant 6 : index
      %c0_19 = arith.constant 0 : index
      %48 = vector.load %arg6[%c6, %c0_19] : memref<36x128xf32, #tpu.memory_space<vmem>>, vector<1x128xf32>
      %49 = arith.extf %11 : vector<16x128xbf16> to vector<16x128xf32>
      %50 = vector.broadcast %48 : vector<1x128xf32> to vector<16x128xf32>
      %51 = arith.mulf %50, %49 : vector<16x128xf32>
      %52 = arith.truncf %51 : vector<16x128xf32> to vector<16x128xbf16>
      %c96 = arith.constant 96 : index
      %c0_20 = arith.constant 0 : index
      %53 = vector.load %arg14[%c96, %c0_20] : memref<576x128xbf16, #tpu.memory_space<vmem>>, vector<16x128xbf16>
      tpu.vector_store %arg14[%c96, %c0_20], %52 {strides = array<i32>} : memref<576x128xbf16, #tpu.memory_space<vmem>>, vector<16x128xbf16>,
      %c7 = arith.constant 7 : index
      %c0_21 = arith.constant 0 : index
      %54 = vector.load %arg6[%c7, %c0_21] : memref<36x128xf32, #tpu.memory_space<vmem>>, vector<1x128xf32>
      %55 = arith.extf %11 : vector<16x128xbf16> to vector<16x128xf32>
      %56 = vector.broadcast %54 : vector<1x128xf32> to vector<16x128xf32>
      %57 = arith.mulf %56, %55 : vector<16x128xf32>
      %58 = arith.truncf %57 : vector<16x128xf32> to vector<16x128xbf16>
      %c112 = arith.constant 112 : index
      %c0_22 = arith.constant 0 : index
      %59 = vector.load %arg14[%c112, %c0_22] : memref<576x128xbf16, #tpu.memory_space<vmem>>, vector<16x128xbf16>
      tpu.vector_store %arg14[%c112, %c0_22], %58 {strides = array<i32>} : memref<576x128xbf16, #tpu.memory_space<vmem>>, vector<16x128xbf16>,
      %c8 = arith.constant 8 : index
      %c0_23 = arith.constant 0 : index
      %60 = vector.load %arg6[%c8, %c0_23] : memref<36x128xf32, #tpu.memory_space<vmem>>, vector<1x128xf32>
      %61 = arith.extf %11 : vector<16x128xbf16> to vector<16x128xf32>
      %62 = vector.broadcast %60 : vector<1x128xf32> to vector<16x128xf32>
      %63 = arith.mulf %62, %61 : vector<16x128xf32>
      %64 = arith.truncf %63 : vector<16x128xf32> to vector<16x128xbf16>
      %c128 = arith.constant 128 : index
      %c0_24 = arith.constant 0 : index
      %65 = vector.load %arg14[%c128, %c0_24] : memref<576x128xbf16, #tpu.memory_space<vmem>>, vector<16x128xbf16>
      tpu.vector_store %arg14[%c128, %c0_24], %64 {strides = array<i32>} : memref<576x128xbf16, #tpu.memory_space<vmem>>, vector<16x128xbf16>,
      %c9 = arith.constant 9 : index
      %c0_25 = arith.constant 0 : index
      %66 = vector.load %arg6[%c9, %c0_25] : memref<36x128xf32, #tpu.memory_space<vmem>>, vector<1x128xf32>
      %67 = arith.extf %11 : vector<16x128xbf16> to vector<16x128xf32>
      %68 = vector.broadcast %66 : vector<1x128xf32> to vector<16x128xf32>
      %69 = arith.mulf %68, %67 : vector<16x128xf32>
      %70 = arith.truncf %69 : vector<16x128xf32> to vector<16x128xbf16>
      %c144 = arith.constant 144 : index
      %c0_26 = arith.constant 0 : index
      %71 = vector.load %arg14[%c144, %c0_26] : memref<576x128xbf16, #tpu.memory_space<vmem>>, vector<16x128xbf16>
      tpu.vector_store %arg14[%c144, %c0_26], %70 {strides = array<i32>} : memref<576x128xbf16, #tpu.memory_space<vmem>>, vector<16x128xbf16>,
      %c10 = arith.constant 10 : index
      %c0_27 = arith.constant 0 : index
      %72 = vector.load %arg6[%c10, %c0_27] : memref<36x128xf32, #tpu.memory_space<vmem>>, vector<1x128xf32>
      %73 = arith.extf %11 : vector<16x128xbf16> to vector<16x128xf32>
      %74 = vector.broadcast %72 : vector<1x128xf32> to vector<16x128xf32>
      %75 = arith.mulf %74, %73 : vector<16x128xf32>
      %76 = arith.truncf %75 : vector<16x128xf32> to vector<16x128xbf16>
      %c160 = arith.constant 160 : index
      %c0_28 = arith.constant 0 : index
      %77 = vector.load %arg14[%c160, %c0_28] : memref<576x128xbf16, #tpu.memory_space<vmem>>, vector<16x128xbf16>
      tpu.vector_store %arg14[%c160, %c0_28], %76 {strides = array<i32>} : memref<576x128xbf16, #tpu.memory_space<vmem>>, vector<16x128xbf16>,
      %c11 = arith.constant 11 : index
      %c0_29 = arith.constant 0 : index
      %78 = vector.load %arg6[%c11, %c0_29] : memref<36x128xf32, #tpu.memory_space<vmem>>, vector<1x128xf32>
      %79 = arith.extf %11 : vector<16x128xbf16> to vector<16x128xf32>
      %80 = vector.broadcast %78 : vector<1x128xf32> to vector<16x128xf32>
      %81 = arith.mulf %80, %79 : vector<16x128xf32>
      %82 = arith.truncf %81 : vector<16x128xf32> to vector<16x128xbf16>
      %c176 = arith.constant 176 : index
      %c0_30 = arith.constant 0 : index
      %83 = vector.load %arg14[%c176, %c0_30] : memref<576x128xbf16, #tpu.memory_space<vmem>>, vector<16x128xbf16>
      tpu.vector_store %arg14[%c176, %c0_30], %82 {strides = array<i32>} : memref<576x128xbf16, #tpu.memory_space<vmem>>, vector<16x128xbf16>,
      %c12 = arith.constant 12 : index
      %c0_31 = arith.constant 0 : index
      %84 = vector.load %arg6[%c12, %c0_31] : memref<36x128xf32, #tpu.memory_space<vmem>>, vector<1x128xf32>
      %85 = arith.extf %11 : vector<16x128xbf16> to vector<16x128xf32>
      %86 = vector.broadcast %84 : vector<1x128xf32> to vector<16x128xf32>
      %87 = arith.mulf %86, %85 : vector<16x128xf32>
      %88 = arith.truncf %87 : vector<16x128xf32> to vector<16x128xbf16>
      %c192 = arith.constant 192 : index
      %c0_32 = arith.constant 0 : index
      %89 = vector.load %arg14[%c192, %c0_32] : memref<576x128xbf16, #tpu.memory_space<vmem>>, vector<16x128xbf16>
      tpu.vector_store %arg14[%c192, %c0_32], %88 {strides = array<i32>} : memref<576x128xbf16, #tpu.memory_space<vmem>>, vector<16x128xbf16>,
      %c13 = arith.constant 13 : index
      %c0_33 = arith.constant 0 : index
      %90 = vector.load %arg6[%c13, %c0_33] : memref<36x128xf32, #tpu.memory_space<vmem>>, vector<1x128xf32>
      %91 = arith.extf %11 : vector<16x128xbf16> to vector<16x128xf32>
      %92 = vector.broadcast %90 : vector<1x128xf32> to vector<16x128xf32>
      %93 = arith.mulf %92, %91 : vector<16x128xf32>
      %94 = arith.truncf %93 : vector<16x128xf32> to vector<16x128xbf16>
      %c208 = arith.constant 208 : index
      %c0_34 = arith.constant 0 : index
      %95 = vector.load %arg14[%c208, %c0_34] : memref<576x128xbf16, #tpu.memory_space<vmem>>, vector<16x128xbf16>
      tpu.vector_store %arg14[%c208, %c0_34], %94 {strides = array<i32>} : memref<576x128xbf16, #tpu.memory_space<vmem>>, vector<16x128xbf16>,
      %c14 = arith.constant 14 : index
      %c0_35 = arith.constant 0 : index
      %96 = vector.load %arg6[%c14, %c0_35] : memref<36x128xf32, #tpu.memory_space<vmem>>, vector<1x128xf32>
      %97 = arith.extf %11 : vector<16x128xbf16> to vector<16x128xf32>
      %98 = vector.broadcast %96 : vector<1x128xf32> to vector<16x128xf32>
      %99 = arith.mulf %98, %97 : vector<16x128xf32>
      %100 = arith.truncf %99 : vector<16x128xf32> to vector<16x128xbf16>
      %c224 = arith.constant 224 : index
      %c0_36 = arith.constant 0 : index
      %101 = vector.load %arg14[%c224, %c0_36] : memref<576x128xbf16, #tpu.memory_space<vmem>>, vector<16x128xbf16>
      tpu.vector_store %arg14[%c224, %c0_36], %100 {strides = array<i32>} : memref<576x128xbf16, #tpu.memory_space<vmem>>, vector<16x128xbf16>,
      %c15 = arith.constant 15 : index
      %c0_37 = arith.constant 0 : index
      %102 = vector.load %arg6[%c15, %c0_37] : memref<36x128xf32, #tpu.memory_space<vmem>>, vector<1x128xf32>
      %103 = arith.extf %11 : vector<16x128xbf16> to vector<16x128xf32>
      %104 = vector.broadcast %102 : vector<1x128xf32> to vector<16x128xf32>
      %105 = arith.mulf %104, %103 : vector<16x128xf32>
      %106 = arith.truncf %105 : vector<16x128xf32> to vector<16x128xbf16>
      %c240 = arith.constant 240 : index
      %c0_38 = arith.constant 0 : index
      %107 = vector.load %arg14[%c240, %c0_38] : memref<576x128xbf16, #tpu.memory_space<vmem>>, vector<16x128xbf16>
      tpu.vector_store %arg14[%c240, %c0_38], %106 {strides = array<i32>} : memref<576x128xbf16, #tpu.memory_space<vmem>>, vector<16x128xbf16>,
      %c16_39 = arith.constant 16 : index
      %c0_40 = arith.constant 0 : index
      %108 = vector.load %arg6[%c16_39, %c0_40] : memref<36x128xf32, #tpu.memory_space<vmem>>, vector<1x128xf32>
      %109 = arith.extf %11 : vector<16x128xbf16> to vector<16x128xf32>
      %110 = vector.broadcast %108 : vector<1x128xf32> to vector<16x128xf32>
      %111 = arith.mulf %110, %109 : vector<16x128xf32>
      %112 = arith.truncf %111 : vector<16x128xf32> to vector<16x128xbf16>
      %c256 = arith.constant 256 : index
      %c0_41 = arith.constant 0 : index
      %113 = vector.load %arg14[%c256, %c0_41] : memref<576x128xbf16, #tpu.memory_space<vmem>>, vector<16x128xbf16>
      tpu.vector_store %arg14[%c256, %c0_41], %112 {strides = array<i32>} : memref<576x128xbf16, #tpu.memory_space<vmem>>, vector<16x128xbf16>,
      %c17 = arith.constant 17 : index
      %c0_42 = arith.constant 0 : index
      %114 = vector.load %arg6[%c17, %c0_42] : memref<36x128xf32, #tpu.memory_space<vmem>>, vector<1x128xf32>
      %115 = arith.extf %11 : vector<16x128xbf16> to vector<16x128xf32>
      %116 = vector.broadcast %114 : vector<1x128xf32> to vector<16x128xf32>
      %117 = arith.mulf %116, %115 : vector<16x128xf32>
      %118 = arith.truncf %117 : vector<16x128xf32> to vector<16x128xbf16>
      %c272 = arith.constant 272 : index
      %c0_43 = arith.constant 0 : index
      %119 = vector.load %arg14[%c272, %c0_43] : memref<576x128xbf16, #tpu.memory_space<vmem>>, vector<16x128xbf16>
      tpu.vector_store %arg14[%c272, %c0_43], %118 {strides = array<i32>} : memref<576x128xbf16, #tpu.memory_space<vmem>>, vector<16x128xbf16>,
      %c18 = arith.constant 18 : index
      %c0_44 = arith.constant 0 : index
      %120 = vector.load %arg6[%c18, %c0_44] : memref<36x128xf32, #tpu.memory_space<vmem>>, vector<1x128xf32>
      %121 = arith.extf %11 : vector<16x128xbf16> to vector<16x128xf32>
      %122 = vector.broadcast %120 : vector<1x128xf32> to vector<16x128xf32>
      %123 = arith.mulf %122, %121 : vector<16x128xf32>
      %124 = arith.truncf %123 : vector<16x128xf32> to vector<16x128xbf16>
      %c288 = arith.constant 288 : index
      %c0_45 = arith.constant 0 : index
      %125 = vector.load %arg14[%c288, %c0_45] : memref<576x128xbf16, #tpu.memory_space<vmem>>, vector<16x128xbf16>
      tpu.vector_store %arg14[%c288, %c0_45], %124 {strides = array<i32>} : memref<576x128xbf16, #tpu.memory_space<vmem>>, vector<16x128xbf16>,
      %c19 = arith.constant 19 : index
      %c0_46 = arith.constant 0 : index
      %126 = vector.load %arg6[%c19, %c0_46] : memref<36x128xf32, #tpu.memory_space<vmem>>, vector<1x128xf32>
      %127 = arith.extf %11 : vector<16x128xbf16> to vector<16x128xf32>
      %128 = vector.broadcast %126 : vector<1x128xf32> to vector<16x128xf32>
      %129 = arith.mulf %128, %127 : vector<16x128xf32>
      %130 = arith.truncf %129 : vector<16x128xf32> to vector<16x128xbf16>
      %c304 = arith.constant 304 : index
      %c0_47 = arith.constant 0 : index
      %131 = vector.load %arg14[%c304, %c0_47] : memref<576x128xbf16, #tpu.memory_space<vmem>>, vector<16x128xbf16>
      tpu.vector_store %arg14[%c304, %c0_47], %130 {strides = array<i32>} : memref<576x128xbf16, #tpu.memory_space<vmem>>, vector<16x128xbf16>,
      %c20 = arith.constant 20 : index
      %c0_48 = arith.constant 0 : index
      %132 = vector.load %arg6[%c20, %c0_48] : memref<36x128xf32, #tpu.memory_space<vmem>>, vector<1x128xf32>
      %133 = arith.extf %11 : vector<16x128xbf16> to vector<16x128xf32>
      %134 = vector.broadcast %132 : vector<1x128xf32> to vector<16x128xf32>
      %135 = arith.mulf %134, %133 : vector<16x128xf32>
      %136 = arith.truncf %135 : vector<16x128xf32> to vector<16x128xbf16>
      %c320 = arith.constant 320 : index
      %c0_49 = arith.constant 0 : index
      %137 = vector.load %arg14[%c320, %c0_49] : memref<576x128xbf16, #tpu.memory_space<vmem>>, vector<16x128xbf16>
      tpu.vector_store %arg14[%c320, %c0_49], %136 {strides = array<i32>} : memref<576x128xbf16, #tpu.memory_space<vmem>>, vector<16x128xbf16>,
      %c21 = arith.constant 21 : index
      %c0_50 = arith.constant 0 : index
      %138 = vector.load %arg6[%c21, %c0_50] : memref<36x128xf32, #tpu.memory_space<vmem>>, vector<1x128xf32>
      %139 = arith.extf %11 : vector<16x128xbf16> to vector<16x128xf32>
      %140 = vector.broadcast %138 : vector<1x128xf32> to vector<16x128xf32>
      %141 = arith.mulf %140, %139 : vector<16x128xf32>
      %142 = arith.truncf %141 : vector<16x128xf32> to vector<16x128xbf16>
      %c336 = arith.constant 336 : index
      %c0_51 = arith.constant 0 : index
      %143 = vector.load %arg14[%c336, %c0_51] : memref<576x128xbf16, #tpu.memory_space<vmem>>, vector<16x128xbf16>
      tpu.vector_store %arg14[%c336, %c0_51], %142 {strides = array<i32>} : memref<576x128xbf16, #tpu.memory_space<vmem>>, vector<16x128xbf16>,
      %c22 = arith.constant 22 : index
      %c0_52 = arith.constant 0 : index
      %144 = vector.load %arg6[%c22, %c0_52] : memref<36x128xf32, #tpu.memory_space<vmem>>, vector<1x128xf32>
      %145 = arith.extf %11 : vector<16x128xbf16> to vector<16x128xf32>
      %146 = vector.broadcast %144 : vector<1x128xf32> to vector<16x128xf32>
      %147 = arith.mulf %146, %145 : vector<16x128xf32>
      %148 = arith.truncf %147 : vector<16x128xf32> to vector<16x128xbf16>
      %c352 = arith.constant 352 : index
      %c0_53 = arith.constant 0 : index
      %149 = vector.load %arg14[%c352, %c0_53] : memref<576x128xbf16, #tpu.memory_space<vmem>>, vector<16x128xbf16>
      tpu.vector_store %arg14[%c352, %c0_53], %148 {strides = array<i32>} : memref<576x128xbf16, #tpu.memory_space<vmem>>, vector<16x128xbf16>,
      %c23 = arith.constant 23 : index
      %c0_54 = arith.constant 0 : index
      %150 = vector.load %arg6[%c23, %c0_54] : memref<36x128xf32, #tpu.memory_space<vmem>>, vector<1x128xf32>
      %151 = arith.extf %11 : vector<16x128xbf16> to vector<16x128xf32>
      %152 = vector.broadcast %150 : vector<1x128xf32> to vector<16x128xf32>
      %153 = arith.mulf %152, %151 : vector<16x128xf32>
      %154 = arith.truncf %153 : vector<16x128xf32> to vector<16x128xbf16>
      %c368 = arith.constant 368 : index
      %c0_55 = arith.constant 0 : index
      %155 = vector.load %arg14[%c368, %c0_55] : memref<576x128xbf16, #tpu.memory_space<vmem>>, vector<16x128xbf16>
      tpu.vector_store %arg14[%c368, %c0_55], %154 {strides = array<i32>} : memref<576x128xbf16, #tpu.memory_space<vmem>>, vector<16x128xbf16>,
      %c24 = arith.constant 24 : index
      %c0_56 = arith.constant 0 : index
      %156 = vector.load %arg6[%c24, %c0_56] : memref<36x128xf32, #tpu.memory_space<vmem>>, vector<1x128xf32>
      %157 = arith.extf %11 : vector<16x128xbf16> to vector<16x128xf32>
      %158 = vector.broadcast %156 : vector<1x128xf32> to vector<16x128xf32>
      %159 = arith.mulf %158, %157 : vector<16x128xf32>
      %160 = arith.truncf %159 : vector<16x128xf32> to vector<16x128xbf16>
      %c384 = arith.constant 384 : index
      %c0_57 = arith.constant 0 : index
      %161 = vector.load %arg14[%c384, %c0_57] : memref<576x128xbf16, #tpu.memory_space<vmem>>, vector<16x128xbf16>
      tpu.vector_store %arg14[%c384, %c0_57], %160 {strides = array<i32>} : memref<576x128xbf16, #tpu.memory_space<vmem>>, vector<16x128xbf16>,
      %c25 = arith.constant 25 : index
      %c0_58 = arith.constant 0 : index
      %162 = vector.load %arg6[%c25, %c0_58] : memref<36x128xf32, #tpu.memory_space<vmem>>, vector<1x128xf32>
      %163 = arith.extf %11 : vector<16x128xbf16> to vector<16x128xf32>
      %164 = vector.broadcast %162 : vector<1x128xf32> to vector<16x128xf32>
      %165 = arith.mulf %164, %163 : vector<16x128xf32>
      %166 = arith.truncf %165 : vector<16x128xf32> to vector<16x128xbf16>
      %c400 = arith.constant 400 : index
      %c0_59 = arith.constant 0 : index
      %167 = vector.load %arg14[%c400, %c0_59] : memref<576x128xbf16, #tpu.memory_space<vmem>>, vector<16x128xbf16>
      tpu.vector_store %arg14[%c400, %c0_59], %166 {strides = array<i32>} : memref<576x128xbf16, #tpu.memory_space<vmem>>, vector<16x128xbf16>,
      %c26 = arith.constant 26 : index
      %c0_60 = arith.constant 0 : index
      %168 = vector.load %arg6[%c26, %c0_60] : memref<36x128xf32, #tpu.memory_space<vmem>>, vector<1x128xf32>
      %169 = arith.extf %11 : vector<16x128xbf16> to vector<16x128xf32>
      %170 = vector.broadcast %168 : vector<1x128xf32> to vector<16x128xf32>
      %171 = arith.mulf %170, %169 : vector<16x128xf32>
      %172 = arith.truncf %171 : vector<16x128xf32> to vector<16x128xbf16>
      %c416 = arith.constant 416 : index
      %c0_61 = arith.constant 0 : index
      %173 = vector.load %arg14[%c416, %c0_61] : memref<576x128xbf16, #tpu.memory_space<vmem>>, vector<16x128xbf16>
      tpu.vector_store %arg14[%c416, %c0_61], %172 {strides = array<i32>} : memref<576x128xbf16, #tpu.memory_space<vmem>>, vector<16x128xbf16>,
      %c27 = arith.constant 27 : index
      %c0_62 = arith.constant 0 : index
      %174 = vector.load %arg6[%c27, %c0_62] : memref<36x128xf32, #tpu.memory_space<vmem>>, vector<1x128xf32>
      %175 = arith.extf %11 : vector<16x128xbf16> to vector<16x128xf32>
      %176 = vector.broadcast %174 : vector<1x128xf32> to vector<16x128xf32>
      %177 = arith.mulf %176, %175 : vector<16x128xf32>
      %178 = arith.truncf %177 : vector<16x128xf32> to vector<16x128xbf16>
      %c432 = arith.constant 432 : index
      %c0_63 = arith.constant 0 : index
      %179 = vector.load %arg14[%c432, %c0_63] : memref<576x128xbf16, #tpu.memory_space<vmem>>, vector<16x128xbf16>
      tpu.vector_store %arg14[%c432, %c0_63], %178 {strides = array<i32>} : memref<576x128xbf16, #tpu.memory_space<vmem>>, vector<16x128xbf16>,
      %c28 = arith.constant 28 : index
      %c0_64 = arith.constant 0 : index
      %180 = vector.load %arg6[%c28, %c0_64] : memref<36x128xf32, #tpu.memory_space<vmem>>, vector<1x128xf32>
      %181 = arith.extf %11 : vector<16x128xbf16> to vector<16x128xf32>
      %182 = vector.broadcast %180 : vector<1x128xf32> to vector<16x128xf32>
      %183 = arith.mulf %182, %181 : vector<16x128xf32>
      %184 = arith.truncf %183 : vector<16x128xf32> to vector<16x128xbf16>
      %c448 = arith.constant 448 : index
      %c0_65 = arith.constant 0 : index
      %185 = vector.load %arg14[%c448, %c0_65] : memref<576x128xbf16, #tpu.memory_space<vmem>>, vector<16x128xbf16>
      tpu.vector_store %arg14[%c448, %c0_65], %184 {strides = array<i32>} : memref<576x128xbf16, #tpu.memory_space<vmem>>, vector<16x128xbf16>,
      %c29 = arith.constant 29 : index
      %c0_66 = arith.constant 0 : index
      %186 = vector.load %arg6[%c29, %c0_66] : memref<36x128xf32, #tpu.memory_space<vmem>>, vector<1x128xf32>
      %187 = arith.extf %11 : vector<16x128xbf16> to vector<16x128xf32>
      %188 = vector.broadcast %186 : vector<1x128xf32> to vector<16x128xf32>
      %189 = arith.mulf %188, %187 : vector<16x128xf32>
      %190 = arith.truncf %189 : vector<16x128xf32> to vector<16x128xbf16>
      %c464 = arith.constant 464 : index
      %c0_67 = arith.constant 0 : index
      %191 = vector.load %arg14[%c464, %c0_67] : memref<576x128xbf16, #tpu.memory_space<vmem>>, vector<16x128xbf16>
      tpu.vector_store %arg14[%c464, %c0_67], %190 {strides = array<i32>} : memref<576x128xbf16, #tpu.memory_space<vmem>>, vector<16x128xbf16>,
      %c30 = arith.constant 30 : index
      %c0_68 = arith.constant 0 : index
      %192 = vector.load %arg6[%c30, %c0_68] : memref<36x128xf32, #tpu.memory_space<vmem>>, vector<1x128xf32>
      %193 = arith.extf %11 : vector<16x128xbf16> to vector<16x128xf32>
      %194 = vector.broadcast %192 : vector<1x128xf32> to vector<16x128xf32>
      %195 = arith.mulf %194, %193 : vector<16x128xf32>
      %196 = arith.truncf %195 : vector<16x128xf32> to vector<16x128xbf16>
      %c480 = arith.constant 480 : index
      %c0_69 = arith.constant 0 : index
      %197 = vector.load %arg14[%c480, %c0_69] : memref<576x128xbf16, #tpu.memory_space<vmem>>, vector<16x128xbf16>
      tpu.vector_store %arg14[%c480, %c0_69], %196 {strides = array<i32>} : memref<576x128xbf16, #tpu.memory_space<vmem>>, vector<16x128xbf16>,
      %c31 = arith.constant 31 : index
      %c0_70 = arith.constant 0 : index
      %198 = vector.load %arg6[%c31, %c0_70] : memref<36x128xf32, #tpu.memory_space<vmem>>, vector<1x128xf32>
      %199 = arith.extf %11 : vector<16x128xbf16> to vector<16x128xf32>
      %200 = vector.broadcast %198 : vector<1x128xf32> to vector<16x128xf32>
      %201 = arith.mulf %200, %199 : vector<16x128xf32>
      %202 = arith.truncf %201 : vector<16x128xf32> to vector<16x128xbf16>
      %c496 = arith.constant 496 : index
      %c0_71 = arith.constant 0 : index
      %203 = vector.load %arg14[%c496, %c0_71] : memref<576x128xbf16, #tpu.memory_space<vmem>>, vector<16x128xbf16>
      tpu.vector_store %arg14[%c496, %c0_71], %202 {strides = array<i32>} : memref<576x128xbf16, #tpu.memory_space<vmem>>, vector<16x128xbf16>,
      %c32_72 = arith.constant 32 : index
      %c0_73 = arith.constant 0 : index
      %204 = vector.load %arg6[%c32_72, %c0_73] : memref<36x128xf32, #tpu.memory_space<vmem>>, vector<1x128xf32>
      %205 = arith.extf %11 : vector<16x128xbf16> to vector<16x128xf32>
      %206 = vector.broadcast %204 : vector<1x128xf32> to vector<16x128xf32>
      %207 = arith.mulf %206, %205 : vector<16x128xf32>
      %208 = arith.truncf %207 : vector<16x128xf32> to vector<16x128xbf16>
      %c512 = arith.constant 512 : index
      %c0_74 = arith.constant 0 : index
      %209 = vector.load %arg14[%c512, %c0_74] : memref<576x128xbf16, #tpu.memory_space<vmem>>, vector<16x128xbf16>
      tpu.vector_store %arg14[%c512, %c0_74], %208 {strides = array<i32>} : memref<576x128xbf16, #tpu.memory_space<vmem>>, vector<16x128xbf16>,
      %c33 = arith.constant 33 : index
      %c0_75 = arith.constant 0 : index
      %210 = vector.load %arg6[%c33, %c0_75] : memref<36x128xf32, #tpu.memory_space<vmem>>, vector<1x128xf32>
      %211 = arith.extf %11 : vector<16x128xbf16> to vector<16x128xf32>
      %212 = vector.broadcast %210 : vector<1x128xf32> to vector<16x128xf32>
      %213 = arith.mulf %212, %211 : vector<16x128xf32>
      %214 = arith.truncf %213 : vector<16x128xf32> to vector<16x128xbf16>
      %c528 = arith.constant 528 : index
      %c0_76 = arith.constant 0 : index
      %215 = vector.load %arg14[%c528, %c0_76] : memref<576x128xbf16, #tpu.memory_space<vmem>>, vector<16x128xbf16>
      tpu.vector_store %arg14[%c528, %c0_76], %214 {strides = array<i32>} : memref<576x128xbf16, #tpu.memory_space<vmem>>, vector<16x128xbf16>,
      %c34 = arith.constant 34 : index
      %c0_77 = arith.constant 0 : index
      %216 = vector.load %arg6[%c34, %c0_77] : memref<36x128xf32, #tpu.memory_space<vmem>>, vector<1x128xf32>
      %217 = arith.extf %11 : vector<16x128xbf16> to vector<16x128xf32>
      %218 = vector.broadcast %216 : vector<1x128xf32> to vector<16x128xf32>
      %219 = arith.mulf %218, %217 : vector<16x128xf32>
      %220 = arith.truncf %219 : vector<16x128xf32> to vector<16x128xbf16>
      %c544 = arith.constant 544 : index
      %c0_78 = arith.constant 0 : index
      %221 = vector.load %arg14[%c544, %c0_78] : memref<576x128xbf16, #tpu.memory_space<vmem>>, vector<16x128xbf16>
      tpu.vector_store %arg14[%c544, %c0_78], %220 {strides = array<i32>} : memref<576x128xbf16, #tpu.memory_space<vmem>>, vector<16x128xbf16>,
      %c35 = arith.constant 35 : index
      %c0_79 = arith.constant 0 : index
      %222 = vector.load %arg6[%c35, %c0_79] : memref<36x128xf32, #tpu.memory_space<vmem>>, vector<1x128xf32>
      %223 = arith.extf %11 : vector<16x128xbf16> to vector<16x128xf32>
      %224 = vector.broadcast %222 : vector<1x128xf32> to vector<16x128xf32>
      %225 = arith.mulf %224, %223 : vector<16x128xf32>
      %226 = arith.truncf %225 : vector<16x128xf32> to vector<16x128xbf16>
      %c560 = arith.constant 560 : index
      %c0_80 = arith.constant 0 : index
      %227 = vector.load %arg14[%c560, %c0_80] : memref<576x128xbf16, #tpu.memory_space<vmem>>, vector<16x128xbf16>
      tpu.vector_store %arg14[%c560, %c0_80], %226 {strides = array<i32>} : memref<576x128xbf16, #tpu.memory_space<vmem>>, vector<16x128xbf16>,
      %c0_81 = arith.constant 0 : index
      %c0_82 = arith.constant 0 : index
      %228 = vector.load %arg9[%c0_81, %c0_82] : memref<128x576xbf16, #tpu.memory_space<vmem>>, vector<128x576xbf16>
      %c0_83 = arith.constant 0 : index
      %c0_84 = arith.constant 0 : index
      %229 = vector.load %arg14[%c0_83, %c0_84] : memref<576x128xbf16, #tpu.memory_space<vmem>>, vector<576x128xbf16>
      %cst = arith.constant dense<0.000000e+00> : vector<128x128xf32>
      %230 = tpu.matmul %228, %229, %cst {dimension_numbers = #tpu.dot_dimension_numbers<[1], [0], [0], [1], [0, 0, 1, 1], [], []>} : vector<128x576xbf16>, vector<576x128xbf16>, vector<128x128xf32> -> vector<128x128xf32>
      %c128_i32 = arith.constant 128 : i32
      %231 = arith.muli %arg0, %c128_i32 : i32
      %232 = tpu.iota {dimensions = array<i32: 1>} : vector<128x128xi32>
      %233 = vector.broadcast %231 : i32 to vector<128x128xi32>
      %234 = arith.addi %233, %232 : vector<128x128xi32>
      %c0_85 = arith.constant 0 : index
      %c0_86 = arith.constant 0 : index
      %235 = vector.load %arg4[%c0_85, %c0_86] : memref<128x1xi32, #tpu.memory_space<vmem>>, vector<128x1xi32>
      %236 = vector.broadcast %235 : vector<128x1xi32> to vector<128x128xi32>
      %237 = arith.cmpi eq, %236, %234 : vector<128x128xi32>
      %238 = arith.extui %237 : vector<128x128xi1> to vector<128x128xi32>
      %239 = arith.sitofp %238 : vector<128x128xi32> to vector<128x128xf32>
      %240 = arith.truncf %239 : vector<128x128xf32> to vector<128x128xbf16>
      %c0_87 = arith.constant 0 : index
      %c0_88 = arith.constant 0 : index
      %241 = vector.load %arg13[%c0_87, %c0_88] : memref<128x128xf32, #tpu.memory_space<vmem>>, vector<128x128xf32>
      %242 = arith.truncf %230 : vector<128x128xf32> to vector<128x128xbf16>
      %cst_89 = arith.constant dense<0.000000e+00> : vector<128x128xf32>
      %243 = tpu.matmul %242, %240, %cst_89 {dimension_numbers = #tpu.dot_dimension_numbers<[1], [0], [0], [1], [0, 0, 1, 1], [], []>} : vector<128x128xbf16>, vector<128x128xbf16>, vector<128x128xf32> -> vector<128x128xf32>
      %244 = arith.addf %241, %243 : vector<128x128xf32>
      %c0_90 = arith.constant 0 : index
      %c0_91 = arith.constant 0 : index
      %245 = vector.load %arg13[%c0_90, %c0_91] : memref<128x128xf32, #tpu.memory_space<vmem>>, vector<128x128xf32>
      tpu.vector_store %arg13[%c0_90, %c0_91], %244 {strides = array<i32>} : memref<128x128xf32, #tpu.memory_space<vmem>>, vector<128x128xf32>,
    } else {
    }
    %c0_i32_2 = arith.constant 0 : i32
    %8 = arith.cmpi eq, %arg1, %c0_i32_2 : i32
    %9 = arith.extui %8 : i1 to i32
    %c0_i32_3 = arith.constant 0 : i32
    %10 = arith.cmpi ne, %9, %c0_i32_3 : i32
    scf.if %10 {
      %c0 = arith.constant 0 : index
      %c0_4 = arith.constant 0 : index
      %11 = vector.load %arg13[%c0, %c0_4] : memref<128x128xf32, #tpu.memory_space<vmem>>, vector<128x128xf32>
      %c0_5 = arith.constant 0 : index
      %c0_6 = arith.constant 0 : index
      %12 = vector.load %arg8[%c0_5, %c0_6] : memref<1x128xf32, #tpu.memory_space<vmem>>, vector<1x128xf32>
      %13 = vector.broadcast %12 : vector<1x128xf32> to vector<128x128xf32>
      %14 = arith.mulf %11, %13 : vector<128x128xf32>
      %c0_7 = arith.constant 0 : index
      %c0_8 = arith.constant 0 : index
      %15 = vector.load %arg10[%c0_7, %c0_8] : memref<128x16xbf16, #tpu.memory_space<vmem>>, vector<128x16xbf16>
      %c0_9 = arith.constant 0 : index
      %c0_10 = arith.constant 0 : index
      %16 = vector.load %arg7[%c0_9, %c0_10] : memref<16x128xbf16, #tpu.memory_space<vmem>>, vector<16x128xbf16>
      %cst = arith.constant dense<0.000000e+00> : vector<128x128xf32>
      %17 = tpu.matmul %15, %16, %cst {dimension_numbers = #tpu.dot_dimension_numbers<[1], [0], [0], [1], [0, 0, 1, 1], [], []>} : vector<128x16xbf16>, vector<16x128xbf16>, vector<128x128xf32> -> vector<128x128xf32>
      %18 = arith.addf %14, %17 : vector<128x128xf32>
      %c0_11 = arith.constant 0 : index
      %c0_12 = arith.constant 0 : index
      %19 = vector.load %arg11[%c0_11, %c0_12] : memref<128x1xf32, #tpu.memory_space<vmem>>, vector<128x1xf32>
      %20 = vector.broadcast %19 : vector<128x1xf32> to vector<128x128xf32>
      %21 = arith.addf %18, %20 : vector<128x128xf32>
      %cst_13 = arith.constant 0.000000e+00 : f32
      %22 = vector.broadcast %cst_13 : f32 to vector<128x128xf32>
      %23 = arith.maximumf %21, %22 : vector<128x128xf32>
      %24 = arith.truncf %23 : vector<128x128xf32> to vector<128x128xbf16>
      %c0_14 = arith.constant 0 : index
      %c0_15 = arith.constant 0 : index
      %25 = vector.load %arg12[%c0_14, %c0_15] : memref<128x128xbf16, #tpu.memory_space<vmem>>, vector<128x128xbf16>
      tpu.vector_store %arg12[%c0_14, %c0_15], %24 {strides = array<i32>} : memref<128x128xbf16, #tpu.memory_space<vmem>>, vector<128x128xbf16>,
    } else {
    }
    return
  }
  func.func @transform_0(%arg0: i32, %arg1: i32, %arg2: memref<2xi32, #tpu.memory_space<smem>>, %arg3: memref<2xi32, #tpu.memory_space<smem>>) -> (i32, i32) {
    %0 = arith.index_cast %arg0 : i32 to index
    %1 = memref.load %arg2[%0] : memref<2xi32, #tpu.memory_space<smem>>
    %2 = arith.index_cast %arg0 : i32 to index
    %3 = memref.load %arg3[%2] : memref<2xi32, #tpu.memory_space<smem>>
    %c1_i32 = arith.constant 1 : i32
    %4 = arith.subi %3, %c1_i32 : i32
    %c0_i32 = arith.constant 0 : i32
    %5 = arith.maxsi %4, %c0_i32 : i32
    %6 = arith.minsi %arg1, %5 : i32
    %7 = arith.addi %1, %6 : i32
    %c0_i32_0 = arith.constant 0 : i32
    %c0_i32_1 = arith.constant 0 : i32
    return %7, %c0_i32_0 : i32, i32
  }
  func.func @transform_1(%arg0: i32, %arg1: i32, %arg2: memref<2xi32, #tpu.memory_space<smem>>, %arg3: memref<2xi32, #tpu.memory_space<smem>>) -> (i32, i32) {
    %0 = arith.index_cast %arg0 : i32 to index
    %1 = memref.load %arg2[%0] : memref<2xi32, #tpu.memory_space<smem>>
    %2 = arith.index_cast %arg0 : i32 to index
    %3 = memref.load %arg3[%2] : memref<2xi32, #tpu.memory_space<smem>>
    %c1_i32 = arith.constant 1 : i32
    %4 = arith.subi %3, %c1_i32 : i32
    %c0_i32 = arith.constant 0 : i32
    %5 = arith.maxsi %4, %c0_i32 : i32
    %6 = arith.minsi %arg1, %5 : i32
    %7 = arith.addi %1, %6 : i32
    %c0_i32_0 = arith.constant 0 : i32
    %c0_i32_1 = arith.constant 0 : i32
    return %c0_i32_0, %7 : i32, i32
  }
  func.func @transform_2(%arg0: i32, %arg1: i32, %arg2: memref<2xi32, #tpu.memory_space<smem>>, %arg3: memref<2xi32, #tpu.memory_space<smem>>) -> (i32, i32) {
    %0 = arith.index_cast %arg0 : i32 to index
    %1 = memref.load %arg2[%0] : memref<2xi32, #tpu.memory_space<smem>>
    %2 = arith.index_cast %arg0 : i32 to index
    %3 = memref.load %arg3[%2] : memref<2xi32, #tpu.memory_space<smem>>
    %c1_i32 = arith.constant 1 : i32
    %4 = arith.subi %3, %c1_i32 : i32
    %c0_i32 = arith.constant 0 : i32
    %5 = arith.maxsi %4, %c0_i32 : i32
    %6 = arith.minsi %arg1, %5 : i32
    %7 = arith.addi %1, %6 : i32
    %c0_i32_0 = arith.constant 0 : i32
    %c0_i32_1 = arith.constant 0 : i32
    return %c0_i32_0, %7 : i32, i32
  }
  func.func @transform_3(%arg0: i32, %arg1: i32, %arg2: memref<2xi32, #tpu.memory_space<smem>>, %arg3: memref<2xi32, #tpu.memory_space<smem>>) -> (i32, i32) {
    %c0_i32 = arith.constant 0 : i32
    %c0_i32_0 = arith.constant 0 : i32
    return %c0_i32, %arg0 : i32, i32
  }
  func.func @transform_4(%arg0: i32, %arg1: i32, %arg2: memref<2xi32, #tpu.memory_space<smem>>, %arg3: memref<2xi32, #tpu.memory_space<smem>>) -> (i32, i32) {
    %c0_i32 = arith.constant 0 : i32
    %c0_i32_0 = arith.constant 0 : i32
    return %c0_i32, %arg0 : i32, i32
  }
  func.func @transform_5(%arg0: i32, %arg1: i32, %arg2: memref<2xi32, #tpu.memory_space<smem>>, %arg3: memref<2xi32, #tpu.memory_space<smem>>) -> (i32, i32) {
    %c0_i32 = arith.constant 0 : i32
    %c0_i32_0 = arith.constant 0 : i32
    %c0_i32_1 = arith.constant 0 : i32
    return %c0_i32, %c0_i32_0 : i32, i32
  }
  func.func @transform_6(%arg0: i32, %arg1: i32, %arg2: memref<2xi32, #tpu.memory_space<smem>>, %arg3: memref<2xi32, #tpu.memory_space<smem>>) -> (i32, i32) {
    %c0_i32 = arith.constant 0 : i32
    %c0_i32_0 = arith.constant 0 : i32
    %c0_i32_1 = arith.constant 0 : i32
    return %c0_i32, %c0_i32_0 : i32, i32
  }
  func.func @transform_7(%arg0: i32, %arg1: i32, %arg2: memref<2xi32, #tpu.memory_space<smem>>, %arg3: memref<2xi32, #tpu.memory_space<smem>>) -> (i32, i32) {
    %c0_i32 = arith.constant 0 : i32
    %c0_i32_0 = arith.constant 0 : i32
    %c0_i32_1 = arith.constant 0 : i32
    return %c0_i32, %c0_i32_0 : i32, i32
  }
  func.func @transform_8(%arg0: i32, %arg1: i32, %arg2: memref<2xi32, #tpu.memory_space<smem>>, %arg3: memref<2xi32, #tpu.memory_space<smem>>) -> (i32, i32) {
    %c0_i32 = arith.constant 0 : i32
    %c0_i32_0 = arith.constant 0 : i32
    return %c0_i32, %arg0 : i32, i32
  }
}

</mosaic_0001>

<llo_original>
// kernel: tpu_custom_call.1
$region0: #{tpu_custom_call.1}
  #allocation0 [shape = 'u32[]', space=smem, size = 0x4, offset = 0x4, fixed_abs, tag = 'smem constant byte address 0x4 - core index']
  #allocation1 [shape = 'u32[144,128]{1,0:T(1,128)}', space=vmem, size = 0x12000, scoped, tag = 'internal scratch']
  #allocation2 [shape = 'f32[128,128]{1,0:T(8,128)}', space=vmem, size = 0x10000, scoped, tag = 'scratch operand']
  #allocation3 [shape = 'bf16[576,128]{1,0:T(16,128)(2,1)}', space=vmem, size = 0x24000, scoped, tag = 'scratch operand']
  #allocation4 [shape = 's32[1]{0}', space=sflag, size = 0x4, scoped, tag = 'scoped memory for tpu_custom_call.1']
  #allocation5 [shape = 'u8[512]{0}', space=smem, size = 0x200, scoped, tag = 'prefetched SMEM operand 0']
  #allocation6 [shape = 'u8[512]{0}', space=smem, size = 0x200, scoped, tag = 'prefetched SMEM operand 1']
  %s0 = inlined_call_operand.vmem [shape: s32[2], index: 0, kind: input, shape index: {}]
  %s1 = inlined_call_operand.vmem [shape: s32[2], index: 1, kind: input, shape index: {}]
  %s2 = inlined_call_operand.vmem [shape: s32[128,1], index: 2, kind: input, shape index: {}]
  %s3 = inlined_call_operand.vmem [shape: bf16[16,128], index: 3, kind: input, shape index: {}]
  %s4 = inlined_call_operand.vmem [shape: f32[36,128], index: 4, kind: input, shape index: {}]
  %s5 = inlined_call_operand.vmem [shape: bf16[16,256], index: 5, kind: input, shape index: {}]
  %s6 = inlined_call_operand.vmem [shape: f32[1,256], index: 6, kind: input, shape index: {}]
  %s7 = inlined_call_operand.vmem [shape: bf16[128,576], index: 7, kind: input, shape index: {}]
  %s8 = inlined_call_operand.vmem [shape: bf16[128,16], index: 8, kind: input, shape index: {}]
  %s9 = inlined_call_operand.vmem [shape: f32[128,1], index: 9, kind: input, shape index: {}]
  %s10 = inlined_call_operand.hbm [shape: bf16[128,256], index: 10, kind: output, shape index: {}]
  %s11 = sld [smem:[#allocation0]]
  $region118: #{tpu_custom_call.1} parent=0
    _
  %s13 = ssub.s32 1, %s11
  %s14 = scalar_select 0, %s13, %s11
  %s15 = sshll.u32 %s0, 4
  %s16 = int_to_ptr.vmem [resolvable:$true] %s15
  %18 = dma.vmem_to_smem %s16, 16, [#allocation5], [#allocation4]
  %s19 = sshll.u32 %s1, 4
  %s20 = int_to_ptr.vmem [resolvable:$true] %s19
  %22 = dma.vmem_to_smem %s20, 16, [#allocation6], [#allocation4]
  %23 = dma.done [#allocation4], 32
  %24 = sfence
  $region1: #{tpu_custom_call.1} parent=0
    #allocation7 [shape = 'u8[8192]{0}', space=vmem, size = 0x2000, scoped, tag = 'input window, operand 5']
    #allocation8 [shape = 'u8[65536]{0}', space=vmem, size = 0x10000, scoped, tag = 'output window, operand 0']
    #allocation9 [shape = 's32[2]{0}', space=sflag, size = 0x8, scoped, tag = 'scoped memory for tpu_custom_call.1']
    %25 = vsyncpa [#allocation9], 0
    %s26 = scalar_lea.sflag [#allocation9], 1
    %27 = vsyncpa %s26, 0
    loop: start=0, step=1, limit=4
    $region2: #{tpu_custom_call.1} parent=1 // loop_pre_header
      _
    $region3: #{tpu_custom_call.1} parent=1 // loop_header
      %s29 = sphi 0, %s33
      %p30 = scmp.ge.s32.totalorder %s29, 4
      %s36 = sphi 0, %s48
      %s37 = sphi 0, %s44
      %s38 = sphi 0, %s36
      %s39 = sphi 0, %s37
      %s40 = sphi 0, %s38
      %s41 = sphi 0, %s39
      %s67 = sphi 0, %s69
      %s70 = sphi 0, %s67
      %s71 = sphi 0, %s70
      %s87 = sphi 0, %s71
      %s109 = sphi 0, %s111
      %s112 = sphi 0, %s109
      %s113 = sphi 0, %s112
      %s129 = sphi 0, %s113
      %s151 = sphi 0, %s153
      %s154 = sphi 0, %s151
      %s155 = sphi 0, %s154
      %s171 = sphi 0, %s155
      %s177 = sphi 0, %s179
      %s180 = sphi 0, %s177
      %s181 = sphi 0, %s180
      %s197 = sphi 0, %s181
      %s203 = sphi 0, %s205
      %s206 = sphi 0, %s203
      %s207 = sphi 0, %s206
      %s223 = sphi 0, %s207
      %s227 = sphi 0, %s227
      %s229 = sphi 0, %s227
      %s230 = sphi 0, %s229
      %s244 = sphi 0, %s230
      %s248 = sphi 0, %s248
      %s250 = sphi 0, %s248
      %s251 = sphi 0, %s250
      %s265 = sphi 0, %s251
      %s269 = sphi 0, %s269
      %s271 = sphi 0, %s269
      %s272 = sphi 0, %s271
      %s286 = sphi 0, %s272
      %s292 = sphi 0, %s294
      %s295 = sphi 0, %s292
      %s296 = sphi 0, %s295
      %s312 = sphi 0, %s296
    $region4: #{tpu_custom_call.1} parent=1 // loop_header_branch
      %32 = sbr.rel (%p30) target = $region8
    $region5: #{tpu_custom_call.1} parent=1 // loop_body
      %s34 = ssub.s32 %s29, 1
      %s35 = ssub.s32 %s29, 2
      %s42 = sadd.s32 1, %s37
      %p43 = scmp.ge.s32.totalorder %s42, 1
      %s44 = scalar_select %p43, 0, %s42
      %s45 = sadd.s32 1, %s36
      %s46 = scalar_select %p43, %s45, %s36
      %p47 = scmp.ge.s32.totalorder %s46, 2
      %s48 = scalar_select %p47, 0, %s46
      %s49 = sld [smem:[#allocation5 + %s36]]
      %s50 = sld [smem:[#allocation6 + %s36]]
      %s51 = ssub.s32 %s50, 1
      %p52 = scmp.gt.s32.totalorder %s51, 0
      %s53 = scalar_select %p52, %s51, 0
      %p54 = scmp.lt.s32.totalorder %s37, %s53
      %s55 = scalar_select %p54, %s37, %s53
      %s56 = sadd.s32 %s49, %s55
      %s57 = sld [smem:[#allocation5 + %s48]]
      %s58 = sld [smem:[#allocation6 + %s48]]
      %s59 = ssub.s32 %s58, 1
      %p60 = scmp.gt.s32.totalorder %s59, 0
      %s61 = scalar_select %p60, %s59, 0
      %p62 = scmp.lt.s32.totalorder %s44, %s61
      %s63 = scalar_select %p62, %s44, %s61
      %s64 = sadd.s32 %s57, %s63
      %s65 = ssub.s32 %s56, %s64
      %p66 = scmp.eq.s32.totalorder %s65, 0
      %s68 = sadd.s32 %s67, 1
      %s69 = scalar_select %p66, %s67, %s68
      %p72 = pneg %p66
      %p73 = scmp.eq.s32.totalorder %s29, 1
      %p74 = por %p72, %p73
      %p75 = scmp.ne.s32.totalorder %s67, %s70
      %p76 = scmp.eq.s32.totalorder %s29, 0
      %p77 = por %p75, %p76
      %p78 = scmp.ne.s32.totalorder %s67, %s70
      %p79 = scmp.eq.s32.totalorder %s34, 1
      %p80 = por %p78, %p79
      %p81 = scmp.ne.s32.totalorder %s70, %s71
      %p82 = scmp.eq.s32.totalorder %s34, 0
      %p83 = por %p81, %p82
      %p84 = scmp.ne.s32.totalorder %s70, %s71
      %p85 = scmp.eq.s32.totalorder %s35, 1
      %p86 = por %p84, %p85
      %p88 = scmp.ne.s32.totalorder %s71, %s87
      %p89 = scmp.eq.s32.totalorder %s35, 0
      %p90 = por %p88, %p89
      %s91 = sld [smem:[#allocation5 + %s36]]
      %s92 = sld [smem:[#allocation6 + %s36]]
      %s93 = ssub.s32 %s92, 1
      %p94 = scmp.gt.s32.totalorder %s93, 0
      %s95 = scalar_select %p94, %s93, 0
      %p96 = scmp.lt.s32.totalorder %s37, %s95
      %s97 = scalar_select %p96, %s37, %s95
      %s98 = sadd.s32 %s91, %s97
      %s99 = sld [smem:[#allocation5 + %s48]]
      %s100 = sld [smem:[#allocation6 + %s48]]
      %s101 = ssub.s32 %s100, 1
      %p102 = scmp.gt.s32.totalorder %s101, 0
      %s103 = scalar_select %p102, %s101, 0
      %p104 = scmp.lt.s32.totalorder %s44, %s103
      %s105 = scalar_select %p104, %s44, %s103
      %s106 = sadd.s32 %s99, %s105
      %s107 = ssub.s32 %s98, %s106
      %p108 = scmp.eq.s32.totalorder %s107, 0
      %s110 = sadd.s32 %s109, 1
      %s111 = scalar_select %p108, %s109, %s110
      %p114 = pneg %p108
      %p115 = scmp.eq.s32.totalorder %s29, 1
      %p116 = por %p114, %p115
      %p117 = scmp.ne.s32.totalorder %s109, %s112
      %p118 = scmp.eq.s32.totalorder %s29, 0
      %p119 = por %p117, %p118
      %p120 = scmp.ne.s32.totalorder %s109, %s112
      %p121 = scmp.eq.s32.totalorder %s34, 1
      %p122 = por %p120, %p121
      %p123 = scmp.ne.s32.totalorder %s112, %s113
      %p124 = scmp.eq.s32.totalorder %s34, 0
      %p125 = por %p123, %p124
      %p126 = scmp.ne.s32.totalorder %s112, %s113
      %p127 = scmp.eq.s32.totalorder %s35, 1
      %p128 = por %p126, %p127
      %p130 = scmp.ne.s32.totalorder %s113, %s129
      %p131 = scmp.eq.s32.totalorder %s35, 0
      %p132 = por %p130, %p131
      %s133 = sld [smem:[#allocation5 + %s36]]
      %s134 = sld [smem:[#allocation6 + %s36]]
      %s135 = ssub.s32 %s134, 1
      %p136 = scmp.gt.s32.totalorder %s135, 0
      %s137 = scalar_select %p136, %s135, 0
      %p138 = scmp.lt.s32.totalorder %s37, %s137
      %s139 = scalar_select %p138, %s37, %s137
      %s140 = sadd.s32 %s133, %s139
      %s141 = sld [smem:[#allocation5 + %s48]]
      %s142 = sld [smem:[#allocation6 + %s48]]
      %s143 = ssub.s32 %s142, 1
      %p144 = scmp.gt.s32.totalorder %s143, 0
      %s145 = scalar_select %p144, %s143, 0
      %p146 = scmp.lt.s32.totalorder %s44, %s145
      %s147 = scalar_select %p146, %s44, %s145
      %s148 = sadd.s32 %s141, %s147
      %s149 = ssub.s32 %s140, %s148
      %p150 = scmp.eq.s32.totalorder %s149, 0
      %s152 = sadd.s32 %s151, 1
      %s153 = scalar_select %p150, %s151, %s152
      %p156 = pneg %p150
      %p157 = scmp.eq.s32.totalorder %s29, 1
      %p158 = por %p156, %p157
      %p159 = scmp.ne.s32.totalorder %s151, %s154
      %p160 = scmp.eq.s32.totalorder %s29, 0
      %p161 = por %p159, %p160
      %p162 = scmp.ne.s32.totalorder %s151, %s154
      %p163 = scmp.eq.s32.totalorder %s34, 1
      %p164 = por %p162, %p163
      %p165 = scmp.ne.s32.totalorder %s154, %s155
      %p166 = scmp.eq.s32.totalorder %s34, 0
      %p167 = por %p165, %p166
      %p168 = scmp.ne.s32.totalorder %s154, %s155
      %p169 = scmp.eq.s32.totalorder %s35, 1
      %p170 = por %p168, %p169
      %p172 = scmp.ne.s32.totalorder %s155, %s171
      %p173 = scmp.eq.s32.totalorder %s35, 0
      %p174 = por %p172, %p173
      %s175 = ssub.s32 %s36, %s48
      %p176 = scmp.eq.s32.totalorder %s175, 0
      %s178 = sadd.s32 %s177, 1
      %s179 = scalar_select %p176, %s177, %s178
      %p182 = pneg %p176
      %p183 = scmp.eq.s32.totalorder %s29, 1
      %p184 = por %p182, %p183
      %p185 = scmp.ne.s32.totalorder %s177, %s180
      %p186 = scmp.eq.s32.totalorder %s29, 0
      %p187 = por %p185, %p186
      %p188 = scmp.ne.s32.totalorder %s177, %s180
      %p189 = scmp.eq.s32.totalorder %s34, 1
      %p190 = por %p188, %p189
      %p191 = scmp.ne.s32.totalorder %s180, %s181
      %p192 = scmp.eq.s32.totalorder %s34, 0
      %p193 = por %p191, %p192
      %p194 = scmp.ne.s32.totalorder %s180, %s181
      %p195 = scmp.eq.s32.totalorder %s35, 1
      %p196 = por %p194, %p195
      %p198 = scmp.ne.s32.totalorder %s181, %s197
      %p199 = scmp.eq.s32.totalorder %s35, 0
      %p200 = por %p198, %p199
      %s201 = ssub.s32 %s36, %s48
      %p202 = scmp.eq.s32.totalorder %s201, 0
      %s204 = sadd.s32 %s203, 1
      %s205 = scalar_select %p202, %s203, %s204
      %p208 = pneg %p202
      %p209 = scmp.eq.s32.totalorder %s29, 1
      %p210 = por %p208, %p209
      %p211 = scmp.ne.s32.totalorder %s203, %s206
      %p212 = scmp.eq.s32.totalorder %s29, 0
      %p213 = por %p211, %p212
      %p214 = scmp.ne.s32.totalorder %s203, %s206
      %p215 = scmp.eq.s32.totalorder %s34, 1
      %p216 = por %p214, %p215
      %p217 = scmp.ne.s32.totalorder %s206, %s207
      %p218 = scmp.eq.s32.totalorder %s34, 0
      %p219 = por %p217, %p218
      %p220 = scmp.ne.s32.totalorder %s206, %s207
      %p221 = scmp.eq.s32.totalorder %s35, 1
      %p222 = por %p220, %p221
      %p224 = scmp.ne.s32.totalorder %s207, %s223
      %p225 = scmp.eq.s32.totalorder %s35, 0
      %p226 = por %p224, %p225
      %s228 = sadd.s32 %s227, 1
      %p231 = scmp.eq.s32.totalorder %s29, 1
      %p232 = scmp.ne.s32.totalorder %s227, %s229
      %p233 = scmp.eq.s32.totalorder %s29, 0
      %p234 = por %p232, %p233
      %p235 = scmp.ne.s32.totalorder %s227, %s229
      %p236 = scmp.eq.s32.totalorder %s34, 1
      %p237 = por %p235, %p236
      %p238 = scmp.ne.s32.totalorder %s229, %s230
      %p239 = scmp.eq.s32.totalorder %s34, 0
      %p240 = por %p238, %p239
      %p241 = scmp.ne.s32.totalorder %s229, %s230
      %p242 = scmp.eq.s32.totalorder %s35, 1
      %p243 = por %p241, %p242
      %p245 = scmp.ne.s32.totalorder %s230, %s244
      %p246 = scmp.eq.s32.totalorder %s35, 0
      %p247 = por %p245, %p246
      %s249 = sadd.s32 %s248, 1
      %p252 = scmp.eq.s32.totalorder %s29, 1
      %p253 = scmp.ne.s32.totalorder %s248, %s250
      %p254 = scmp.eq.s32.totalorder %s29, 0
      %p255 = por %p253, %p254
      %p256 = scmp.ne.s32.totalorder %s248, %s250
      %p257 = scmp.eq.s32.totalorder %s34, 1
      %p258 = por %p256, %p257
      %p259 = scmp.ne.s32.totalorder %s250, %s251
      %p260 = scmp.eq.s32.totalorder %s34, 0
      %p261 = por %p259, %p260
      %p262 = scmp.ne.s32.totalorder %s250, %s251
      %p263 = scmp.eq.s32.totalorder %s35, 1
      %p264 = por %p262, %p263
      %p266 = scmp.ne.s32.totalorder %s251, %s265
      %p267 = scmp.eq.s32.totalorder %s35, 0
      %p268 = por %p266, %p267
      %s270 = sadd.s32 %s269, 1
      %p273 = scmp.eq.s32.totalorder %s29, 1
      %p274 = scmp.ne.s32.totalorder %s269, %s271
      %p275 = scmp.eq.s32.totalorder %s29, 0
      %p276 = por %p274, %p275
      %p277 = scmp.ne.s32.totalorder %s269, %s271
      %p278 = scmp.eq.s32.totalorder %s34, 1
      %p279 = por %p277, %p278
      %p280 = scmp.ne.s32.totalorder %s271, %s272
      %p281 = scmp.eq.s32.totalorder %s34, 0
      %p282 = por %p280, %p281
      %p283 = scmp.ne.s32.totalorder %s271, %s272
      %p284 = scmp.eq.s32.totalorder %s35, 1
      %p285 = por %p283, %p284
      %p287 = scmp.ne.s32.totalorder %s272, %s286
      %p288 = scmp.eq.s32.totalorder %s35, 0
      %p289 = por %p287, %p288
      %s290 = ssub.s32 %s36, %s48
      %p291 = scmp.eq.s32.totalorder %s290, 0
      %s293 = sadd.s32 %s292, 1
      %s294 = scalar_select %p291, %s292, %s293
      %p297 = pneg %p291
      %p298 = scmp.eq.s32.totalorder %s29, 1
      %p299 = por %p297, %p298
      %p300 = scmp.ne.s32.totalorder %s292, %s295
      %p301 = scmp.eq.s32.totalorder %s29, 0
      %p302 = por %p300, %p301
      %p303 = scmp.ne.s32.totalorder %s292, %s295
      %p304 = scmp.eq.s32.totalorder %s34, 1
      %p305 = por %p303, %p304
      %p306 = scmp.ne.s32.totalorder %s295, %s296
      %p307 = scmp.eq.s32.totalorder %s34, 0
      %p308 = por %p306, %p307
      %p309 = scmp.ne.s32.totalorder %s295, %s296
      %p310 = scmp.eq.s32.totalorder %s35, 1
      %p311 = por %p309, %p310
      %p313 = scmp.ne.s32.totalorder %s296, %s312
      %p314 = scmp.eq.s32.totalorder %s35, 0
      %p315 = por %p313, %p314
      %p316 = scmp.le.s32.totalorder 1, %s29
      %p317 = scmp.lt.s32.totalorder %s29, 3
      %p318 = pnand %p316, %p317
      %p319 = pneg %p318
      // Predicated region
      $region9: #{tpu_custom_call.1} parent=5 // pred_check
        _
      $region10: #{tpu_custom_call.1} parent=5 // pred_check_branch
        %321 = sbr.rel (%p318) target = $region12
      $region11: #{tpu_custom_call.1} parent=5 // pred_region
        %s322 = ssub.s32 %s29, 1
        // Predicated region
        $region13: #{tpu_custom_call.1} parent=11 // pred_check
          %p323 = pneg %p240
        $region14: #{tpu_custom_call.1} parent=11 // pred_check_branch
          %325 = sbr.rel (%p323) target = $region16
        $region15: #{tpu_custom_call.1} parent=11 // pred_region
          _
        $region16: #{tpu_custom_call.1} parent=11 // pred_fallthru
          _
        // Predicated region
        $region17: #{tpu_custom_call.1} parent=11 // pred_check
          %p326 = pneg %p261
        $region18: #{tpu_custom_call.1} parent=11 // pred_check_branch
          %328 = sbr.rel (%p326) target = $region20
        $region19: #{tpu_custom_call.1} parent=11 // pred_region
          _
        $region20: #{tpu_custom_call.1} parent=11 // pred_fallthru
          _
        // Predicated region
        $region21: #{tpu_custom_call.1} parent=11 // pred_check
          %p329 = pneg %p282
        $region22: #{tpu_custom_call.1} parent=11 // pred_check_branch
          %331 = sbr.rel (%p329) target = $region24
        $region23: #{tpu_custom_call.1} parent=11 // pred_region
          _
        $region24: #{tpu_custom_call.1} parent=11 // pred_fallthru
          _
      $region12: #{tpu_custom_call.1} parent=5 // pred_fallthru
        _
      %p332 = scmp.lt.s32.totalorder %s29, 2
      // Predicated region
      $region25: #{tpu_custom_call.1} parent=5 // pred_check
        %p333 = pneg %p332
      $region26: #{tpu_custom_call.1} parent=5 // pred_check_branch
        %335 = sbr.rel (%p333) target = $region28
      $region27: #{tpu_custom_call.1} parent=5 // pred_region
        // Predicated region
        $region29: #{tpu_custom_call.1} parent=27 // pred_check
          %p336 = pneg %p77
        $region30: #{tpu_custom_call.1} parent=27 // pred_check_branch
          %338 = sbr.rel (%p336) target = $region32
        $region31: #{tpu_custom_call.1} parent=27 // pred_region
          %s339 = sld [smem:[#allocation5 + %s36]]
          %s340 = sld [smem:[#allocation6 + %s36]]
          %s341 = ssub.s32 %s340, 1
          %p342 = scmp.gt.s32.totalorder %s341, 0
          %s343 = scalar_select %p342, %s341, 0
          %p344 = scmp.lt.s32.totalorder %s37, %s343
          %s345 = scalar_select %p344, %s37, %s343
          %s346 = sadd.s32 %s339, %s345
          %s347 = smul.u32 16, %s346
          %p348 = scmp.lt.s32.totalorder %s347, 15
          %s349 = scalar_select %p348, %s347, 15
          %s350 = smul.addr %s349, 8
          %s351 = scalar_lea.vmem %s2, %s350
          %s352 = sld [smem:[#allocation5 + %s36]]
          %s353 = sld [smem:[#allocation6 + %s36]]
          %s354 = ssub.s32 %s353, 1
          %p355 = scmp.gt.s32.totalorder %s354, 0
          %s356 = scalar_select %p355, %s354, 0
          %p357 = scmp.lt.s32.totalorder %s37, %s356
          %s358 = scalar_select %p357, %s37, %s356
          %s359 = sadd.s32 %s352, %s358
          %s360 = smul.u32 16, %s359
        $region32: #{tpu_custom_call.1} parent=27 // pred_fallthru
          _
        // Predicated region
        $region33: #{tpu_custom_call.1} parent=27 // pred_check
          %p361 = pneg %p119
        $region34: #{tpu_custom_call.1} parent=27 // pred_check_branch
          %363 = sbr.rel (%p361) target = $region36
        $region35: #{tpu_custom_call.1} parent=27 // pred_region
          %s364 = sld [smem:[#allocation5 + %s36]]
          %s365 = sld [smem:[#allocation6 + %s36]]
          %s366 = ssub.s32 %s365, 1
          %p367 = scmp.gt.s32.totalorder %s366, 0
          %s368 = scalar_select %p367, %s366, 0
          %p369 = scmp.lt.s32.totalorder %s37, %s368
          %s370 = scalar_select %p369, %s37, %s368
          %s371 = sadd.s32 %s364, %s370
          %p372 = scmp.lt.s32.totalorder %s371, 0
          %s373 = scalar_select %p372, %s371, 0
          %s374 = smul.addr %s373, 4
          %s375 = scalar_lea.vmem %s3, %s374
          %s376 = sld [smem:[#allocation5 + %s36]]
          %s377 = sld [smem:[#allocation6 + %s36]]
          %s378 = ssub.s32 %s377, 1
          %p379 = scmp.gt.s32.totalorder %s378, 0
          %s380 = scalar_select %p379, %s378, 0
          %p381 = scmp.lt.s32.totalorder %s37, %s380
          %s382 = scalar_select %p381, %s37, %s380
          %s383 = sadd.s32 %s376, %s382
        $region36: #{tpu_custom_call.1} parent=27 // pred_fallthru
          _
        // Predicated region
        $region37: #{tpu_custom_call.1} parent=27 // pred_check
          %p384 = pneg %p161
        $region38: #{tpu_custom_call.1} parent=27 // pred_check_branch
          %386 = sbr.rel (%p384) target = $region40
        $region39: #{tpu_custom_call.1} parent=27 // pred_region
          %s387 = sld [smem:[#allocation5 + %s36]]
          %s388 = sld [smem:[#allocation6 + %s36]]
          %s389 = ssub.s32 %s388, 1
          %p390 = scmp.gt.s32.totalorder %s389, 0
          %s391 = scalar_select %p390, %s389, 0
          %p392 = scmp.lt.s32.totalorder %s37, %s391
          %s393 = scalar_select %p392, %s37, %s391
          %s394 = sadd.s32 %s387, %s393
          %p395 = scmp.lt.s32.totalorder %s394, 0
          %s396 = scalar_select %p395, %s394, 0
          %s397 = smul.addr %s396, 8
          %s398 = scalar_lea.vmem %s4, %s397
          %s399 = sld [smem:[#allocation5 + %s36]]
          %s400 = sld [smem:[#allocation6 + %s36]]
          %s401 = ssub.s32 %s400, 1
          %p402 = scmp.gt.s32.totalorder %s401, 0
          %s403 = scalar_select %p402, %s401, 0
          %p404 = scmp.lt.s32.totalorder %s37, %s403
          %s405 = scalar_select %p404, %s37, %s403
          %s406 = sadd.s32 %s399, %s405
        $region40: #{tpu_custom_call.1} parent=27 // pred_fallthru
          _
        // Predicated region
        $region41: #{tpu_custom_call.1} parent=27 // pred_check
          %p407 = pneg %p187
        $region42: #{tpu_custom_call.1} parent=27 // pred_check_branch
          %409 = sbr.rel (%p407) target = $region44
        $region43: #{tpu_custom_call.1} parent=27 // pred_region
          %s410 = sand.u32 %s177, 1
          %s411 = sand.u32 %s177, 1
          %s412 = smul.addr %s411, 8
          %s413 = scalar_lea.vmem [#allocation7], %s412
          %s414 = smul.addr %s36, 4
          %s415 = scalar_lea.vmem %s5, %s414
          // Predicated region
          $region45: #{tpu_custom_call.1} parent=43 // pred_check
            _
          $region46: #{tpu_custom_call.1} parent=43 // pred_check_branch
            %417 = sbr.rel (0) target = $region48
          $region47: #{tpu_custom_call.1} parent=43 // pred_region
            // Predicated region
            $region49: #{tpu_custom_call.1} parent=47 // pred_check
              _
            $region50: #{tpu_custom_call.1} parent=47 // pred_check_branch
              %419 = sbr.rel target = $region52
            $region51: #{tpu_custom_call.1} parent=47 // pred_region
              // Predicated region
              $region64: #{tpu_custom_call.1} parent=51 // pred_check
                _
              $region65: #{tpu_custom_call.1} parent=51 // pred_check_branch
                %436 = sbr.rel (0) target = $region67
              $region66: #{tpu_custom_call.1} parent=51 // pred_region
                loop: start=0, step=1, limit=1
                $region68: #{tpu_custom_call.1} parent=66 // loop_pre_header
                  _
                $region69: #{tpu_custom_call.1} parent=66 // loop_header
                  %s438 = sphi 0, %s442
                  %p439 = scmp.ge.s32.totalorder %s438, 1
                  %s443 = sphi %s415, %s415
                  %s444 = sphi %s413, %s413
                $region70: #{tpu_custom_call.1} parent=66 // loop_header_branch
                  %441 = sbr.rel (%p439) target = $region74
                $region71: #{tpu_custom_call.1} parent=66 // loop_body
                  _
                $region72: #{tpu_custom_call.1} parent=66 // loop_footer
                  %s442 = sadd.s32 1, %s438
                $region73: #{tpu_custom_call.1} parent=66 // loop_footer_branch
                  %437 = sbr.rel target = $region69
                $region74: #{tpu_custom_call.1} parent=66 // loop_exit
                  _
                loop: start=0, step=1, limit=1
                $region75: #{tpu_custom_call.1} parent=66 // loop_pre_header
                  _
                $region76: #{tpu_custom_call.1} parent=66 // loop_header
                  %s447 = sphi 0, %s451
                  %p448 = scmp.ge.s32.totalorder %s447, 1
                  %s452 = sphi %s415, %s415
                  %s453 = sphi %s413, %s413
                $region77: #{tpu_custom_call.1} parent=66 // loop_header_branch
                  %450 = sbr.rel (%p448) target = $region81
                $region78: #{tpu_custom_call.1} parent=66 // loop_body
                  %v454 = vld [vmem:[%s452] sm:$0xf]
                  %455 = vst [vmem:[%s453] sm:$0xf] %v454
                  %v456 = vld [vmem:[%s452 + $0x8] sm:$0xf]
                  %457 = vst [vmem:[%s453 + $0x4] sm:$0xf] %v456
                $region79: #{tpu_custom_call.1} parent=66 // loop_footer
                  %s451 = sadd.s32 1, %s447
                $region80: #{tpu_custom_call.1} parent=66 // loop_footer_branch
                  %446 = sbr.rel target = $region76
                $region81: #{tpu_custom_call.1} parent=66 // loop_exit
                  _
              $region67: #{tpu_custom_call.1} parent=51 // pred_fallthru
                _
            $region52: #{tpu_custom_call.1} parent=47 // pred_fallthru
              _
            // Predicated region
            $region53: #{tpu_custom_call.1} parent=47 // pred_check
              _
            $region54: #{tpu_custom_call.1} parent=47 // pred_check_branch
              %421 = sbr.rel (0) target = $region56
            $region55: #{tpu_custom_call.1} parent=47 // pred_region
              loop: start=0, step=1, limit=1
              $region57: #{tpu_custom_call.1} parent=55 // loop_pre_header
                _
              $region58: #{tpu_custom_call.1} parent=55 // loop_header
                %s424 = sphi 0, %s428
                %p425 = scmp.ge.s32.totalorder %s424, 1
                %s429 = sphi %s415, %s415
                %s430 = sphi %s413, %s413
              $region59: #{tpu_custom_call.1} parent=55 // loop_header_branch
                %427 = sbr.rel (%p425) target = $region63
              $region60: #{tpu_custom_call.1} parent=55 // loop_body
                %v431 = vld [vmem:[%s429] sm:$0xf]
                %432 = vst [vmem:[%s430] sm:$0xf] %v431
                %v433 = vld [vmem:[%s429 + $0x8] sm:$0xf]
                %434 = vst [vmem:[%s430 + $0x4] sm:$0xf] %v433
              $region61: #{tpu_custom_call.1} parent=55 // loop_footer
                %s428 = sadd.s32 1, %s424
              $region62: #{tpu_custom_call.1} parent=55 // loop_footer_branch
                %423 = sbr.rel target = $region58
              $region63: #{tpu_custom_call.1} parent=55 // loop_exit
                _
            $region56: #{tpu_custom_call.1} parent=47 // pred_fallthru
              _
          $region48: #{tpu_custom_call.1} parent=43 // pred_fallthru
            _
          %458 = vnop
        $region44: #{tpu_custom_call.1} parent=27 // pred_fallthru
          _
        // Predicated region
        $region82: #{tpu_custom_call.1} parent=27 // pred_check
          %p459 = pneg %p213
        $region83: #{tpu_custom_call.1} parent=27 // pred_check_branch
          %461 = sbr.rel (%p459) target = $region85
        $region84: #{tpu_custom_call.1} parent=27 // pred_region
          %p462 = scmp.lt.s32.totalorder %s36, 1
          %s463 = scalar_select %p462, %s36, 1
          %s464 = scalar_lea.vmem %s6, %s463
        $region85: #{tpu_custom_call.1} parent=27 // pred_fallthru
          _
      $region28: #{tpu_custom_call.1} parent=5 // pred_fallthru
        _
      %p465 = scmp.le.s32.totalorder 1, %s29
      %p466 = scmp.lt.s32.totalorder %s29, 3
      %p467 = pnand %p465, %p466
      %p468 = pneg %p467
      // Predicated region
      $region86: #{tpu_custom_call.1} parent=5 // pred_check
        _
      $region87: #{tpu_custom_call.1} parent=5 // pred_check_branch
        %470 = sbr.rel (%p467) target = $region89
      $region88: #{tpu_custom_call.1} parent=5 // pred_region
        %s471 = ssub.s32 %s29, 1
        %s472 = sand.u32 %s180, 1
        %s473 = sand.u32 %s180, 1
        %s474 = smul.addr %s473, 8
        %s475 = scalar_lea.vmem [#allocation7], %s474
        // Predicated region
        $region90: #{tpu_custom_call.1} parent=88 // pred_check
          %p476 = pneg %p193
        $region91: #{tpu_custom_call.1} parent=88 // pred_check_branch
          %478 = sbr.rel (%p476) target = $region93
        $region92: #{tpu_custom_call.1} parent=88 // pred_region
          _
        $region93: #{tpu_custom_call.1} parent=88 // pred_fallthru
          _
        %s479 = sld [smem:[#allocation5 + %s38]]
        %s480 = sld [smem:[#allocation6 + %s38]]
        %s481 = ssub.s32 %s480, 1
        %p482 = scmp.gt.s32.totalorder %s481, 0
        %s483 = scalar_select %p482, %s481, 0
        %p484 = scmp.lt.s32.totalorder %s39, %s483
        %s485 = scalar_select %p484, %s39, %s483
        %s486 = sadd.s32 %s479, %s485
        %s487 = smul.u32 16, %s486
        %p488 = scmp.lt.s32.totalorder %s487, 15
        %s489 = scalar_select %p488, %s487, 15
        %s490 = smul.addr %s489, 8
        %s491 = scalar_lea.vmem %s2, %s490
        %p492 = pneg %p83
        %p493 = pneg %p80
        %s494 = sld [smem:[#allocation5 + %s38]]
        %s495 = sld [smem:[#allocation6 + %s38]]
        %s496 = ssub.s32 %s495, 1
        %p497 = scmp.gt.s32.totalorder %s496, 0
        %s498 = scalar_select %p497, %s496, 0
        %p499 = scmp.lt.s32.totalorder %s39, %s498
        %s500 = scalar_select %p499, %s39, %s498
        %s501 = sadd.s32 %s494, %s500
        %p502 = scmp.lt.s32.totalorder %s501, 0
        %s503 = scalar_select %p502, %s501, 0
        %s504 = smul.addr %s503, 4
        %s505 = scalar_lea.vmem %s3, %s504
        %p506 = pneg %p125
        %p507 = pneg %p122
        %s508 = sld [smem:[#allocation5 + %s38]]
        %s509 = sld [smem:[#allocation6 + %s38]]
        %s510 = ssub.s32 %s509, 1
        %p511 = scmp.gt.s32.totalorder %s510, 0
        %s512 = scalar_select %p511, %s510, 0
        %p513 = scmp.lt.s32.totalorder %s39, %s512
        %s514 = scalar_select %p513, %s39, %s512
        %s515 = sadd.s32 %s508, %s514
        %p516 = scmp.lt.s32.totalorder %s515, 0
        %s517 = scalar_select %p516, %s515, 0
        %s518 = smul.addr %s517, 8
        %s519 = scalar_lea.vmem %s4, %s518
        %p520 = pneg %p167
        %p521 = pneg %p164
        %s522 = sand.u32 %s180, 1
        %s523 = sand.u32 %s180, 1
        %s524 = smul.addr %s523, 8
        %s525 = scalar_lea.vmem [#allocation7], %s524
        %p526 = pneg %p193
        %p527 = pneg %p190
        %p528 = scmp.lt.s32.totalorder %s38, 1
        %s529 = scalar_select %p528, %s38, 1
        %s530 = scalar_lea.vmem %s6, %s529
        %p531 = pneg %p219
        %p532 = pneg %p216
        %p533 = pneg %p240
        %p534 = pneg %p237
        %p535 = pneg %p261
        %p536 = pneg %p258
        %p537 = pneg %p282
        %p538 = pneg %p279
        %p539 = pneg %p308
        %p540 = pneg %p305
        %s541 = sand.u32 %s295, 1
        %s542 = scalar_lea.sflag [#allocation9], %s541
        %s543 = sand.u32 %s295, 1
        %s544 = smul.addr %s543, 64
        %s545 = scalar_lea.vmem [#allocation8], %s544
        %s546 = sld [smem:[#allocation5 + %s38]]
        %s547 = sld [smem:[#allocation6 + %s38]]
        %s548 = ssub.s32 %s547, 1
        %p549 = scmp.gt.s32.totalorder %s548, 0
        %s550 = scalar_select %p549, %s548, 0
        %p551 = scmp.lt.s32.totalorder %s39, %s550
        %s552 = scalar_select %p551, %s39, %s550
        %s553 = sadd.s32 %s546, %s552
        %s554 = smul.u32 16, %s553
        %p555 = scmp.lt.s32.totalorder %s554, 15
        %s556 = scalar_select %p555, %s554, 15
        %s557 = smul.addr %s556, 8
        %s558 = scalar_lea.vmem %s2, %s557
        %s559 = sld [smem:[#allocation5 + %s38]]
        %s560 = sld [smem:[#allocation6 + %s38]]
        %s561 = ssub.s32 %s560, 1
        %p562 = scmp.gt.s32.totalorder %s561, 0
        %s563 = scalar_select %p562, %s561, 0
        %p564 = scmp.lt.s32.totalorder %s39, %s563
        %s565 = scalar_select %p564, %s39, %s563
        %s566 = sadd.s32 %s559, %s565
        %s567 = smul.u32 16, %s566
        %s568 = sld [smem:[#allocation5 + %s38]]
        %s569 = sld [smem:[#allocation6 + %s38]]
        %s570 = ssub.s32 %s569, 1
        %p571 = scmp.gt.s32.totalorder %s570, 0
        %s572 = scalar_select %p571, %s570, 0
        %p573 = scmp.lt.s32.totalorder %s39, %s572
        %s574 = scalar_select %p573, %s39, %s572
        %s575 = sadd.s32 %s568, %s574
        %p576 = scmp.lt.s32.totalorder %s575, 0
        %s577 = scalar_select %p576, %s575, 0
        %s578 = smul.addr %s577, 4
        %s579 = scalar_lea.vmem %s3, %s578
        %s580 = sld [smem:[#allocation5 + %s38]]
        %s581 = sld [smem:[#allocation6 + %s38]]
        %s582 = ssub.s32 %s581, 1
        %p583 = scmp.gt.s32.totalorder %s582, 0
        %s584 = scalar_select %p583, %s582, 0
        %p585 = scmp.lt.s32.totalorder %s39, %s584
        %s586 = scalar_select %p585, %s39, %s584
        %s587 = sadd.s32 %s580, %s586
        %s588 = sld [smem:[#allocation5 + %s38]]
        %s589 = sld [smem:[#allocation6 + %s38]]
        %s590 = ssub.s32 %s589, 1
        %p591 = scmp.gt.s32.totalorder %s590, 0
        %s592 = scalar_select %p591, %s590, 0
        %p593 = scmp.lt.s32.totalorder %s39, %s592
        %s594 = scalar_select %p593, %s39, %s592
        %s595 = sadd.s32 %s588, %s594
        %p596 = scmp.lt.s32.totalorder %s595, 0
        %s597 = scalar_select %p596, %s595, 0
        %s598 = smul.addr %s597, 8
        %s599 = scalar_lea.vmem %s4, %s598
        %s600 = sld [smem:[#allocation5 + %s38]]
        %s601 = sld [smem:[#allocation6 + %s38]]
        %s602 = ssub.s32 %s601, 1
        %p603 = scmp.gt.s32.totalorder %s602, 0
        %s604 = scalar_select %p603, %s602, 0
        %p605 = scmp.lt.s32.totalorder %s39, %s604
        %s606 = scalar_select %p605, %s39, %s604
        %s607 = sadd.s32 %s600, %s606
        %p608 = scmp.lt.s32.totalorder %s38, 1
        %s609 = scalar_select %p608, %s38, 1
        %s610 = scalar_lea.vmem %s6, %s609
        %p612 = scmp.eq.s32.totalorder %s39, 0
        // Predicated region
        $region94: #{tpu_custom_call.1} parent=88 // pred_check
          %p613 = pneg %p612
        $region95: #{tpu_custom_call.1} parent=88 // pred_check_branch
          %615 = sbr.rel (%p613) target = $region97
        $region96: #{tpu_custom_call.1} parent=88 // pred_region
          %616 = vst [vmem:[#allocation2] sm:$0xff] 0.0
          %617 = vst [vmem:[#allocation2 + $0x8] sm:$0xff] 0.0
          %618 = vst [vmem:[#allocation2 + $0x10] sm:$0xff] 0.0
          %619 = vst [vmem:[#allocation2 + $0x18] sm:$0xff] 0.0
          %620 = vst [vmem:[#allocation2 + $0x20] sm:$0xff] 0.0
          %621 = vst [vmem:[#allocation2 + $0x28] sm:$0xff] 0.0
          %622 = vst [vmem:[#allocation2 + $0x30] sm:$0xff] 0.0
          %623 = vst [vmem:[#allocation2 + $0x38] sm:$0xff] 0.0
          %624 = vst [vmem:[#allocation2 + $0x40] sm:$0xff] 0.0
          %625 = vst [vmem:[#allocation2 + $0x48] sm:$0xff] 0.0
          %626 = vst [vmem:[#allocation2 + $0x50] sm:$0xff] 0.0
          %627 = vst [vmem:[#allocation2 + $0x58] sm:$0xff] 0.0
          %628 = vst [vmem:[#allocation2 + $0x60] sm:$0xff] 0.0
          %629 = vst [vmem:[#allocation2 + $0x68] sm:$0xff] 0.0
          %630 = vst [vmem:[#allocation2 + $0x70] sm:$0xff] 0.0
          %631 = vst [vmem:[#allocation2 + $0x78] sm:$0xff] 0.0
        $region97: #{tpu_custom_call.1} parent=88 // pred_fallthru
          _
        %s632 = sld [smem:[#allocation6 + %s38]]
        %p633 = scmp.lt.s32.totalorder %s39, %s632
        // Predicated region
        $region98: #{tpu_custom_call.1} parent=88 // pred_check
          %p634 = pneg %p633
        $region99: #{tpu_custom_call.1} parent=88 // pred_check_branch
          %636 = sbr.rel (%p634) target = $region101
        $region100: #{tpu_custom_call.1} parent=88 // pred_region
          %v637 = vld [vmem:[%s579] sm:$0xf]
          %v638 = vld [vmem:[%s579 + $0x4] sm:$0xf]
          %v639 = vld [vmem:[%s599] sm:$0x1]
          %v640 = vunpack.c.l.bf16 %v637
          %v641 = vunpack.c.l.bf16 %v638
          %v642 = vlaneseq
          %v643 = vshrl.u32 %v642, 7
          %v644 = vsub.s32 0, %v643
          %v645 = vrot.slane %v639, %v644
          %v646 = vmul.f32 %v645, %v640
          %v647 = vmul.f32 %v645, %v641
          %v648 = vpack.c.bf16 %v647, %v646
          %649 = vst [vmem:[#allocation3] sm:$0xff] %v648
          %v650 = vld [vmem:[%s599 + $0x1] sm:$0x1]
          %v651 = vlaneseq
          %v652 = vshrl.u32 %v651, 7
          %v653 = vsub.s32 0, %v652
          %v654 = vrot.slane %v650, %v653
          %v655 = vmul.f32 %v654, %v640
          %v656 = vmul.f32 %v654, %v641
          %v657 = vpack.c.bf16 %v656, %v655
          %658 = vst [vmem:[#allocation3 + $0x8] sm:$0xff] %v657
          %v659 = vld [vmem:[%s599 + $0x2] sm:$0x1]
          %v660 = vlaneseq
          %v661 = vshrl.u32 %v660, 7
          %v662 = vsub.s32 0, %v661
          %v663 = vrot.slane %v659, %v662
          %v664 = vmul.f32 %v663, %v640
          %v665 = vmul.f32 %v663, %v641
          %v666 = vpack.c.bf16 %v665, %v664
          %667 = vst [vmem:[#allocation3 + $0x10] sm:$0xff] %v666
          %v668 = vld [vmem:[%s599 + $0x3] sm:$0x1]
          %v669 = vlaneseq
          %v670 = vshrl.u32 %v669, 7
          %v671 = vsub.s32 0, %v670
          %v672 = vrot.slane %v668, %v671
          %v673 = vmul.f32 %v672, %v640
          %v674 = vmul.f32 %v672, %v641
          %v675 = vpack.c.bf16 %v674, %v673
          %676 = vst [vmem:[#allocation3 + $0x18] sm:$0xff] %v675
          %v677 = vld [vmem:[%s599 + $0x4] sm:$0x1]
          %v678 = vlaneseq
          %v679 = vshrl.u32 %v678, 7
          %v680 = vsub.s32 0, %v679
          %v681 = vrot.slane %v677, %v680
          %v682 = vmul.f32 %v681, %v640
          %v683 = vmul.f32 %v681, %v641
          %v684 = vpack.c.bf16 %v683, %v682
          %685 = vst [vmem:[#allocation3 + $0x20] sm:$0xff] %v684
          %v686 = vld [vmem:[%s599 + $0x5] sm:$0x1]
          %v687 = vlaneseq
          %v688 = vshrl.u32 %v687, 7
          %v689 = vsub.s32 0, %v688
          %v690 = vrot.slane %v686, %v689
          %v691 = vmul.f32 %v690, %v640
          %v692 = vmul.f32 %v690, %v641
          %v693 = vpack.c.bf16 %v692, %v691
          %694 = vst [vmem:[#allocation3 + $0x28] sm:$0xff] %v693
          %v695 = vld [vmem:[%s599 + $0x6] sm:$0x1]
          %v696 = vlaneseq
          %v697 = vshrl.u32 %v696, 7
          %v698 = vsub.s32 0, %v697
          %v699 = vrot.slane %v695, %v698
          %v700 = vmul.f32 %v699, %v640
          %v701 = vmul.f32 %v699, %v641
          %v702 = vpack.c.bf16 %v701, %v700
          %703 = vst [vmem:[#allocation3 + $0x30] sm:$0xff] %v702
          %v704 = vld [vmem:[%s599 + $0x7] sm:$0x1]
          %v705 = vlaneseq
          %v706 = vshrl.u32 %v705, 7
          %v707 = vsub.s32 0, %v706
          %v708 = vrot.slane %v704, %v707
          %v709 = vmul.f32 %v708, %v640
          %v710 = vmul.f32 %v708, %v641
          %v711 = vpack.c.bf16 %v710, %v709
          %712 = vst [vmem:[#allocation3 + $0x38] sm:$0xff] %v711
          %v713 = vld [vmem:[%s599 + $0x8] sm:$0x1]
          %v714 = vlaneseq
          %v715 = vshrl.u32 %v714, 7
          %v716 = vsub.s32 0, %v715
          %v717 = vrot.slane %v713, %v716
          %v718 = vmul.f32 %v717, %v640
          %v719 = vmul.f32 %v717, %v641
          %v720 = vpack.c.bf16 %v719, %v718
          %721 = vst [vmem:[#allocation3 + $0x40] sm:$0xff] %v720
          %v722 = vld [vmem:[%s599 + $0x9] sm:$0x1]
          %v723 = vlaneseq
          %v724 = vshrl.u32 %v723, 7
          %v725 = vsub.s32 0, %v724
          %v726 = vrot.slane %v722, %v725
          %v727 = vmul.f32 %v726, %v640
          %v728 = vmul.f32 %v726, %v641
          %v729 = vpack.c.bf16 %v728, %v727
          %730 = vst [vmem:[#allocation3 + $0x48] sm:$0xff] %v729
          %v731 = vld [vmem:[%s599 + $0xa] sm:$0x1]
          %v732 = vlaneseq
          %v733 = vshrl.u32 %v732, 7
          %v734 = vsub.s32 0, %v733
          %v735 = vrot.slane %v731, %v734
          %v736 = vmul.f32 %v735, %v640
          %v737 = vmul.f32 %v735, %v641
          %v738 = vpack.c.bf16 %v737, %v736
          %739 = vst [vmem:[#allocation3 + $0x50] sm:$0xff] %v738
          %v740 = vld [vmem:[%s599 + $0xb] sm:$0x1]
          %v741 = vlaneseq
          %v742 = vshrl.u32 %v741, 7
          %v743 = vsub.s32 0, %v742
          %v744 = vrot.slane %v740, %v743
          %v745 = vmul.f32 %v744, %v640
          %v746 = vmul.f32 %v744, %v641
          %v747 = vpack.c.bf16 %v746, %v745
          %748 = vst [vmem:[#allocation3 + $0x58] sm:$0xff] %v747
          %v749 = vld [vmem:[%s599 + $0xc] sm:$0x1]
          %v750 = vlaneseq
          %v751 = vshrl.u32 %v750, 7
          %v752 = vsub.s32 0, %v751
          %v753 = vrot.slane %v749, %v752
          %v754 = vmul.f32 %v753, %v640
          %v755 = vmul.f32 %v753, %v641
          %v756 = vpack.c.bf16 %v755, %v754
          %757 = vst [vmem:[#allocation3 + $0x60] sm:$0xff] %v756
          %v758 = vld [vmem:[%s599 + $0xd] sm:$0x1]
          %v759 = vlaneseq
          %v760 = vshrl.u32 %v759, 7
          %v761 = vsub.s32 0, %v760
          %v762 = vrot.slane %v758, %v761
          %v763 = vmul.f32 %v762, %v640
          %v764 = vmul.f32 %v762, %v641
          %v765 = vpack.c.bf16 %v764, %v763
          %766 = vst [vmem:[#allocation3 + $0x68] sm:$0xff] %v765
          %v767 = vld [vmem:[%s599 + $0xe] sm:$0x1]
          %v768 = vlaneseq
          %v769 = vshrl.u32 %v768, 7
          %v770 = vsub.s32 0, %v769
          %v771 = vrot.slane %v767, %v770
          %v772 = vmul.f32 %v771, %v640
          %v773 = vmul.f32 %v771, %v641
          %v774 = vpack.c.bf16 %v773, %v772
          %775 = vst [vmem:[#allocation3 + $0x70] sm:$0xff] %v774
          %v776 = vld [vmem:[%s599 + $0xf] sm:$0x1]
          %v777 = vlaneseq
          %v778 = vshrl.u32 %v777, 7
          %v779 = vsub.s32 0, %v778
          %v780 = vrot.slane %v776, %v779
          %v781 = vmul.f32 %v780, %v640
          %v782 = vmul.f32 %v780, %v641
          %v783 = vpack.c.bf16 %v782, %v781
          %784 = vst [vmem:[#allocation3 + $0x78] sm:$0xff] %v783
          %v785 = vld [vmem:[%s599 + $0x10] sm:$0x1]
          %v786 = vlaneseq
          %v787 = vshrl.u32 %v786, 7
          %v788 = vsub.s32 0, %v787
          %v789 = vrot.slane %v785, %v788
          %v790 = vmul.f32 %v789, %v640
          %v791 = vmul.f32 %v789, %v641
          %v792 = vpack.c.bf16 %v791, %v790
          %793 = vst [vmem:[#allocation3 + $0x80] sm:$0xff] %v792
          %v794 = vld [vmem:[%s599 + $0x11] sm:$0x1]
          %v795 = vlaneseq
          %v796 = vshrl.u32 %v795, 7
          %v797 = vsub.s32 0, %v796
          %v798 = vrot.slane %v794, %v797
          %v799 = vmul.f32 %v798, %v640
          %v800 = vmul.f32 %v798, %v641
          %v801 = vpack.c.bf16 %v800, %v799
          %802 = vst [vmem:[#allocation3 + $0x88] sm:$0xff] %v801
          %v803 = vld [vmem:[%s599 + $0x12] sm:$0x1]
          %v804 = vlaneseq
          %v805 = vshrl.u32 %v804, 7
          %v806 = vsub.s32 0, %v805
          %v807 = vrot.slane %v803, %v806
          %v808 = vmul.f32 %v807, %v640
          %v809 = vmul.f32 %v807, %v641
          %v810 = vpack.c.bf16 %v809, %v808
          %811 = vst [vmem:[#allocation3 + $0x90] sm:$0xff] %v810
          %v812 = vld [vmem:[%s599 + $0x13] sm:$0x1]
          %v813 = vlaneseq
          %v814 = vshrl.u32 %v813, 7
          %v815 = vsub.s32 0, %v814
          %v816 = vrot.slane %v812, %v815
          %v817 = vmul.f32 %v816, %v640
          %v818 = vmul.f32 %v816, %v641
          %v819 = vpack.c.bf16 %v818, %v817
          %820 = vst [vmem:[#allocation3 + $0x98] sm:$0xff] %v819
          %v821 = vld [vmem:[%s599 + $0x14] sm:$0x1]
          %v822 = vlaneseq
          %v823 = vshrl.u32 %v822, 7
          %v824 = vsub.s32 0, %v823
          %v825 = vrot.slane %v821, %v824
          %v826 = vmul.f32 %v825, %v640
          %v827 = vmul.f32 %v825, %v641
          %v828 = vpack.c.bf16 %v827, %v826
          %829 = vst [vmem:[#allocation3 + $0xa0] sm:$0xff] %v828
          %v830 = vld [vmem:[%s599 + $0x15] sm:$0x1]
          %v831 = vlaneseq
          %v832 = vshrl.u32 %v831, 7
          %v833 = vsub.s32 0, %v832
          %v834 = vrot.slane %v830, %v833
          %v835 = vmul.f32 %v834, %v640
          %v836 = vmul.f32 %v834, %v641
          %v837 = vpack.c.bf16 %v836, %v835
          %838 = vst [vmem:[#allocation3 + $0xa8] sm:$0xff] %v837
          %v839 = vld [vmem:[%s599 + $0x16] sm:$0x1]
          %v840 = vlaneseq
          %v841 = vshrl.u32 %v840, 7
          %v842 = vsub.s32 0, %v841
          %v843 = vrot.slane %v839, %v842
          %v844 = vmul.f32 %v843, %v640
          %v845 = vmul.f32 %v843, %v641
          %v846 = vpack.c.bf16 %v845, %v844
          %847 = vst [vmem:[#allocation3 + $0xb0] sm:$0xff] %v846
          %v848 = vld [vmem:[%s599 + $0x17] sm:$0x1]
          %v849 = vlaneseq
          %v850 = vshrl.u32 %v849, 7
          %v851 = vsub.s32 0, %v850
          %v852 = vrot.slane %v848, %v851
          %v853 = vmul.f32 %v852, %v640
          %v854 = vmul.f32 %v852, %v641
          %v855 = vpack.c.bf16 %v854, %v853
          %856 = vst [vmem:[#allocation3 + $0xb8] sm:$0xff] %v855
          %v857 = vld [vmem:[%s599 + $0x18] sm:$0x1]
          %v858 = vlaneseq
          %v859 = vshrl.u32 %v858, 7
          %v860 = vsub.s32 0, %v859
          %v861 = vrot.slane %v857, %v860
          %v862 = vmul.f32 %v861, %v640
          %v863 = vmul.f32 %v861, %v641
          %v864 = vpack.c.bf16 %v863, %v862
          %865 = vst [vmem:[#allocation3 + $0xc0] sm:$0xff] %v864
          %v866 = vld [vmem:[%s599 + $0x19] sm:$0x1]
          %v867 = vlaneseq
          %v868 = vshrl.u32 %v867, 7
          %v869 = vsub.s32 0, %v868
          %v870 = vrot.slane %v866, %v869
          %v871 = vmul.f32 %v870, %v640
          %v872 = vmul.f32 %v870, %v641
          %v873 = vpack.c.bf16 %v872, %v871
          %874 = vst [vmem:[#allocation3 + $0xc8] sm:$0xff] %v873
          %v875 = vld [vmem:[%s599 + $0x1a] sm:$0x1]
          %v876 = vlaneseq
          %v877 = vshrl.u32 %v876, 7
          %v878 = vsub.s32 0, %v877
          %v879 = vrot.slane %v875, %v878
          %v880 = vmul.f32 %v879, %v640
          %v881 = vmul.f32 %v879, %v641
          %v882 = vpack.c.bf16 %v881, %v880
          %883 = vst [vmem:[#allocation3 + $0xd0] sm:$0xff] %v882
          %v884 = vld [vmem:[%s599 + $0x1b] sm:$0x1]
          %v885 = vlaneseq
          %v886 = vshrl.u32 %v885, 7
          %v887 = vsub.s32 0, %v886
          %v888 = vrot.slane %v884, %v887
          %v889 = vmul.f32 %v888, %v640
          %v890 = vmul.f32 %v888, %v641
          %v891 = vpack.c.bf16 %v890, %v889
          %892 = vst [vmem:[#allocation3 + $0xd8] sm:$0xff] %v891
          %v893 = vld [vmem:[%s599 + $0x1c] sm:$0x1]
          %v894 = vlaneseq
          %v895 = vshrl.u32 %v894, 7
          %v896 = vsub.s32 0, %v895
          %v897 = vrot.slane %v893, %v896
          %v898 = vmul.f32 %v897, %v640
          %v899 = vmul.f32 %v897, %v641
          %v900 = vpack.c.bf16 %v899, %v898
          %901 = vst [vmem:[#allocation3 + $0xe0] sm:$0xff] %v900
          %v902 = vld [vmem:[%s599 + $0x1d] sm:$0x1]
          %v903 = vlaneseq
          %v904 = vshrl.u32 %v903, 7
          %v905 = vsub.s32 0, %v904
          %v906 = vrot.slane %v902, %v905
          %v907 = vmul.f32 %v906, %v640
          %v908 = vmul.f32 %v906, %v641
          %v909 = vpack.c.bf16 %v908, %v907
          %910 = vst [vmem:[#allocation3 + $0xe8] sm:$0xff] %v909
          %v911 = vld [vmem:[%s599 + $0x1e] sm:$0x1]
          %v912 = vlaneseq
          %v913 = vshrl.u32 %v912, 7
          %v914 = vsub.s32 0, %v913
          %v915 = vrot.slane %v911, %v914
          %v916 = vmul.f32 %v915, %v640
          %v917 = vmul.f32 %v915, %v641
          %v918 = vpack.c.bf16 %v917, %v916
          %919 = vst [vmem:[#allocation3 + $0xf0] sm:$0xff] %v918
          %v920 = vld [vmem:[%s599 + $0x1f] sm:$0x1]
          %v921 = vlaneseq
          %v922 = vshrl.u32 %v921, 7
          %v923 = vsub.s32 0, %v922
          %v924 = vrot.slane %v920, %v923
          %v925 = vmul.f32 %v924, %v640
          %v926 = vmul.f32 %v924, %v641
          %v927 = vpack.c.bf16 %v926, %v925
          %928 = vst [vmem:[#allocation3 + $0xf8] sm:$0xff] %v927
          %v929 = vld [vmem:[%s599 + $0x20] sm:$0x1]
          %v930 = vlaneseq
          %v931 = vshrl.u32 %v930, 7
          %v932 = vsub.s32 0, %v931
          %v933 = vrot.slane %v929, %v932
          %v934 = vmul.f32 %v933, %v640
          %v935 = vmul.f32 %v933, %v641
          %v936 = vpack.c.bf16 %v935, %v934
          %937 = vst [vmem:[#allocation3 + $0x100] sm:$0xff] %v936
          %v938 = vld [vmem:[%s599 + $0x21] sm:$0x1]
          %v939 = vlaneseq
          %v940 = vshrl.u32 %v939, 7
          %v941 = vsub.s32 0, %v940
          %v942 = vrot.slane %v938, %v941
          %v943 = vmul.f32 %v942, %v640
          %v944 = vmul.f32 %v942, %v641
          %v945 = vpack.c.bf16 %v944, %v943
          %946 = vst [vmem:[#allocation3 + $0x108] sm:$0xff] %v945
          %v947 = vld [vmem:[%s599 + $0x22] sm:$0x1]
          %v948 = vlaneseq
          %v949 = vshrl.u32 %v948, 7
          %v950 = vsub.s32 0, %v949
          %v951 = vrot.slane %v947, %v950
          %v952 = vmul.f32 %v951, %v640
          %v953 = vmul.f32 %v951, %v641
          %v954 = vpack.c.bf16 %v953, %v952
          %955 = vst [vmem:[#allocation3 + $0x110] sm:$0xff] %v954
          %v956 = vld [vmem:[%s599 + $0x23] sm:$0x1]
          %v957 = vlaneseq
          %v958 = vshrl.u32 %v957, 7
          %v959 = vsub.s32 0, %v958
          %v960 = vrot.slane %v956, %v959
          %v961 = vmul.f32 %v960, %v640
          %v962 = vmul.f32 %v960, %v641
          %v963 = vpack.c.bf16 %v962, %v961
          %964 = vst [vmem:[#allocation3 + $0x118] sm:$0xff] %v963
          %v965 = vld [vmem:[%s7] sm:$0xff]
          %v966 = vld [vmem:[%s7 + $0x8] sm:$0xff]
          %v967 = vld [vmem:[%s7 + $0x10] sm:$0xf]
          %v968 = vld [vmem:[%s7 + $0x14] sm:$0xff]
          %v969 = vld [vmem:[%s7 + $0x1c] sm:$0xff]
          %v970 = vld [vmem:[%s7 + $0x24] sm:$0xf]
          %v971 = vld [vmem:[%s7 + $0x28] sm:$0xff]
          %v972 = vld [vmem:[%s7 + $0x30] sm:$0xff]
          %v973 = vld [vmem:[%s7 + $0x38] sm:$0xf]
          %v974 = vld [vmem:[%s7 + $0x3c] sm:$0xff]
          %v975 = vld [vmem:[%s7 + $0x44] sm:$0xff]
          %v976 = vld [vmem:[%s7 + $0x4c] sm:$0xf]
          %v977 = vld [vmem:[%s7 + $0x50] sm:$0xff]
          %v978 = vld [vmem:[%s7 + $0x58] sm:$0xff]
          %v979 = vld [vmem:[%s7 + $0x60] sm:$0xf]
          %v980 = vld [vmem:[%s7 + $0x64] sm:$0xff]
          %v981 = vld [vmem:[%s7 + $0x6c] sm:$0xff]
          %v982 = vld [vmem:[%s7 + $0x74] sm:$0xf]
          %v983 = vld [vmem:[%s7 + $0x78] sm:$0xff]
          %v984 = vld [vmem:[%s7 + $0x80] sm:$0xff]
          %v985 = vld [vmem:[%s7 + $0x88] sm:$0xf]
          %v986 = vld [vmem:[%s7 + $0x8c] sm:$0xff]
          %v987 = vld [vmem:[%s7 + $0x94] sm:$0xff]
          %v988 = vld [vmem:[%s7 + $0x9c] sm:$0xf]
          %v989 = vld [vmem:[%s7 + $0xa0] sm:$0xff]
          %v990 = vld [vmem:[%s7 + $0xa8] sm:$0xff]
          %v991 = vld [vmem:[%s7 + $0xb0] sm:$0xf]
          %v992 = vld [vmem:[%s7 + $0xb4] sm:$0xff]
          %v993 = vld [vmem:[%s7 + $0xbc] sm:$0xff]
          %v994 = vld [vmem:[%s7 + $0xc4] sm:$0xf]
          %v995 = vld [vmem:[%s7 + $0xc8] sm:$0xff]
          %v996 = vld [vmem:[%s7 + $0xd0] sm:$0xff]
          %v997 = vld [vmem:[%s7 + $0xd8] sm:$0xf]
          %v998 = vld [vmem:[%s7 + $0xdc] sm:$0xff]
          %v999 = vld [vmem:[%s7 + $0xe4] sm:$0xff]
          %v1000 = vld [vmem:[%s7 + $0xec] sm:$0xf]
          %v1001 = vld [vmem:[%s7 + $0xf0] sm:$0xff]
          %v1002 = vld [vmem:[%s7 + $0xf8] sm:$0xff]
          %v1003 = vld [vmem:[%s7 + $0x100] sm:$0xf]
          %v1004 = vld [vmem:[%s7 + $0x104] sm:$0xff]
          %v1005 = vld [vmem:[%s7 + $0x10c] sm:$0xff]
          %v1006 = vld [vmem:[%s7 + $0x114] sm:$0xf]
          %v1007 = vld [vmem:[%s7 + $0x118] sm:$0xff]
          %v1008 = vld [vmem:[%s7 + $0x120] sm:$0xff]
          %v1009 = vld [vmem:[%s7 + $0x128] sm:$0xf]
          %v1010 = vld [vmem:[%s7 + $0x12c] sm:$0xff]
          %v1011 = vld [vmem:[%s7 + $0x134] sm:$0xff]
          %v1012 = vld [vmem:[%s7 + $0x13c] sm:$0xf]
          %v1013 = vld [vmem:[#allocation3] sm:$0xff]
          %v1014 = vld [vmem:[#allocation3 + $0x8] sm:$0xff]
          %v1015 = vld [vmem:[#allocation3 + $0x10] sm:$0xff]
          %v1016 = vld [vmem:[#allocation3 + $0x18] sm:$0xff]
          %v1017 = vld [vmem:[#allocation3 + $0x20] sm:$0xff]
          %v1018 = vld [vmem:[#allocation3 + $0x28] sm:$0xff]
          %v1019 = vld [vmem:[#allocation3 + $0x30] sm:$0xff]
          %v1020 = vld [vmem:[#allocation3 + $0x38] sm:$0xff]
          %v1021 = vld [vmem:[#allocation3 + $0x40] sm:$0xff]
          %v1022 = vld [vmem:[#allocation3 + $0x48] sm:$0xff]
          %v1023 = vld [vmem:[#allocation3 + $0x50] sm:$0xff]
          %v1024 = vld [vmem:[#allocation3 + $0x58] sm:$0xff]
          %v1025 = vld [vmem:[#allocation3 + $0x60] sm:$0xff]
          %v1026 = vld [vmem:[#allocation3 + $0x68] sm:$0xff]
          %v1027 = vld [vmem:[#allocation3 + $0x70] sm:$0xff]
          %v1028 = vld [vmem:[#allocation3 + $0x78] sm:$0xff]
          %v1029 = vld [vmem:[#allocation3 + $0x80] sm:$0xff]
          %v1030 = vld [vmem:[#allocation3 + $0x88] sm:$0xff]
          %v1031 = vld [vmem:[#allocation3 + $0x90] sm:$0xff]
          %v1032 = vld [vmem:[#allocation3 + $0x98] sm:$0xff]
          %v1033 = vld [vmem:[#allocation3 + $0xa0] sm:$0xff]
          %v1034 = vld [vmem:[#allocation3 + $0xa8] sm:$0xff]
          %v1035 = vld [vmem:[#allocation3 + $0xb0] sm:$0xff]
          %v1036 = vld [vmem:[#allocation3 + $0xb8] sm:$0xff]
          %v1037 = vld [vmem:[#allocation3 + $0xc0] sm:$0xff]
          %v1038 = vld [vmem:[#allocation3 + $0xc8] sm:$0xff]
          %v1039 = vld [vmem:[#allocation3 + $0xd0] sm:$0xff]
          %v1040 = vld [vmem:[#allocation3 + $0xd8] sm:$0xff]
          %v1041 = vld [vmem:[#allocation3 + $0xe0] sm:$0xff]
          %v1042 = vld [vmem:[#allocation3 + $0xe8] sm:$0xff]
          %v1043 = vld [vmem:[#allocation3 + $0xf0] sm:$0xff]
          %v1044 = vld [vmem:[#allocation3 + $0xf8] sm:$0xff]
          %v1045 = vld [vmem:[#allocation3 + $0x100] sm:$0xff]
          %v1046 = vld [vmem:[#allocation3 + $0x108] sm:$0xff]
          %v1047 = vld [vmem:[#allocation3 + $0x110] sm:$0xff]
          %v1048 = vld [vmem:[#allocation3 + $0x118] sm:$0xff]
          %v1097 = vunpack.c.l.b16 %v965
          %v1098 = vunpack.c.h.b16 %v965
          %v1099 = vunpack.c.l.b16 %v966
          %v1100 = vunpack.c.h.b16 %v966
          %v1101 = vunpack.c.l.b16 %v967
          %v1102 = vunpack.c.l.b16 %v968
          %v1103 = vunpack.c.h.b16 %v968
          %v1104 = vunpack.c.l.b16 %v969
          %v1105 = vunpack.c.h.b16 %v969
          %v1106 = vunpack.c.l.b16 %v970
          %v1107 = vunpack.c.l.b16 %v971
          %v1108 = vunpack.c.h.b16 %v971
          %v1109 = vunpack.c.l.b16 %v972
          %v1110 = vunpack.c.h.b16 %v972
          %v1111 = vunpack.c.l.b16 %v973
          %v1112 = vunpack.c.l.b16 %v974
          %v1113 = vunpack.c.h.b16 %v974
          %v1114 = vunpack.c.l.b16 %v975
          %v1115 = vunpack.c.h.b16 %v975
          %v1116 = vunpack.c.l.b16 %v976
          %v1117 = vunpack.c.l.b16 %v977
          %v1118 = vunpack.c.h.b16 %v977
          %v1119 = vunpack.c.l.b16 %v978
          %v1120 = vunpack.c.h.b16 %v978
          %v1121 = vunpack.c.l.b16 %v979
          %v1122 = vunpack.c.l.b16 %v980
          %v1123 = vunpack.c.h.b16 %v980
          %v1124 = vunpack.c.l.b16 %v981
          %v1125 = vunpack.c.h.b16 %v981
          %v1126 = vunpack.c.l.b16 %v982
          %v1127 = vunpack.c.l.b16 %v983
          %v1128 = vunpack.c.h.b16 %v983
          %v1129 = vunpack.c.l.b16 %v984
          %v1130 = vunpack.c.h.b16 %v984
          %v1131 = vunpack.c.l.b16 %v985
          %v1132 = vunpack.c.l.b16 %v986
          %v1133 = vunpack.c.h.b16 %v986
          %v1134 = vunpack.c.l.b16 %v987
          %v1135 = vunpack.c.h.b16 %v987
          %v1136 = vunpack.c.l.b16 %v988
          %v1137 = vunpack.c.l.b16 %v989
          %v1138 = vunpack.c.h.b16 %v989
          %v1139 = vunpack.c.l.b16 %v990
          %v1140 = vunpack.c.h.b16 %v990
          %v1141 = vunpack.c.l.b16 %v991
          %v1142 = vunpack.c.l.b16 %v992
          %v1143 = vunpack.c.h.b16 %v992
          %v1144 = vunpack.c.l.b16 %v993
          %v1145 = vunpack.c.h.b16 %v993
          %v1146 = vunpack.c.l.b16 %v994
          %v1147 = vunpack.c.l.b16 %v995
          %v1148 = vunpack.c.h.b16 %v995
          %v1149 = vunpack.c.l.b16 %v996
          %v1150 = vunpack.c.h.b16 %v996
          %v1151 = vunpack.c.l.b16 %v997
          %v1152 = vunpack.c.l.b16 %v998
          %v1153 = vunpack.c.h.b16 %v998
          %v1154 = vunpack.c.l.b16 %v999
          %v1155 = vunpack.c.h.b16 %v999
          %v1156 = vunpack.c.l.b16 %v1000
          %v1157 = vunpack.c.l.b16 %v1001
          %v1158 = vunpack.c.h.b16 %v1001
          %v1159 = vunpack.c.l.b16 %v1002
          %v1160 = vunpack.c.h.b16 %v1002
          %v1161 = vunpack.c.l.b16 %v1003
          %v1162 = vunpack.c.l.b16 %v1004
          %v1163 = vunpack.c.h.b16 %v1004
          %v1164 = vunpack.c.l.b16 %v1005
          %v1165 = vunpack.c.h.b16 %v1005
          %v1166 = vunpack.c.l.b16 %v1006
          %v1167 = vunpack.c.l.b16 %v1007
          %v1168 = vunpack.c.h.b16 %v1007
          %v1169 = vunpack.c.l.b16 %v1008
          %v1170 = vunpack.c.h.b16 %v1008
          %v1171 = vunpack.c.l.b16 %v1009
          %v1172 = vunpack.c.l.b16 %v1010
          %v1173 = vunpack.c.h.b16 %v1010
          %v1174 = vunpack.c.l.b16 %v1011
          %v1175 = vunpack.c.h.b16 %v1011
          %v1176 = vunpack.c.l.b16 %v1012
          %v1177 = vpack.c.b16 %v1102, %v1097
          %v1178 = vpack.c.b16 %v1103, %v1098
          %v1179 = vpack.c.b16 %v1104, %v1099
          %v1180 = vpack.c.b16 %v1105, %v1100
          %v1181 = vpack.c.b16 %v1106, %v1101
          %v1182 = vpack.c.b16 %v1112, %v1107
          %v1183 = vpack.c.b16 %v1113, %v1108
          %v1184 = vpack.c.b16 %v1114, %v1109
          %v1185 = vpack.c.b16 %v1115, %v1110
          %v1186 = vpack.c.b16 %v1116, %v1111
          %v1187 = vpack.c.b16 %v1122, %v1117
          %v1188 = vpack.c.b16 %v1123, %v1118
          %v1189 = vpack.c.b16 %v1124, %v1119
          %v1190 = vpack.c.b16 %v1125, %v1120
          %v1191 = vpack.c.b16 %v1126, %v1121
          %v1192 = vpack.c.b16 %v1132, %v1127
          %v1193 = vpack.c.b16 %v1133, %v1128
          %v1194 = vpack.c.b16 %v1134, %v1129
          %v1195 = vpack.c.b16 %v1135, %v1130
          %v1196 = vpack.c.b16 %v1136, %v1131
          %v1197 = vpack.c.b16 %v1142, %v1137
          %v1198 = vpack.c.b16 %v1143, %v1138
          %v1199 = vpack.c.b16 %v1144, %v1139
          %v1200 = vpack.c.b16 %v1145, %v1140
          %v1201 = vpack.c.b16 %v1146, %v1141
          %v1202 = vpack.c.b16 %v1152, %v1147
          %v1203 = vpack.c.b16 %v1153, %v1148
          %v1204 = vpack.c.b16 %v1154, %v1149
          %v1205 = vpack.c.b16 %v1155, %v1150
          %v1206 = vpack.c.b16 %v1156, %v1151
          %v1207 = vpack.c.b16 %v1162, %v1157
          %v1208 = vpack.c.b16 %v1163, %v1158
          %v1209 = vpack.c.b16 %v1164, %v1159
          %v1210 = vpack.c.b16 %v1165, %v1160
          %v1211 = vpack.c.b16 %v1166, %v1161
          %v1212 = vpack.c.b16 %v1172, %v1167
          %v1213 = vpack.c.b16 %v1173, %v1168
          %v1214 = vpack.c.b16 %v1174, %v1169
          %v1215 = vpack.c.b16 %v1175, %v1170
          %v1216 = vpack.c.b16 %v1176, %v1171
          %vm1249 = vcmask 523264
          %v1251 = vsel %vm1249, %v1181, 0
          %v1254 = vsel %vm1249, %v1186, 0
          %v1257 = vsel %vm1249, %v1191, 0
          %v1260 = vsel %vm1249, %v1196, 0
          %v1263 = vsel %vm1249, %v1201, 0
          %v1266 = vsel %vm1249, %v1206, 0
          %v1269 = vsel %vm1249, %v1211, 0
          %v1272 = vsel %vm1249, %v1216, 0
          %1274 = vmatprep.subr.bf16.mxu0 0
          %1275 = vmatpush1.bf16.msra.mxu0 %v1013
          %1276 = vmatprep.subr.bf16.mxu0 0
          %1277 = vmatpush1.bf16.msra.mxu0 %v1014
          %1278 = vmatprep.subr.bf16.mxu0 0
          %1279 = vmatpush1.bf16.msra.mxu0 %v1015
          %1280 = vmatprep.subr.bf16.mxu0 0
          %1281 = vmatpush1.bf16.msra.mxu0 %v1016
          %1282 = vmatprep.subr.bf16.mxu0 0
          %1283 = vmatpush1.bf16.msra.mxu0 %v1017
          %1284 = vmatprep.subr.bf16.mxu0 0
          %1285 = vmatpush1.bf16.msra.mxu0 %v1018
          %1286 = vmatprep.subr.bf16.mxu0 0
          %1287 = vmatpush1.bf16.msra.mxu0 %v1019
          %1288 = vmatprep.subr.bf16.mxu0 0
          %1289 = vmatpush1.bf16.msra.mxu0 %v1020
          %1290 = vmatprep.subr.bf16.mxu0 0
          %1291 = vmatpush1.bf16.msra.mxu0 %v1021
          %1292 = vmatprep.subr.bf16.mxu0 0
          %1293 = vmatpush1.bf16.msra.mxu0 %v1022
          %1294 = vmatprep.subr.bf16.mxu0 0
          %1295 = vmatpush1.bf16.msra.mxu0 %v1023
          %1296 = vmatprep.subr.bf16.mxu0 0
          %1297 = vmatpush1.bf16.msra.mxu0 %v1024
          %1298 = vmatprep.subr.bf16.mxu0 0
          %1299 = vmatpush1.bf16.msra.mxu0 %v1025
          %1300 = vmatprep.subr.bf16.mxu0 0
          %1301 = vmatpush1.bf16.msra.mxu0 %v1026
          %1302 = vmatprep.subr.bf16.mxu0 0
          %1303 = vmatpush1.bf16.msra.mxu0 %v1027
          %1304 = vmatprep.subr.bf16.mxu0 0
          %1305 = vmatpush1.bf16.msra.mxu0 %v1028
          %1306 = vmatprep.mubr.bf16.mxu0 %v1178
          %1307 = vmatmul.mubr.bf16.gmra.mrb[0].mxu0 %v1177
          %v1308 = vpop.f32.mrb[0].mxu0
          %v1309 = vadd.f32 0.0, %v1308
          %v1310 = vpop.f32.mrb[0].mxu0
          %v1311 = vpop.f32.mrb[0].mxu0
          %v1312 = vadd.f32 0.0, %v1311
          %v1313 = vpop.f32.mrb[0].mxu0
          %1314 = vmatprep.mubr.bf16.mxu0 %v1183
          %1315 = vmatmul.mubr.bf16.gmra.mrb[0].mxu0 %v1182
          %v1316 = vpop.f32.mrb[0].mxu0
          %v1317 = vadd.f32 0.0, %v1316
          %v1318 = vpop.f32.mrb[0].mxu0
          %v1319 = vpop.f32.mrb[0].mxu0
          %v1320 = vadd.f32 0.0, %v1319
          %v1321 = vpop.f32.mrb[0].mxu0
          %1322 = vmatprep.mubr.bf16.mxu0 %v1188
          %1323 = vmatmul.mubr.bf16.gmra.mrb[0].mxu0 %v1187
          %v1324 = vpop.f32.mrb[0].mxu0
          %v1325 = vadd.f32 0.0, %v1324
          %v1326 = vpop.f32.mrb[0].mxu0
          %v1327 = vpop.f32.mrb[0].mxu0
          %v1328 = vadd.f32 0.0, %v1327
          %v1329 = vpop.f32.mrb[0].mxu0
          %1330 = vmatprep.mubr.bf16.mxu0 %v1193
          %1331 = vmatmul.mubr.bf16.gmra.mrb[0].mxu0 %v1192
          %v1332 = vpop.f32.mrb[0].mxu0
          %v1333 = vadd.f32 0.0, %v1332
          %v1334 = vpop.f32.mrb[0].mxu0
          %v1335 = vpop.f32.mrb[0].mxu0
          %v1336 = vadd.f32 0.0, %v1335
          %v1337 = vpop.f32.mrb[0].mxu0
          %1338 = vmatprep.mubr.bf16.mxu0 %v1198
          %1339 = vmatmul.mubr.bf16.gmra.mrb[0].mxu0 %v1197
          %v1340 = vpop.f32.mrb[0].mxu0
          %v1341 = vadd.f32 0.0, %v1340
          %v1342 = vpop.f32.mrb[0].mxu0
          %v1343 = vpop.f32.mrb[0].mxu0
          %v1344 = vadd.f32 0.0, %v1343
          %v1345 = vpop.f32.mrb[0].mxu0
          %1346 = vmatprep.mubr.bf16.mxu0 %v1203
          %1347 = vmatmul.mubr.bf16.gmra.mrb[0].mxu0 %v1202
          %v1348 = vpop.f32.mrb[0].mxu0
          %v1349 = vadd.f32 0.0, %v1348
          %v1350 = vpop.f32.mrb[0].mxu0
          %v1351 = vpop.f32.mrb[0].mxu0
          %v1352 = vadd.f32 0.0, %v1351
          %v1353 = vpop.f32.mrb[0].mxu0
          %1354 = vmatprep.mubr.bf16.mxu0 %v1208
          %1355 = vmatmul.mubr.bf16.gmra.mrb[0].mxu0 %v1207
          %v1356 = vpop.f32.mrb[0].mxu0
          %v1357 = vadd.f32 0.0, %v1356
          %v1358 = vpop.f32.mrb[0].mxu0
          %v1359 = vpop.f32.mrb[0].mxu0
          %v1360 = vadd.f32 0.0, %v1359
          %v1361 = vpop.f32.mrb[0].mxu0
          %1362 = vmatprep.mubr.bf16.mxu0 %v1213
          %1363 = vmatmul.mubr.bf16.gmra.mrb[0].mxu0 %v1212
          %v1364 = vpop.f32.mrb[0].mxu0
          %v1365 = vadd.f32 0.0, %v1364
          %v1366 = vpop.f32.mrb[0].mxu0
          %v1367 = vpop.f32.mrb[0].mxu0
          %v1368 = vadd.f32 0.0, %v1367
          %v1369 = vpop.f32.mrb[0].mxu0
          %1370 = vdwg.mxu0
          %1371 = vmatprep.subr.bf16.mxu0 0
          %1372 = vmatpush1.bf16.msra.mxu0 %v1029
          %1373 = vmatprep.subr.bf16.mxu0 0
          %1374 = vmatpush1.bf16.msra.mxu0 %v1030
          %1375 = vmatprep.subr.bf16.mxu0 0
          %1376 = vmatpush1.bf16.msra.mxu0 %v1031
          %1377 = vmatprep.subr.bf16.mxu0 0
          %1378 = vmatpush1.bf16.msra.mxu0 %v1032
          %1379 = vmatprep.subr.bf16.mxu0 0
          %1380 = vmatpush1.bf16.msra.mxu0 %v1033
          %1381 = vmatprep.subr.bf16.mxu0 0
          %1382 = vmatpush1.bf16.msra.mxu0 %v1034
          %1383 = vmatprep.subr.bf16.mxu0 0
          %1384 = vmatpush1.bf16.msra.mxu0 %v1035
          %1385 = vmatprep.subr.bf16.mxu0 0
          %1386 = vmatpush1.bf16.msra.mxu0 %v1036
          %1387 = vmatprep.subr.bf16.mxu0 0
          %1388 = vmatpush1.bf16.msra.mxu0 %v1037
          %1389 = vmatprep.subr.bf16.mxu0 0
          %1390 = vmatpush1.bf16.msra.mxu0 %v1038
          %1391 = vmatprep.subr.bf16.mxu0 0
          %1392 = vmatpush1.bf16.msra.mxu0 %v1039
          %1393 = vmatprep.subr.bf16.mxu0 0
          %1394 = vmatpush1.bf16.msra.mxu0 %v1040
          %1395 = vmatprep.subr.bf16.mxu0 0
          %1396 = vmatpush1.bf16.msra.mxu0 %v1041
          %1397 = vmatprep.subr.bf16.mxu0 0
          %1398 = vmatpush1.bf16.msra.mxu0 %v1042
          %1399 = vmatprep.subr.bf16.mxu0 0
          %1400 = vmatpush1.bf16.msra.mxu0 %v1043
          %1401 = vmatprep.subr.bf16.mxu0 0
          %1402 = vmatpush1.bf16.msra.mxu0 %v1044
          %1403 = vmatprep.mubr.bf16.mxu0 %v1180
          %1404 = vmatmul.mubr.bf16.gmra.mrb[0].mxu0 %v1179
          %v1405 = vpop.f32.mrb[0].mxu0
          %v1406 = vadd.f32 %v1309, %v1405
          %v1407 = vpop.f32.mrb[0].mxu0
          %v1408 = vpop.f32.mrb[0].mxu0
          %v1409 = vadd.f32 %v1312, %v1408
          %v1410 = vpop.f32.mrb[0].mxu0
          %1411 = vmatprep.mubr.bf16.mxu0 %v1185
          %1412 = vmatmul.mubr.bf16.gmra.mrb[0].mxu0 %v1184
          %v1413 = vpop.f32.mrb[0].mxu0
          %v1414 = vadd.f32 %v1317, %v1413
          %v1415 = vpop.f32.mrb[0].mxu0
          %v1416 = vpop.f32.mrb[0].mxu0
          %v1417 = vadd.f32 %v1320, %v1416
          %v1418 = vpop.f32.mrb[0].mxu0
          %1419 = vmatprep.mubr.bf16.mxu0 %v1190
          %1420 = vmatmul.mubr.bf16.gmra.mrb[0].mxu0 %v1189
          %v1421 = vpop.f32.mrb[0].mxu0
          %v1422 = vadd.f32 %v1325, %v1421
          %v1423 = vpop.f32.mrb[0].mxu0
          %v1424 = vpop.f32.mrb[0].mxu0
          %v1425 = vadd.f32 %v1328, %v1424
          %v1426 = vpop.f32.mrb[0].mxu0
          %1427 = vmatprep.mubr.bf16.mxu0 %v1195
          %1428 = vmatmul.mubr.bf16.gmra.mrb[0].mxu0 %v1194
          %v1429 = vpop.f32.mrb[0].mxu0
          %v1430 = vadd.f32 %v1333, %v1429
          %v1431 = vpop.f32.mrb[0].mxu0
          %v1432 = vpop.f32.mrb[0].mxu0
          %v1433 = vadd.f32 %v1336, %v1432
          %v1434 = vpop.f32.mrb[0].mxu0
          %1435 = vmatprep.mubr.bf16.mxu0 %v1200
          %1436 = vmatmul.mubr.bf16.gmra.mrb[0].mxu0 %v1199
          %v1437 = vpop.f32.mrb[0].mxu0
          %v1438 = vadd.f32 %v1341, %v1437
          %v1439 = vpop.f32.mrb[0].mxu0
          %v1440 = vpop.f32.mrb[0].mxu0
          %v1441 = vadd.f32 %v1344, %v1440
          %v1442 = vpop.f32.mrb[0].mxu0
          %1443 = vmatprep.mubr.bf16.mxu0 %v1205
          %1444 = vmatmul.mubr.bf16.gmra.mrb[0].mxu0 %v1204
          %v1445 = vpop.f32.mrb[0].mxu0
          %v1446 = vadd.f32 %v1349, %v1445
          %v1447 = vpop.f32.mrb[0].mxu0
          %v1448 = vpop.f32.mrb[0].mxu0
          %v1449 = vadd.f32 %v1352, %v1448
          %v1450 = vpop.f32.mrb[0].mxu0
          %1451 = vmatprep.mubr.bf16.mxu0 %v1210
          %1452 = vmatmul.mubr.bf16.gmra.mrb[0].mxu0 %v1209
          %v1453 = vpop.f32.mrb[0].mxu0
          %v1454 = vadd.f32 %v1357, %v1453
          %v1455 = vpop.f32.mrb[0].mxu0
          %v1456 = vpop.f32.mrb[0].mxu0
          %v1457 = vadd.f32 %v1360, %v1456
          %v1458 = vpop.f32.mrb[0].mxu0
          %1459 = vmatprep.mubr.bf16.mxu0 %v1215
          %1460 = vmatmul.mubr.bf16.gmra.mrb[0].mxu0 %v1214
          %v1461 = vpop.f32.mrb[0].mxu0
          %v1462 = vadd.f32 %v1365, %v1461
          %v1463 = vpop.f32.mrb[0].mxu0
          %v1464 = vpop.f32.mrb[0].mxu0
          %v1465 = vadd.f32 %v1368, %v1464
          %v1466 = vpop.f32.mrb[0].mxu0
          %1467 = vdwg.mxu0
          %1468 = vmatprep.subr.bf16.mxu0 0
          %1469 = vmatpush1.bf16.msra.mxu0 %v1045
          %1470 = vmatprep.subr.bf16.mxu0 0
          %1471 = vmatpush1.bf16.msra.mxu0 %v1046
          %1472 = vmatprep.subr.bf16.mxu0 0
          %1473 = vmatpush1.bf16.msra.mxu0 %v1047
          %1474 = vmatprep.subr.bf16.mxu0 0
          %1475 = vmatpush1.bf16.msra.mxu0 %v1048
          %1476 = vmatprep.subr.bf16.mxu0 0
          %1477 = vmatpush1.bf16.msra.mxu0 0
          %1478 = vmatprep.subr.bf16.mxu0 0
          %1479 = vmatpush1.bf16.msra.mxu0 0
          %1480 = vmatprep.subr.bf16.mxu0 0
          %1481 = vmatpush1.bf16.msra.mxu0 0
          %1482 = vmatprep.subr.bf16.mxu0 0
          %1483 = vmatpush1.bf16.msra.mxu0 0
          %1484 = vmatprep.subr.bf16.mxu0 0
          %1485 = vmatpush1.bf16.msra.mxu0 0
          %1486 = vmatprep.subr.bf16.mxu0 0
          %1487 = vmatpush1.bf16.msra.mxu0 0
          %1488 = vmatprep.subr.bf16.mxu0 0
          %1489 = vmatpush1.bf16.msra.mxu0 0
          %1490 = vmatprep.subr.bf16.mxu0 0
          %1491 = vmatpush1.bf16.msra.mxu0 0
          %1492 = vmatprep.subr.bf16.mxu0 0
          %1493 = vmatpush1.bf16.msra.mxu0 0
          %1494 = vmatprep.subr.bf16.mxu0 0
          %1495 = vmatpush1.bf16.msra.mxu0 0
          %1496 = vmatprep.subr.bf16.mxu0 0
          %1497 = vmatpush1.bf16.msra.mxu0 0
          %1498 = vmatprep.subr.bf16.mxu0 0
          %1499 = vmatpush1.bf16.msra.mxu0 0
          %1500 = vmatprep.mubr.bf16.mxu0 0
          %1501 = vmatmul.mubr.bf16.gmra.mrb[0].mxu0 %v1251
          %v1502 = vpop.f32.mrb[0].mxu0
          %v1503 = vadd.f32 %v1406, %v1502
          %v1504 = vpop.f32.mrb[0].mxu0
          %v1505 = vpop.f32.mrb[0].mxu0
          %v1506 = vadd.f32 %v1409, %v1505
          %v1507 = vpop.f32.mrb[0].mxu0
          %1508 = vmatprep.mubr.bf16.mxu0 0
          %1509 = vmatmul.mubr.bf16.gmra.mrb[0].mxu0 %v1254
          %v1510 = vpop.f32.mrb[0].mxu0
          %v1511 = vadd.f32 %v1414, %v1510
          %v1512 = vpop.f32.mrb[0].mxu0
          %v1513 = vpop.f32.mrb[0].mxu0
          %v1514 = vadd.f32 %v1417, %v1513
          %v1515 = vpop.f32.mrb[0].mxu0
          %1516 = vmatprep.mubr.bf16.mxu0 0
          %1517 = vmatmul.mubr.bf16.gmra.mrb[0].mxu0 %v1257
          %v1518 = vpop.f32.mrb[0].mxu0
          %v1519 = vadd.f32 %v1422, %v1518
          %v1520 = vpop.f32.mrb[0].mxu0
          %v1521 = vpop.f32.mrb[0].mxu0
          %v1522 = vadd.f32 %v1425, %v1521
          %v1523 = vpop.f32.mrb[0].mxu0
          %1524 = vmatprep.mubr.bf16.mxu0 0
          %1525 = vmatmul.mubr.bf16.gmra.mrb[0].mxu0 %v1260
          %v1526 = vpop.f32.mrb[0].mxu0
          %v1527 = vadd.f32 %v1430, %v1526
          %v1528 = vpop.f32.mrb[0].mxu0
          %v1529 = vpop.f32.mrb[0].mxu0
          %v1530 = vadd.f32 %v1433, %v1529
          %v1531 = vpop.f32.mrb[0].mxu0
          %1532 = vmatprep.mubr.bf16.mxu0 0
          %1533 = vmatmul.mubr.bf16.gmra.mrb[0].mxu0 %v1263
          %v1534 = vpop.f32.mrb[0].mxu0
          %v1535 = vadd.f32 %v1438, %v1534
          %v1536 = vpop.f32.mrb[0].mxu0
          %v1537 = vpop.f32.mrb[0].mxu0
          %v1538 = vadd.f32 %v1441, %v1537
          %v1539 = vpop.f32.mrb[0].mxu0
          %1540 = vmatprep.mubr.bf16.mxu0 0
          %1541 = vmatmul.mubr.bf16.gmra.mrb[0].mxu0 %v1266
          %v1542 = vpop.f32.mrb[0].mxu0
          %v1543 = vadd.f32 %v1446, %v1542
          %v1544 = vpop.f32.mrb[0].mxu0
          %v1545 = vpop.f32.mrb[0].mxu0
          %v1546 = vadd.f32 %v1449, %v1545
          %v1547 = vpop.f32.mrb[0].mxu0
          %1548 = vmatprep.mubr.bf16.mxu0 0
          %1549 = vmatmul.mubr.bf16.gmra.mrb[0].mxu0 %v1269
          %v1550 = vpop.f32.mrb[0].mxu0
          %v1551 = vadd.f32 %v1454, %v1550
          %v1552 = vpop.f32.mrb[0].mxu0
          %v1553 = vpop.f32.mrb[0].mxu0
          %v1554 = vadd.f32 %v1457, %v1553
          %v1555 = vpop.f32.mrb[0].mxu0
          %1556 = vmatprep.mubr.bf16.mxu0 0
          %1557 = vmatmul.mubr.bf16.gmra.mrb[0].mxu0 %v1272
          %v1558 = vpop.f32.mrb[0].mxu0
          %v1559 = vadd.f32 %v1462, %v1558
          %v1560 = vpop.f32.mrb[0].mxu0
          %v1561 = vpop.f32.mrb[0].mxu0
          %v1562 = vadd.f32 %v1465, %v1561
          %v1563 = vpop.f32.mrb[0].mxu0
          %1564 = vdwg.mxu0
          %s1565 = smul.u32 %s38, 128
          %v1566 = vlaneseq
          %v1567 = vand.u32 %v1566, 127
          %v1568 = vstv %s1565
          %v1569 = vadd.s32 %v1568, %v1567
          %v1570 = vld [vmem:[%s558] sm:$0xff]
          %v1571 = vld [vmem:[%s558 + $0x8] sm:$0xff]
          %v1572 = vld [vmem:[%s558 + $0x10] sm:$0xff]
          %v1573 = vld [vmem:[%s558 + $0x18] sm:$0xff]
          %v1574 = vld [vmem:[%s558 + $0x20] sm:$0xff]
          %v1575 = vld [vmem:[%s558 + $0x28] sm:$0xff]
          %v1576 = vld [vmem:[%s558 + $0x30] sm:$0xff]
          %v1577 = vld [vmem:[%s558 + $0x38] sm:$0xff]
          %v1578 = vld [vmem:[%s558 + $0x40] sm:$0xff]
          %v1579 = vld [vmem:[%s558 + $0x48] sm:$0xff]
          %v1580 = vld [vmem:[%s558 + $0x50] sm:$0xff]
          %v1581 = vld [vmem:[%s558 + $0x58] sm:$0xff]
          %v1582 = vld [vmem:[%s558 + $0x60] sm:$0xff]
          %v1583 = vld [vmem:[%s558 + $0x68] sm:$0xff]
          %v1584 = vld [vmem:[%s558 + $0x70] sm:$0xff]
          %v1585 = vld [vmem:[%s558 + $0x78] sm:$0xff]
          %1586 = vset.pattern.permute.xlu0 0
          %1587 = vperm.xlu0 %1586, %v1570
          %v1588 = vpop.permute.xlu0 %1587
          %1589 = vset.pattern.permute.xlu0 0
          %1590 = vperm.xlu0 %1589, %v1571
          %v1591 = vpop.permute.xlu0 %1590
          %1592 = vset.pattern.permute.xlu0 0
          %1593 = vperm.xlu0 %1592, %v1572
          %v1594 = vpop.permute.xlu0 %1593
          %1595 = vset.pattern.permute.xlu0 0
          %1596 = vperm.xlu0 %1595, %v1573
          %v1597 = vpop.permute.xlu0 %1596
          %1598 = vset.pattern.permute.xlu0 0
          %1599 = vperm.xlu0 %1598, %v1574
          %v1600 = vpop.permute.xlu0 %1599
          %1601 = vset.pattern.permute.xlu0 0
          %1602 = vperm.xlu0 %1601, %v1575
          %v1603 = vpop.permute.xlu0 %1602
          %1604 = vset.pattern.permute.xlu0 0
          %1605 = vperm.xlu0 %1604, %v1576
          %v1606 = vpop.permute.xlu0 %1605
          %1607 = vset.pattern.permute.xlu0 0
          %1608 = vperm.xlu0 %1607, %v1577
          %v1609 = vpop.permute.xlu0 %1608
          %1610 = vset.pattern.permute.xlu0 0
          %1611 = vperm.xlu0 %1610, %v1578
          %v1612 = vpop.permute.xlu0 %1611
          %1613 = vset.pattern.permute.xlu0 0
          %1614 = vperm.xlu0 %1613, %v1579
          %v1615 = vpop.permute.xlu0 %1614
          %1616 = vset.pattern.permute.xlu0 0
          %1617 = vperm.xlu0 %1616, %v1580
          %v1618 = vpop.permute.xlu0 %1617
          %1619 = vset.pattern.permute.xlu0 0
          %1620 = vperm.xlu0 %1619, %v1581
          %v1621 = vpop.permute.xlu0 %1620
          %1622 = vset.pattern.permute.xlu0 0
          %1623 = vperm.xlu0 %1622, %v1582
          %v1624 = vpop.permute.xlu0 %1623
          %1625 = vset.pattern.permute.xlu0 0
          %1626 = vperm.xlu0 %1625, %v1583
          %v1627 = vpop.permute.xlu0 %1626
          %1628 = vset.pattern.permute.xlu0 0
          %1629 = vperm.xlu0 %1628, %v1584
          %v1630 = vpop.permute.xlu0 %1629
          %1631 = vset.pattern.permute.xlu0 0
          %1632 = vperm.xlu0 %1631, %v1585
          %v1633 = vpop.permute.xlu0 %1632
          %vm1634 = vcmp.eq.s32.totalorder %v1588, %v1569
          %vm1635 = vcmp.eq.s32.totalorder %v1591, %v1569
          %vm1636 = vcmp.eq.s32.totalorder %v1594, %v1569
          %vm1637 = vcmp.eq.s32.totalorder %v1597, %v1569
          %vm1638 = vcmp.eq.s32.totalorder %v1600, %v1569
          %vm1639 = vcmp.eq.s32.totalorder %v1603, %v1569
          %vm1640 = vcmp.eq.s32.totalorder %v1606, %v1569
          %vm1641 = vcmp.eq.s32.totalorder %v1609, %v1569
          %vm1642 = vcmp.eq.s32.totalorder %v1612, %v1569
          %vm1643 = vcmp.eq.s32.totalorder %v1615, %v1569
          %vm1644 = vcmp.eq.s32.totalorder %v1618, %v1569
          %vm1645 = vcmp.eq.s32.totalorder %v1621, %v1569
          %vm1646 = vcmp.eq.s32.totalorder %v1624, %v1569
          %vm1647 = vcmp.eq.s32.totalorder %v1627, %v1569
          %vm1648 = vcmp.eq.s32.totalorder %v1630, %v1569
          %vm1649 = vcmp.eq.s32.totalorder %v1633, %v1569
          %v1650 = vsel %vm1634, 1, 0
          %v1651 = vsel %vm1635, 1, 0
          %v1652 = vsel %vm1636, 1, 0
          %v1653 = vsel %vm1637, 1, 0
          %v1654 = vsel %vm1638, 1, 0
          %v1655 = vsel %vm1639, 1, 0
          %v1656 = vsel %vm1640, 1, 0
          %v1657 = vsel %vm1641, 1, 0
          %v1658 = vsel %vm1642, 1, 0
          %v1659 = vsel %vm1643, 1, 0
          %v1660 = vsel %vm1644, 1, 0
          %v1661 = vsel %vm1645, 1, 0
          %v1662 = vsel %vm1646, 1, 0
          %v1663 = vsel %vm1647, 1, 0
          %v1664 = vsel %vm1648, 1, 0
          %v1665 = vsel %vm1649, 1, 0
          %v1666 = vcvt.s32.f32 %v1650
          %v1667 = vcvt.s32.f32 %v1651
          %v1668 = vcvt.s32.f32 %v1652
          %v1669 = vcvt.s32.f32 %v1653
          %v1670 = vcvt.s32.f32 %v1654
          %v1671 = vcvt.s32.f32 %v1655
          %v1672 = vcvt.s32.f32 %v1656
          %v1673 = vcvt.s32.f32 %v1657
          %v1674 = vcvt.s32.f32 %v1658
          %v1675 = vcvt.s32.f32 %v1659
          %v1676 = vcvt.s32.f32 %v1660
          %v1677 = vcvt.s32.f32 %v1661
          %v1678 = vcvt.s32.f32 %v1662
          %v1679 = vcvt.s32.f32 %v1663
          %v1680 = vcvt.s32.f32 %v1664
          %v1681 = vcvt.s32.f32 %v1665
          %v1682 = vpack.c.bf16 %v1667, %v1666
          %v1683 = vpack.c.bf16 %v1669, %v1668
          %v1684 = vpack.c.bf16 %v1671, %v1670
          %v1685 = vpack.c.bf16 %v1673, %v1672
          %v1686 = vpack.c.bf16 %v1675, %v1674
          %v1687 = vpack.c.bf16 %v1677, %v1676
          %v1688 = vpack.c.bf16 %v1679, %v1678
          %v1689 = vpack.c.bf16 %v1681, %v1680
          %v1690 = vld [vmem:[#allocation2] sm:$0xff]
          %v1691 = vld [vmem:[#allocation2 + $0x8] sm:$0xff]
          %v1692 = vld [vmem:[#allocation2 + $0x10] sm:$0xff]
          %v1693 = vld [vmem:[#allocation2 + $0x18] sm:$0xff]
          %v1694 = vld [vmem:[#allocation2 + $0x20] sm:$0xff]
          %v1695 = vld [vmem:[#allocation2 + $0x28] sm:$0xff]
          %v1696 = vld [vmem:[#allocation2 + $0x30] sm:$0xff]
          %v1697 = vld [vmem:[#allocation2 + $0x38] sm:$0xff]
          %v1698 = vld [vmem:[#allocation2 + $0x40] sm:$0xff]
          %v1699 = vld [vmem:[#allocation2 + $0x48] sm:$0xff]
          %v1700 = vld [vmem:[#allocation2 + $0x50] sm:$0xff]
          %v1701 = vld [vmem:[#allocation2 + $0x58] sm:$0xff]
          %v1702 = vld [vmem:[#allocation2 + $0x60] sm:$0xff]
          %v1703 = vld [vmem:[#allocation2 + $0x68] sm:$0xff]
          %v1704 = vld [vmem:[#allocation2 + $0x70] sm:$0xff]
          %v1705 = vld [vmem:[#allocation2 + $0x78] sm:$0xff]
          %v1706 = vpack.c.bf16 %v1506, %v1503
          %v1707 = vpack.c.bf16 %v1514, %v1511
          %v1708 = vpack.c.bf16 %v1522, %v1519
          %v1709 = vpack.c.bf16 %v1530, %v1527
          %v1710 = vpack.c.bf16 %v1538, %v1535
          %v1711 = vpack.c.bf16 %v1546, %v1543
          %v1712 = vpack.c.bf16 %v1554, %v1551
          %v1713 = vpack.c.bf16 %v1562, %v1559
          %1714 = vmatprep.subr.bf16.mxu0 0
          %1715 = vmatpush1.bf16.msra.mxu0 %v1682
          %1716 = vmatprep.subr.bf16.mxu0 0
          %1717 = vmatpush1.bf16.msra.mxu0 %v1683
          %1718 = vmatprep.subr.bf16.mxu0 0
          %1719 = vmatpush1.bf16.msra.mxu0 %v1684
          %1720 = vmatprep.subr.bf16.mxu0 0
          %1721 = vmatpush1.bf16.msra.mxu0 %v1685
          %1722 = vmatprep.subr.bf16.mxu0 0
          %1723 = vmatpush1.bf16.msra.mxu0 %v1686
          %1724 = vmatprep.subr.bf16.mxu0 0
          %1725 = vmatpush1.bf16.msra.mxu0 %v1687
          %1726 = vmatprep.subr.bf16.mxu0 0
          %1727 = vmatpush1.bf16.msra.mxu0 %v1688
          %1728 = vmatprep.subr.bf16.mxu0 0
          %1729 = vmatpush1.bf16.msra.mxu0 %v1689
          %1730 = vmatprep.subr.bf16.mxu0 0
          %1731 = vmatpush1.bf16.msra.mxu0 0
          %1732 = vmatprep.subr.bf16.mxu0 0
          %1733 = vmatpush1.bf16.msra.mxu0 0
          %1734 = vmatprep.subr.bf16.mxu0 0
          %1735 = vmatpush1.bf16.msra.mxu0 0
          %1736 = vmatprep.subr.bf16.mxu0 0
          %1737 = vmatpush1.bf16.msra.mxu0 0
          %1738 = vmatprep.subr.bf16.mxu0 0
          %1739 = vmatpush1.bf16.msra.mxu0 0
          %1740 = vmatprep.subr.bf16.mxu0 0
          %1741 = vmatpush1.bf16.msra.mxu0 0
          %1742 = vmatprep.subr.bf16.mxu0 0
          %1743 = vmatpush1.bf16.msra.mxu0 0
          %1744 = vmatprep.subr.bf16.mxu0 0
          %1745 = vmatpush1.bf16.msra.mxu0 0
          %1746 = vmatprep.mubr.bf16.mxu0 0
          %1747 = vmatmul.mubr.bf16.gmra.mrb[0].mxu0 %v1706
          %v1748 = vpop.f32.mrb[0].mxu0
          %v1749 = vadd.f32 0.0, %v1748
          %v1750 = vpop.f32.mrb[0].mxu0
          %v1751 = vpop.f32.mrb[0].mxu0
          %v1752 = vadd.f32 0.0, %v1751
          %v1753 = vpop.f32.mrb[0].mxu0
          %1754 = vmatprep.mubr.bf16.mxu0 0
          %1755 = vmatmul.mubr.bf16.gmra.mrb[0].mxu0 %v1707
          %v1756 = vpop.f32.mrb[0].mxu0
          %v1757 = vadd.f32 0.0, %v1756
          %v1758 = vpop.f32.mrb[0].mxu0
          %v1759 = vpop.f32.mrb[0].mxu0
          %v1760 = vadd.f32 0.0, %v1759
          %v1761 = vpop.f32.mrb[0].mxu0
          %1762 = vmatprep.mubr.bf16.mxu0 0
          %1763 = vmatmul.mubr.bf16.gmra.mrb[0].mxu0 %v1708
          %v1764 = vpop.f32.mrb[0].mxu0
          %v1765 = vadd.f32 0.0, %v1764
          %v1766 = vpop.f32.mrb[0].mxu0
          %v1767 = vpop.f32.mrb[0].mxu0
          %v1768 = vadd.f32 0.0, %v1767
          %v1769 = vpop.f32.mrb[0].mxu0
          %1770 = vmatprep.mubr.bf16.mxu0 0
          %1771 = vmatmul.mubr.bf16.gmra.mrb[0].mxu0 %v1709
          %v1772 = vpop.f32.mrb[0].mxu0
          %v1773 = vadd.f32 0.0, %v1772
          %v1774 = vpop.f32.mrb[0].mxu0
          %v1775 = vpop.f32.mrb[0].mxu0
          %v1776 = vadd.f32 0.0, %v1775
          %v1777 = vpop.f32.mrb[0].mxu0
          %1778 = vmatprep.mubr.bf16.mxu0 0
          %1779 = vmatmul.mubr.bf16.gmra.mrb[0].mxu0 %v1710
          %v1780 = vpop.f32.mrb[0].mxu0
          %v1781 = vadd.f32 0.0, %v1780
          %v1782 = vpop.f32.mrb[0].mxu0
          %v1783 = vpop.f32.mrb[0].mxu0
          %v1784 = vadd.f32 0.0, %v1783
          %v1785 = vpop.f32.mrb[0].mxu0
          %1786 = vmatprep.mubr.bf16.mxu0 0
          %1787 = vmatmul.mubr.bf16.gmra.mrb[0].mxu0 %v1711
          %v1788 = vpop.f32.mrb[0].mxu0
          %v1789 = vadd.f32 0.0, %v1788
          %v1790 = vpop.f32.mrb[0].mxu0
          %v1791 = vpop.f32.mrb[0].mxu0
          %v1792 = vadd.f32 0.0, %v1791
          %v1793 = vpop.f32.mrb[0].mxu0
          %1794 = vmatprep.mubr.bf16.mxu0 0
          %1795 = vmatmul.mubr.bf16.gmra.mrb[0].mxu0 %v1712
          %v1796 = vpop.f32.mrb[0].mxu0
          %v1797 = vadd.f32 0.0, %v1796
          %v1798 = vpop.f32.mrb[0].mxu0
          %v1799 = vpop.f32.mrb[0].mxu0
          %v1800 = vadd.f32 0.0, %v1799
          %v1801 = vpop.f32.mrb[0].mxu0
          %1802 = vmatprep.mubr.bf16.mxu0 0
          %1803 = vmatmul.mubr.bf16.gmra.mrb[0].mxu0 %v1713
          %v1804 = vpop.f32.mrb[0].mxu0
          %v1805 = vadd.f32 0.0, %v1804
          %v1806 = vpop.f32.mrb[0].mxu0
          %v1807 = vpop.f32.mrb[0].mxu0
          %v1808 = vadd.f32 0.0, %v1807
          %v1809 = vpop.f32.mrb[0].mxu0
          %1810 = vdwg.mxu0
          %v1811 = vadd.f32 %v1690, %v1749
          %v1812 = vadd.f32 %v1691, %v1752
          %v1813 = vadd.f32 %v1692, %v1757
          %v1814 = vadd.f32 %v1693, %v1760
          %v1815 = vadd.f32 %v1694, %v1765
          %v1816 = vadd.f32 %v1695, %v1768
          %v1817 = vadd.f32 %v1696, %v1773
          %v1818 = vadd.f32 %v1697, %v1776
          %v1819 = vadd.f32 %v1698, %v1781
          %v1820 = vadd.f32 %v1699, %v1784
          %v1821 = vadd.f32 %v1700, %v1789
          %v1822 = vadd.f32 %v1701, %v1792
          %v1823 = vadd.f32 %v1702, %v1797
          %v1824 = vadd.f32 %v1703, %v1800
          %v1825 = vadd.f32 %v1704, %v1805
          %v1826 = vadd.f32 %v1705, %v1808
          %1827 = vst [vmem:[#allocation2] sm:$0xff] %v1811
          %1828 = vst [vmem:[#allocation2 + $0x8] sm:$0xff] %v1812
          %1829 = vst [vmem:[#allocation2 + $0x10] sm:$0xff] %v1813
          %1830 = vst [vmem:[#allocation2 + $0x18] sm:$0xff] %v1814
          %1831 = vst [vmem:[#allocation2 + $0x20] sm:$0xff] %v1815
          %1832 = vst [vmem:[#allocation2 + $0x28] sm:$0xff] %v1816
          %1833 = vst [vmem:[#allocation2 + $0x30] sm:$0xff] %v1817
          %1834 = vst [vmem:[#allocation2 + $0x38] sm:$0xff] %v1818
          %1835 = vst [vmem:[#allocation2 + $0x40] sm:$0xff] %v1819
          %1836 = vst [vmem:[#allocation2 + $0x48] sm:$0xff] %v1820
          %1837 = vst [vmem:[#allocation2 + $0x50] sm:$0xff] %v1821
          %1838 = vst [vmem:[#allocation2 + $0x58] sm:$0xff] %v1822
          %1839 = vst [vmem:[#allocation2 + $0x60] sm:$0xff] %v1823
          %1840 = vst [vmem:[#allocation2 + $0x68] sm:$0xff] %v1824
          %1841 = vst [vmem:[#allocation2 + $0x70] sm:$0xff] %v1825
          %1842 = vst [vmem:[#allocation2 + $0x78] sm:$0xff] %v1826
        $region101: #{tpu_custom_call.1} parent=88 // pred_fallthru
          _
        // Predicated region
        $region102: #{tpu_custom_call.1} parent=88 // pred_check
          %p1843 = pneg %p612
        $region103: #{tpu_custom_call.1} parent=88 // pred_check_branch
          %1845 = sbr.rel (%p1843) target = $region105
        $region104: #{tpu_custom_call.1} parent=88 // pred_region
          %v1846 = vld [vmem:[#allocation2] sm:$0xff]
          %v1847 = vld [vmem:[#allocation2 + $0x8] sm:$0xff]
          %v1848 = vld [vmem:[#allocation2 + $0x10] sm:$0xff]
          %v1849 = vld [vmem:[#allocation2 + $0x18] sm:$0xff]
          %v1850 = vld [vmem:[#allocation2 + $0x20] sm:$0xff]
          %v1851 = vld [vmem:[#allocation2 + $0x28] sm:$0xff]
          %v1852 = vld [vmem:[#allocation2 + $0x30] sm:$0xff]
          %v1853 = vld [vmem:[#allocation2 + $0x38] sm:$0xff]
          %v1854 = vld [vmem:[#allocation2 + $0x40] sm:$0xff]
          %v1855 = vld [vmem:[#allocation2 + $0x48] sm:$0xff]
          %v1856 = vld [vmem:[#allocation2 + $0x50] sm:$0xff]
          %v1857 = vld [vmem:[#allocation2 + $0x58] sm:$0xff]
          %v1858 = vld [vmem:[#allocation2 + $0x60] sm:$0xff]
          %v1859 = vld [vmem:[#allocation2 + $0x68] sm:$0xff]
          %v1860 = vld [vmem:[#allocation2 + $0x70] sm:$0xff]
          %v1861 = vld [vmem:[#allocation2 + $0x78] sm:$0xff]
          %v1862 = vld [vmem:[%s610] sm:$0x1]
          %v1864 = vlaneseq
          %v1865 = vshrl.u32 %v1864, 7
          %v1866 = vsub.s32 0, %v1865
          %v1867 = vrot.slane %v1862, %v1866
          %v1869 = vmul.f32 %v1846, %v1867
          %v1870 = vmul.f32 %v1847, %v1867
          %v1871 = vmul.f32 %v1848, %v1867
          %v1872 = vmul.f32 %v1849, %v1867
          %v1873 = vmul.f32 %v1850, %v1867
          %v1874 = vmul.f32 %v1851, %v1867
          %v1875 = vmul.f32 %v1852, %v1867
          %v1876 = vmul.f32 %v1853, %v1867
          %v1877 = vmul.f32 %v1854, %v1867
          %v1878 = vmul.f32 %v1855, %v1867
          %v1879 = vmul.f32 %v1856, %v1867
          %v1880 = vmul.f32 %v1857, %v1867
          %v1881 = vmul.f32 %v1858, %v1867
          %v1882 = vmul.f32 %v1859, %v1867
          %v1883 = vmul.f32 %v1860, %v1867
          %v1884 = vmul.f32 %v1861, %v1867
          %v1885 = vld [vmem:[%s8] sm:$0xf]
          %v1886 = vld [vmem:[%s8 + $0x4] sm:$0xf]
          %v1887 = vld [vmem:[%s8 + $0x8] sm:$0xf]
          %v1888 = vld [vmem:[%s8 + $0xc] sm:$0xf]
          %v1889 = vld [vmem:[%s8 + $0x10] sm:$0xf]
          %v1890 = vld [vmem:[%s8 + $0x14] sm:$0xf]
          %v1891 = vld [vmem:[%s8 + $0x18] sm:$0xf]
          %v1892 = vld [vmem:[%s8 + $0x1c] sm:$0xf]
          %v1893 = vld [vmem:[%s8 + $0x20] sm:$0xf]
          %v1894 = vld [vmem:[%s8 + $0x24] sm:$0xf]
          %v1895 = vld [vmem:[%s8 + $0x28] sm:$0xf]
          %v1896 = vld [vmem:[%s8 + $0x2c] sm:$0xf]
          %v1897 = vld [vmem:[%s8 + $0x30] sm:$0xf]
          %v1898 = vld [vmem:[%s8 + $0x34] sm:$0xf]
          %v1899 = vld [vmem:[%s8 + $0x38] sm:$0xf]
          %v1900 = vld [vmem:[%s8 + $0x3c] sm:$0xf]
          %v1901 = vld [vmem:[%s475] sm:$0xf]
          %v1902 = vld [vmem:[%s475 + $0x4] sm:$0xf]
          %v1919 = vunpack.c.l.b16 %v1885
          %v1920 = vunpack.c.l.b16 %v1886
          %v1921 = vunpack.c.l.b16 %v1887
          %v1922 = vunpack.c.l.b16 %v1888
          %v1923 = vunpack.c.l.b16 %v1889
          %v1924 = vunpack.c.l.b16 %v1890
          %v1925 = vunpack.c.l.b16 %v1891
          %v1926 = vunpack.c.l.b16 %v1892
          %v1927 = vunpack.c.l.b16 %v1893
          %v1928 = vunpack.c.l.b16 %v1894
          %v1929 = vunpack.c.l.b16 %v1895
          %v1930 = vunpack.c.l.b16 %v1896
          %v1931 = vunpack.c.l.b16 %v1897
          %v1932 = vunpack.c.l.b16 %v1898
          %v1933 = vunpack.c.l.b16 %v1899
          %v1934 = vunpack.c.l.b16 %v1900
          %v1935 = vpack.c.b16 %v1920, %v1919
          %v1936 = vpack.c.b16 %v1922, %v1921
          %v1937 = vpack.c.b16 %v1924, %v1923
          %v1938 = vpack.c.b16 %v1926, %v1925
          %v1939 = vpack.c.b16 %v1928, %v1927
          %v1940 = vpack.c.b16 %v1930, %v1929
          %v1941 = vpack.c.b16 %v1932, %v1931
          %v1942 = vpack.c.b16 %v1934, %v1933
          %v1945 = vunpack.c.l.b16 %v1901
          %v1946 = vunpack.c.l.b16 %v1902
          %v1947 = vpack.c.b16 %v1946, %v1945
          %vm1949 = vcmask 130048
          %v1951 = vsel %vm1949, %v1935, 0
          %v1954 = vsel %vm1949, %v1936, 0
          %v1957 = vsel %vm1949, %v1937, 0
          %v1960 = vsel %vm1949, %v1938, 0
          %v1963 = vsel %vm1949, %v1939, 0
          %v1966 = vsel %vm1949, %v1940, 0
          %v1969 = vsel %vm1949, %v1941, 0
          %v1972 = vsel %vm1949, %v1942, 0
          %1974 = vmatprep.subr.bf16.mxu0 0
          %1975 = vmatpush1.bf16.msra.mxu0 %v1947
          %1976 = vmatprep.subr.bf16.mxu0 0
          %1977 = vmatpush1.bf16.msra.mxu0 0
          %1978 = vmatprep.subr.bf16.mxu0 0
          %1979 = vmatpush1.bf16.msra.mxu0 0
          %1980 = vmatprep.subr.bf16.mxu0 0
          %1981 = vmatpush1.bf16.msra.mxu0 0
          %1982 = vmatprep.subr.bf16.mxu0 0
          %1983 = vmatpush1.bf16.msra.mxu0 0
          %1984 = vmatprep.subr.bf16.mxu0 0
          %1985 = vmatpush1.bf16.msra.mxu0 0
          %1986 = vmatprep.subr.bf16.mxu0 0
          %1987 = vmatpush1.bf16.msra.mxu0 0
          %1988 = vmatprep.subr.bf16.mxu0 0
          %1989 = vmatpush1.bf16.msra.mxu0 0
          %1990 = vmatprep.subr.bf16.mxu0 0
          %1991 = vmatpush1.bf16.msra.mxu0 0
          %1992 = vmatprep.subr.bf16.mxu0 0
          %1993 = vmatpush1.bf16.msra.mxu0 0
          %1994 = vmatprep.subr.bf16.mxu0 0
          %1995 = vmatpush1.bf16.msra.mxu0 0
          %1996 = vmatprep.subr.bf16.mxu0 0
          %1997 = vmatpush1.bf16.msra.mxu0 0
          %1998 = vmatprep.subr.bf16.mxu0 0
          %1999 = vmatpush1.bf16.msra.mxu0 0
          %2000 = vmatprep.subr.bf16.mxu0 0
          %2001 = vmatpush1.bf16.msra.mxu0 0
          %2002 = vmatprep.subr.bf16.mxu0 0
          %2003 = vmatpush1.bf16.msra.mxu0 0
          %2004 = vmatprep.subr.bf16.mxu0 0
          %2005 = vmatpush1.bf16.msra.mxu0 0
          %2006 = vmatprep.mubr.bf16.mxu0 0
          %2007 = vmatmul.mubr.bf16.gmra.mrb[0].mxu0 %v1951
          %v2008 = vpop.f32.mrb[0].mxu0
          %v2009 = vadd.f32 0.0, %v2008
          %v2010 = vpop.f32.mrb[0].mxu0
          %v2011 = vpop.f32.mrb[0].mxu0
          %v2012 = vadd.f32 0.0, %v2011
          %v2013 = vpop.f32.mrb[0].mxu0
          %2014 = vmatprep.mubr.bf16.mxu0 0
          %2015 = vmatmul.mubr.bf16.gmra.mrb[0].mxu0 %v1954
          %v2016 = vpop.f32.mrb[0].mxu0
          %v2017 = vadd.f32 0.0, %v2016
          %v2018 = vpop.f32.mrb[0].mxu0
          %v2019 = vpop.f32.mrb[0].mxu0
          %v2020 = vadd.f32 0.0, %v2019
          %v2021 = vpop.f32.mrb[0].mxu0
          %2022 = vmatprep.mubr.bf16.mxu0 0
          %2023 = vmatmul.mubr.bf16.gmra.mrb[0].mxu0 %v1957
          %v2024 = vpop.f32.mrb[0].mxu0
          %v2025 = vadd.f32 0.0, %v2024
          %v2026 = vpop.f32.mrb[0].mxu0
          %v2027 = vpop.f32.mrb[0].mxu0
          %v2028 = vadd.f32 0.0, %v2027
          %v2029 = vpop.f32.mrb[0].mxu0
          %2030 = vmatprep.mubr.bf16.mxu0 0
          %2031 = vmatmul.mubr.bf16.gmra.mrb[0].mxu0 %v1960
          %v2032 = vpop.f32.mrb[0].mxu0
          %v2033 = vadd.f32 0.0, %v2032
          %v2034 = vpop.f32.mrb[0].mxu0
          %v2035 = vpop.f32.mrb[0].mxu0
          %v2036 = vadd.f32 0.0, %v2035
          %v2037 = vpop.f32.mrb[0].mxu0
          %2038 = vmatprep.mubr.bf16.mxu0 0
          %2039 = vmatmul.mubr.bf16.gmra.mrb[0].mxu0 %v1963
          %v2040 = vpop.f32.mrb[0].mxu0
          %v2041 = vadd.f32 0.0, %v2040
          %v2042 = vpop.f32.mrb[0].mxu0
          %v2043 = vpop.f32.mrb[0].mxu0
          %v2044 = vadd.f32 0.0, %v2043
          %v2045 = vpop.f32.mrb[0].mxu0
          %2046 = vmatprep.mubr.bf16.mxu0 0
          %2047 = vmatmul.mubr.bf16.gmra.mrb[0].mxu0 %v1966
          %v2048 = vpop.f32.mrb[0].mxu0
          %v2049 = vadd.f32 0.0, %v2048
          %v2050 = vpop.f32.mrb[0].mxu0
          %v2051 = vpop.f32.mrb[0].mxu0
          %v2052 = vadd.f32 0.0, %v2051
          %v2053 = vpop.f32.mrb[0].mxu0
          %2054 = vmatprep.mubr.bf16.mxu0 0
          %2055 = vmatmul.mubr.bf16.gmra.mrb[0].mxu0 %v1969
          %v2056 = vpop.f32.mrb[0].mxu0
          %v2057 = vadd.f32 0.0, %v2056
          %v2058 = vpop.f32.mrb[0].mxu0
          %v2059 = vpop.f32.mrb[0].mxu0
          %v2060 = vadd.f32 0.0, %v2059
          %v2061 = vpop.f32.mrb[0].mxu0
          %2062 = vmatprep.mubr.bf16.mxu0 0
          %2063 = vmatmul.mubr.bf16.gmra.mrb[0].mxu0 %v1972
          %v2064 = vpop.f32.mrb[0].mxu0
          %v2065 = vadd.f32 0.0, %v2064
          %v2066 = vpop.f32.mrb[0].mxu0
          %v2067 = vpop.f32.mrb[0].mxu0
          %v2068 = vadd.f32 0.0, %v2067
          %v2069 = vpop.f32.mrb[0].mxu0
          %2070 = vdwg.mxu0
          %v2071 = vadd.f32 %v1869, %v2009
          %v2072 = vadd.f32 %v1870, %v2012
          %v2073 = vadd.f32 %v1871, %v2017
          %v2074 = vadd.f32 %v1872, %v2020
          %v2075 = vadd.f32 %v1873, %v2025
          %v2076 = vadd.f32 %v1874, %v2028
          %v2077 = vadd.f32 %v1875, %v2033
          %v2078 = vadd.f32 %v1876, %v2036
          %v2079 = vadd.f32 %v1877, %v2041
          %v2080 = vadd.f32 %v1878, %v2044
          %v2081 = vadd.f32 %v1879, %v2049
          %v2082 = vadd.f32 %v1880, %v2052
          %v2083 = vadd.f32 %v1881, %v2057
          %v2084 = vadd.f32 %v1882, %v2060
          %v2085 = vadd.f32 %v1883, %v2065
          %v2086 = vadd.f32 %v1884, %v2068
          %v2087 = vld [vmem:[%s9] sm:$0xff]
          %v2088 = vld [vmem:[%s9 + $0x8] sm:$0xff]
          %v2089 = vld [vmem:[%s9 + $0x10] sm:$0xff]
          %v2090 = vld [vmem:[%s9 + $0x18] sm:$0xff]
          %v2091 = vld [vmem:[%s9 + $0x20] sm:$0xff]
          %v2092 = vld [vmem:[%s9 + $0x28] sm:$0xff]
          %v2093 = vld [vmem:[%s9 + $0x30] sm:$0xff]
          %v2094 = vld [vmem:[%s9 + $0x38] sm:$0xff]
          %v2095 = vld [vmem:[%s9 + $0x40] sm:$0xff]
          %v2096 = vld [vmem:[%s9 + $0x48] sm:$0xff]
          %v2097 = vld [vmem:[%s9 + $0x50] sm:$0xff]
          %v2098 = vld [vmem:[%s9 + $0x58] sm:$0xff]
          %v2099 = vld [vmem:[%s9 + $0x60] sm:$0xff]
          %v2100 = vld [vmem:[%s9 + $0x68] sm:$0xff]
          %v2101 = vld [vmem:[%s9 + $0x70] sm:$0xff]
          %v2102 = vld [vmem:[%s9 + $0x78] sm:$0xff]
          %2104 = vset.pattern.permute.xlu0 0
          %2105 = vperm.xlu0 %2104, %v2087
          %v2106 = vpop.permute.xlu0 %2105
          %2109 = vset.pattern.permute.xlu0 0
          %2110 = vperm.xlu0 %2109, %v2088
          %v2111 = vpop.permute.xlu0 %2110
          %2114 = vset.pattern.permute.xlu0 0
          %2115 = vperm.xlu0 %2114, %v2089
          %v2116 = vpop.permute.xlu0 %2115
          %2119 = vset.pattern.permute.xlu0 0
          %2120 = vperm.xlu0 %2119, %v2090
          %v2121 = vpop.permute.xlu0 %2120
          %2124 = vset.pattern.permute.xlu0 0
          %2125 = vperm.xlu0 %2124, %v2091
          %v2126 = vpop.permute.xlu0 %2125
          %2129 = vset.pattern.permute.xlu0 0
          %2130 = vperm.xlu0 %2129, %v2092
          %v2131 = vpop.permute.xlu0 %2130
          %2134 = vset.pattern.permute.xlu0 0
          %2135 = vperm.xlu0 %2134, %v2093
          %v2136 = vpop.permute.xlu0 %2135
          %2139 = vset.pattern.permute.xlu0 0
          %2140 = vperm.xlu0 %2139, %v2094
          %v2141 = vpop.permute.xlu0 %2140
          %2144 = vset.pattern.permute.xlu0 0
          %2145 = vperm.xlu0 %2144, %v2095
          %v2146 = vpop.permute.xlu0 %2145
          %2149 = vset.pattern.permute.xlu0 0
          %2150 = vperm.xlu0 %2149, %v2096
          %v2151 = vpop.permute.xlu0 %2150
          %2154 = vset.pattern.permute.xlu0 0
          %2155 = vperm.xlu0 %2154, %v2097
          %v2156 = vpop.permute.xlu0 %2155
          %2159 = vset.pattern.permute.xlu0 0
          %2160 = vperm.xlu0 %2159, %v2098
          %v2161 = vpop.permute.xlu0 %2160
          %2164 = vset.pattern.permute.xlu0 0
          %2165 = vperm.xlu0 %2164, %v2099
          %v2166 = vpop.permute.xlu0 %2165
          %2169 = vset.pattern.permute.xlu0 0
          %2170 = vperm.xlu0 %2169, %v2100
          %v2171 = vpop.permute.xlu0 %2170
          %2174 = vset.pattern.permute.xlu0 0
          %2175 = vperm.xlu0 %2174, %v2101
          %v2176 = vpop.permute.xlu0 %2175
          %2179 = vset.pattern.permute.xlu0 0
          %2180 = vperm.xlu0 %2179, %v2102
          %v2181 = vpop.permute.xlu0 %2180
          %v2183 = vadd.f32 %v2071, %v2106
          %v2184 = vadd.f32 %v2072, %v2111
          %v2185 = vadd.f32 %v2073, %v2116
          %v2186 = vadd.f32 %v2074, %v2121
          %v2187 = vadd.f32 %v2075, %v2126
          %v2188 = vadd.f32 %v2076, %v2131
          %v2189 = vadd.f32 %v2077, %v2136
          %v2190 = vadd.f32 %v2078, %v2141
          %v2191 = vadd.f32 %v2079, %v2146
          %v2192 = vadd.f32 %v2080, %v2151
          %v2193 = vadd.f32 %v2081, %v2156
          %v2194 = vadd.f32 %v2082, %v2161
          %v2195 = vadd.f32 %v2083, %v2166
          %v2196 = vadd.f32 %v2084, %v2171
          %v2197 = vadd.f32 %v2085, %v2176
          %v2198 = vadd.f32 %v2086, %v2181
          %v2199 = vmax.f32 %v2183, 0.0
          %v2200 = vmax.f32 %v2184, 0.0
          %v2201 = vmax.f32 %v2185, 0.0
          %v2202 = vmax.f32 %v2186, 0.0
          %v2203 = vmax.f32 %v2187, 0.0
          %v2204 = vmax.f32 %v2188, 0.0
          %v2205 = vmax.f32 %v2189, 0.0
          %v2206 = vmax.f32 %v2190, 0.0
          %v2207 = vmax.f32 %v2191, 0.0
          %v2208 = vmax.f32 %v2192, 0.0
          %v2209 = vmax.f32 %v2193, 0.0
          %v2210 = vmax.f32 %v2194, 0.0
          %v2211 = vmax.f32 %v2195, 0.0
          %v2212 = vmax.f32 %v2196, 0.0
          %v2213 = vmax.f32 %v2197, 0.0
          %v2214 = vmax.f32 %v2198, 0.0
          %v2215 = vpack.c.bf16 %v2200, %v2199
          %v2216 = vpack.c.bf16 %v2202, %v2201
          %v2217 = vpack.c.bf16 %v2204, %v2203
          %v2218 = vpack.c.bf16 %v2206, %v2205
          %v2219 = vpack.c.bf16 %v2208, %v2207
          %v2220 = vpack.c.bf16 %v2210, %v2209
          %v2221 = vpack.c.bf16 %v2212, %v2211
          %v2222 = vpack.c.bf16 %v2214, %v2213
          %v2231 = vunpack.c.l.b16 %v2215
          %v2232 = vunpack.c.h.b16 %v2215
          %v2233 = vunpack.c.l.b16 %v2216
          %v2234 = vunpack.c.h.b16 %v2216
          %v2235 = vunpack.c.l.b16 %v2217
          %v2236 = vunpack.c.h.b16 %v2217
          %v2237 = vunpack.c.l.b16 %v2218
          %v2238 = vunpack.c.h.b16 %v2218
          %v2239 = vunpack.c.l.b16 %v2219
          %v2240 = vunpack.c.h.b16 %v2219
          %v2241 = vunpack.c.l.b16 %v2220
          %v2242 = vunpack.c.h.b16 %v2220
          %v2243 = vunpack.c.l.b16 %v2221
          %v2244 = vunpack.c.h.b16 %v2221
          %v2245 = vunpack.c.l.b16 %v2222
          %v2246 = vunpack.c.h.b16 %v2222
          %v2247 = vpack.c.b16 %v2231, %v2231
          %v2248 = vpack.c.b16 %v2232, %v2232
          %v2249 = vpack.c.b16 %v2233, %v2233
          %v2250 = vpack.c.b16 %v2234, %v2234
          %v2251 = vpack.c.b16 %v2235, %v2235
          %v2252 = vpack.c.b16 %v2236, %v2236
          %v2253 = vpack.c.b16 %v2237, %v2237
          %v2254 = vpack.c.b16 %v2238, %v2238
          %v2255 = vpack.c.b16 %v2239, %v2239
          %v2256 = vpack.c.b16 %v2240, %v2240
          %v2257 = vpack.c.b16 %v2241, %v2241
          %v2258 = vpack.c.b16 %v2242, %v2242
          %v2259 = vpack.c.b16 %v2243, %v2243
          %v2260 = vpack.c.b16 %v2244, %v2244
          %v2261 = vpack.c.b16 %v2245, %v2245
          %v2262 = vpack.c.b16 %v2246, %v2246
          %2279 = vst [vmem:[%s545] sm:$0xf] %v2247
          %2280 = vst [vmem:[%s545 + $0x4] sm:$0xf] %v2248
          %2281 = vst [vmem:[%s545 + $0x8] sm:$0xf] %v2249
          %2282 = vst [vmem:[%s545 + $0xc] sm:$0xf] %v2250
          %2283 = vst [vmem:[%s545 + $0x10] sm:$0xf] %v2251
          %2284 = vst [vmem:[%s545 + $0x14] sm:$0xf] %v2252
          %2285 = vst [vmem:[%s545 + $0x18] sm:$0xf] %v2253
          %2286 = vst [vmem:[%s545 + $0x1c] sm:$0xf] %v2254
          %2287 = vst [vmem:[%s545 + $0x20] sm:$0xf] %v2255
          %2288 = vst [vmem:[%s545 + $0x24] sm:$0xf] %v2256
          %2289 = vst [vmem:[%s545 + $0x28] sm:$0xf] %v2257
          %2290 = vst [vmem:[%s545 + $0x2c] sm:$0xf] %v2258
          %2291 = vst [vmem:[%s545 + $0x30] sm:$0xf] %v2259
          %2292 = vst [vmem:[%s545 + $0x34] sm:$0xf] %v2260
          %2293 = vst [vmem:[%s545 + $0x38] sm:$0xf] %v2261
          %2294 = vst [vmem:[%s545 + $0x3c] sm:$0xf] %v2262
        $region105: #{tpu_custom_call.1} parent=88 // pred_fallthru
          _
        %s2295 = sand.u32 %s295, 1
        %s2296 = scalar_lea.sflag [#allocation9], %s2295
        %s2297 = sand.u32 %s295, 1
        %s2298 = smul.addr %s2297, 64
        %s2299 = scalar_lea.vmem [#allocation8], %s2298
        // Predicated region
        $region106: #{tpu_custom_call.1} parent=88 // pred_check
          %p2300 = pneg %p305
        $region107: #{tpu_custom_call.1} parent=88 // pred_check_branch
          %2302 = sbr.rel (%p2300) target = $region109
        $region108: #{tpu_custom_call.1} parent=88 // pred_region
          %s2304 = ssub.s32 1024, 1024
          %2305 = vsyncadd %s2296, %s2304
          %s2306 = smul.addr %s38, 64
          %s2307 = scalar_lea.hbm %s10, %s2306
          %s2308 = sshll.u32 %s2299, 4
          %s2309 = int_to_ptr.vmem [resolvable:$true] %s2308
          %2314 = dma.vmem_to_hbm [thread:$0]  %s2309, 1024, %s2307, %s2296, 64, 128, 4
        $region109: #{tpu_custom_call.1} parent=88 // pred_fallthru
          _
      $region89: #{tpu_custom_call.1} parent=5 // pred_fallthru
        _
      %p2315 = scmp.le.s32.totalorder 2, %s29
      // Predicated region
      $region110: #{tpu_custom_call.1} parent=5 // pred_check
        %p2316 = pneg %p2315
      $region111: #{tpu_custom_call.1} parent=5 // pred_check_branch
        %2318 = sbr.rel (%p2316) target = $region113
      $region112: #{tpu_custom_call.1} parent=5 // pred_region
        %s2319 = ssub.s32 %s29, 2
        // Predicated region
        $region114: #{tpu_custom_call.1} parent=112 // pred_check
          %p2320 = pneg %p311
        $region115: #{tpu_custom_call.1} parent=112 // pred_check_branch
          %2322 = sbr.rel (%p2320) target = $region117
        $region116: #{tpu_custom_call.1} parent=112 // pred_region
          %s2323 = sand.u32 %s296, 1
          %s2324 = scalar_lea.sflag [#allocation9], %s2323
          %s2325 = sand.u32 %s296, 1
          %s2326 = smul.addr %s2325, 64
          %s2327 = scalar_lea.vmem [#allocation8], %s2326
          %2328 = dma.done %s2324, 1024
        $region117: #{tpu_custom_call.1} parent=112 // pred_fallthru
          _
      $region113: #{tpu_custom_call.1} parent=5 // pred_fallthru
        _
    $region6: #{tpu_custom_call.1} parent=1 // loop_footer
      %s33 = sadd.s32 1, %s29
    $region7: #{tpu_custom_call.1} parent=1 // loop_footer_branch
      %28 = sbr.rel target = $region3
    $region8: #{tpu_custom_call.1} parent=1 // loop_exit
      _
    %2329 = vsyncpa [#allocation9], 1
    %s2330 = scalar_lea.sflag [#allocation9], 1
    %2331 = vsyncpa %s2330, 1

</llo_original>
